<compile_context>
chip_gen: v7x
topology: tpu7x:2x2x1
jax: 0.10.0
libtpu: 0.0.40
codegen_flags: <defaults>
</compile_context>

<pallas_src>
import math

import jax
import jax.numpy as jnp
from jax.experimental import pallas as pl
from jax.experimental.pallas import tpu as pltpu


def _round_up(n, m):
    return ((n + m - 1) // m) * m


def _lane_shift(x, s):
    """out[:, t] = x[:, t + s] where valid, 0 otherwise (== conv zero padding).

    Implemented as a lane-axis slice + zero-column concat (XLU/relayout work,
    exact), replacing the previous (T, T) gather matmuls for stride-1 taps."""
    if s == 0:
        return x
    c, t = x.shape
    z = jnp.zeros((c, abs(s)), x.dtype)
    if s > 0:
        return jnp.concatenate([x[:, s:], z], axis=-1)
    return jnp.concatenate([z, x[:, :t + s]], axis=-1)


# ------------------------------ fused kernel --------------------------------

def _make_fused_kernel(layer_num, decimate, ch, lengths, K, pad, tpad):
    f32 = jnp.float32
    L = layer_num
    C0 = ch[0]
    CL = ch[L]
    C2 = 2 * CL
    Tphi = lengths[L]

    def _dot(a, b):
        return jnp.dot(a, b, preferred_element_type=f32)

    def kernel(*refs):
        x_ref = refs[0]
        lyr = refs[1:1 + 4 * L]              # per layer: (Wf, bf, G, S)
        wm_ref = refs[1 + 4 * L]
        bm_ref = refs[2 + 4 * L]
        y_ref = refs[3 + 4 * L]
        phi_ref = refs[4 + 4 * L]
        mask_ref = refs[5 + 4 * L]

        # ------ initSplit (even/odd) + zero channel pad already done in wrapper ---
        xab = x_ref[0].astype(f32)           # (2*C0, T/2)
        xa = xab[:C0, :]
        xb = xab[C0:, :]

        # --------------------------------- analysis -------------------------------
        for l in range(L):
            d = decimate[l]
            Wf_ref, bf_ref, G_ref, _ = lyr[4 * l:4 * l + 4]

            # stride-d squeeze streams: matmuls vs. VMEM-resident 0/1 matrices,
            # loaded per use (short live ranges).
            xbs, xas = [], []
            for j in range(d):
                Gj = G_ref[j]                # (Tin, Tout)
                xbs.append(_dot(xb, Gj))
                xas.append(_dot(xa, Gj))

            # Conv1d(xb, stride=d, padding=pad) via per-tap accumulation; each tap
            # is one of the squeeze streams, lane-shifted across stride boundaries.
            Fx = None
            for k in range(K):
                o = k - pad
                q = o % d
                s = (o - q) // d
                tap = _lane_shift(xbs[q], s)
                part = _dot(Wf_ref[k].astype(f32), tap)
                Fx = part if Fx is None else Fx + part
            Fx = Fx + bf_ref[...].astype(f32)

            xa = xbs[0] if d == 1 else jnp.concatenate(xbs, axis=0)        # squeeze(xb)
            xb = (xas[0] if d == 1 else jnp.concatenate(xas, axis=0)) + Fx  # squeeze(xa)+F

        # ------------------- mask estimator + elementwise mask --------------------
        phi = jnp.concatenate([xa, xb], axis=0)                            # (C2, Tphi)
        Fm = None
        for k in range(K):
            tap = _lane_shift(phi, k - pad)                                # stride-1 taps
            part = _dot(wm_ref[k].astype(f32), tap)
            Fm = part if Fm is None else Fm + part
        mask = jax.nn.sigmoid(Fm + bm_ref[...].astype(f32))
        phi2 = mask * phi

        # lane-dense stores: pad lane dim to a 128-multiple (wrapper slices back)
        if tpad != Tphi:
            lane_pad = jnp.zeros((C2, tpad - Tphi), f32)
            phi_ref[0] = jnp.concatenate([phi, lane_pad], axis=-1).astype(phi_ref.dtype)
            mask_ref[0] = jnp.concatenate([mask, lane_pad], axis=-1).astype(mask_ref.dtype)
        else:
            phi_ref[0] = phi.astype(phi_ref.dtype)
            mask_ref[0] = mask.astype(mask_ref.dtype)

        # ----------------------------- synthesis (inverse) ------------------------
        ya = phi2[:CL, :]
        yb = phi2[CL:, :]
        for l in range(L - 1, -1, -1):
            Cin = ch[l]
            d = decimate[l]
            Wf_ref, bf_ref, _, S_ref = lyr[4 * l:4 * l + 4]

            # xb_l = unsqueeze(ya); its stride-d streams are just channel slices
            a_str = [ya[j * Cin:(j + 1) * Cin, :] for j in range(d)]

            Fx = None
            for k in range(K):
                o = k - pad
                q = o % d
                s = (o - q) // d
                tap = _lane_shift(a_str[q], s)
                part = _dot(Wf_ref[k].astype(f32), tap)
                Fx = part if Fx is None else Fx + part
            Fx = Fx + bf_ref[...].astype(f32)
            tmp = yb - Fx

            # unsqueeze (interleave streams back in time) via 0/1 scatter matmuls
            xb_new = None
            xa_new = None
            for j in range(d):
                Sj = S_ref[j]                # (Tout, Tin)
                pb = _dot(a_str[j], Sj)
                pa = _dot(tmp[j * Cin:(j + 1) * Cin, :], Sj)
                xb_new = pb if xb_new is None else xb_new + pb
                xa_new = pa if xa_new is None else xa_new + pa
            ya, yb = xa_new, xb_new

        # Even / odd halves of y (channel 0 only); wrapper interleaves to (1, T).
        y_ref[0] = jnp.concatenate([ya[0:1, :], yb[0:1, :]], axis=0).astype(y_ref.dtype)

    return kernel


# --------------------------------- module -----------------------------------

class IRevNetMasking:
    def __init__(self, layer_num, init_pad, key, kernel_size=3):
        assert kernel_size % 2 == 1
        self.layer_num = layer_num
        self.init_pad = init_pad
        self.K = kernel_size
        self.pad = (kernel_size - 1) // 2
        self.ch = [1 + init_pad]
        for ii in range(1, layer_num + 1):
            self.ch.append(self.ch[0] * 2 ** ii)
        self.decimate = [self.ch[i + 1] // self.ch[i] for i in range(layer_num)]

        keys = jax.random.split(key, layer_num + 1)
        self.filt_W, self.filt_b = [], []
        for layer in range(layer_num):
            cin, cout = self.ch[layer], self.ch[layer + 1]
            kw, kb = jax.random.split(keys[layer])
            W = 0.1 * jax.random.normal(kw, (cout, cin, kernel_size), jnp.float32)
            b = 0.01 * jax.random.normal(kb, (cout,), jnp.float32)
            # (Cout, Cin, K) -> (K, Cout, Cin): per-tap weight tiles, kernel reads w_ref[k]
            self.filt_W.append(jnp.transpose(W, (2, 0, 1)))
            self.filt_b.append(b.reshape(cout, 1))
        c2 = 2 * self.ch[-1]
        kw, kb = jax.random.split(keys[-1])
        Wm = 0.1 * jax.random.normal(kw, (c2, c2, kernel_size), jnp.float32)
        bm = 0.01 * jax.random.normal(kb, (c2,), jnp.float32)
        self.mask_W = jnp.transpose(Wm, (2, 0, 1))
        self.mask_b = bm.reshape(c2, 1)

    @staticmethod
    def _selection_mats(Tin, Tout, d):
        """Host-built 0/1 squeeze (G) / unsqueeze (S) matrices, passed as inputs."""
        u = jnp.arange(Tin, dtype=jnp.int32)[:, None]
        t = jnp.arange(Tout, dtype=jnp.int32)[None, :]
        G = jnp.stack([(u == t * d + j) for j in range(d)], axis=0).astype(jnp.float32)
        S = jnp.transpose(G, (0, 2, 1))
        return G, S                          # (d, Tin, Tout), (d, Tout, Tin)

    # ---- advisory cost hint for XLA scheduling around the fused call ----
    def _cost_estimate(self, B, lengths, inputs, out_shape):
        K, L = self.K, self.layer_num
        flops = 0
        for l in range(L):
            Cin, Cout, d = self.ch[l], self.ch[l + 1], self.decimate[l]
            Tin, Tout = lengths[l], lengths[l + 1]
            flops += 2 * (2 * d) * Cin * Tin * Tout      # fwd squeeze gathers
            flops += 2 * (2 * d) * Cin * Tout * Tin      # bwd unsqueeze scatters
            flops += 2 * 2 * K * Cout * Cin * Tout       # fwd + bwd per-tap conv matmuls
        C2, Tphi = 2 * self.ch[-1], lengths[-1]
        flops += 2 * K * C2 * C2 * Tphi                  # mask-estimator conv
        flops *= B
        transcendentals = B * C2 * Tphi
        bytes_accessed = sum(4 * math.prod(a.shape) for a in inputs)
        bytes_accessed += sum(4 * math.prod(s.shape) for s in out_shape)
        return pl.CostEstimate(flops=int(flops),
                               transcendentals=int(transcendentals),
                               bytes_accessed=int(bytes_accessed))

    def __call__(self, x):
        B, Cx, T = x.shape
        assert Cx == 1
        total_dec = 2
        for d in self.decimate:
            total_dec *= d
        assert T % total_dec == 0, "T must be divisible by 2 * prod(decimate)"

        L = self.layer_num
        C0 = self.ch[0]
        lengths = [T // 2]
        for d in self.decimate:
            lengths.append(lengths[-1] // d)
        T2 = lengths[0]
        C2 = 2 * self.ch[-1]
        Tphi = lengths[-1]
        Tpad = _round_up(max(Tphi, 128), 128)            # lane-dense phi/mask stores

        # ---- initSplit (even/odd) + zero channel pad done wrapper-side (free) ----
        ev = x[:, :, 0::2]
        od = x[:, :, 1::2]
        if self.init_pad > 0:
            zp = jnp.zeros((B, self.init_pad, T2), x.dtype)
            xab = jnp.concatenate([ev, zp, od, zp], axis=1)      # (B, 2*C0, T/2)
        else:
            xab = jnp.concatenate([ev, od], axis=1)

        kernel = _make_fused_kernel(
            layer_num=L, decimate=tuple(self.decimate), ch=tuple(self.ch),
            lengths=tuple(lengths), K=self.K, pad=self.pad, tpad=Tpad)

        inputs = [xab]
        in_specs = [pl.BlockSpec((1, 2 * C0, T2), lambda b: (b, 0, 0))]
        for l in range(L):
            G, S = self._selection_mats(lengths[l], lengths[l + 1], self.decimate[l])
            Wf, bf = self.filt_W[l], self.filt_b[l]
            inputs += [Wf, bf, G, S]
            in_specs += [pl.BlockSpec(Wf.shape, lambda b: (0, 0, 0)),
                         pl.BlockSpec(bf.shape, lambda b: (0, 0)),
                         pl.BlockSpec(G.shape, lambda b: (0, 0, 0)),
                         pl.BlockSpec(S.shape, lambda b: (0, 0, 0))]
        inputs += [self.mask_W, self.mask_b]
        in_specs += [pl.BlockSpec(self.mask_W.shape, lambda b: (0, 0, 0)),
                     pl.BlockSpec(self.mask_b.shape, lambda b: (0, 0))]

        out_shape = (jax.ShapeDtypeStruct((B, 2, T2), x.dtype),
                     jax.ShapeDtypeStruct((B, C2, Tpad), x.dtype),
                     jax.ShapeDtypeStruct((B, C2, Tpad), x.dtype))
        out_specs = (pl.BlockSpec((1, 2, T2), lambda b: (b, 0, 0)),
                     pl.BlockSpec((1, C2, Tpad), lambda b: (b, 0, 0)),
                     pl.BlockSpec((1, C2, Tpad), lambda b: (b, 0, 0)))

        y2, phi_p, mask_p = pl.pallas_call(
            kernel,
            out_shape=out_shape,
            grid=(B,),
            in_specs=in_specs,
            out_specs=out_specs,
            compiler_params=pltpu.CompilerParams(
                dimension_semantics=("parallel",)),      # v7x: shard batch over 2 TCs
            cost_estimate=self._cost_estimate(B, lengths, inputs, out_shape),
        )(*inputs)

        # initSplitInv: interleave even/odd rows back to (B, 1, T) wrapper-side.
        y = jnp.stack([y2[:, 0, :], y2[:, 1, :]], axis=-1).reshape(B, 1, T)
        phi = phi_p[:, :, :Tphi]
        mask = mask_p[:, :, :Tphi]
        return y, phi, mask


# ----------------------------------- main ------------------------------------

if __name__ == "__main__":
    key = jax.random.PRNGKey(0)
    k_param, k_x = jax.random.split(key)

    layer_num, init_pad = 3, 3            # ch = [4, 8, 16, 32], decimate = [2, 2, 2]
    model = IRevNetMasking(layer_num=layer_num, init_pad=init_pad, key=k_param)

    B, T = 2, 512                          # T divisible by 2 * 2**layer_num
    x = jax.random.normal(k_x, (B, 1, T), jnp.float32)

    y, phi, mask = model(x)
    jax.block_until_ready((y, phi, mask))

    assert y.shape == (B, 1, T)
    T_phi = T // (2 * 2 ** layer_num)
    assert phi.shape == (B, 2 * model.ch[-1], T_phi)
    assert mask.shape == phi.shape
    assert bool(jnp.all(jnp.isfinite(y))) and bool(jnp.all(jnp.isfinite(phi)))
    assert bool(jnp.all(mask >= 0.0)) and bool(jnp.all(mask <= 1.0))

    # Invertibility self-check: force mask ~= 1 (zero mask weights, large bias);
    # the synthesis path must then reconstruct x through the analysis path.
    model.mask_W = jnp.zeros_like(model.mask_W)
    model.mask_b = 20.0 * jnp.ones_like(model.mask_b)
    y_id, _, _ = model(x)
    jax.block_until_ready(y_id)
    assert float(jnp.max(jnp.abs(y_id - x))) < 5e-2, "iRevNet inversion check failed"

    print("KERNEL_OK")
</pallas_src>

<mosaic_0001>
module attributes {stable_mosaic.version = 11 : i64} {
  func.func @kernel(%arg0: i32, %arg1: memref<1x8x256xf32, #tpu.memory_space<vmem>>, %arg2: memref<3x8x4xf32, #tpu.memory_space<vmem>>, %arg3: memref<8x1xf32, #tpu.memory_space<vmem>>, %arg4: memref<2x256x128xf32, #tpu.memory_space<vmem>>, %arg5: memref<2x128x256xf32, #tpu.memory_space<vmem>>, %arg6: memref<3x16x8xf32, #tpu.memory_space<vmem>>, %arg7: memref<16x1xf32, #tpu.memory_space<vmem>>, %arg8: memref<2x128x64xf32, #tpu.memory_space<vmem>>, %arg9: memref<2x64x128xf32, #tpu.memory_space<vmem>>, %arg10: memref<3x32x16xf32, #tpu.memory_space<vmem>>, %arg11: memref<32x1xf32, #tpu.memory_space<vmem>>, %arg12: memref<2x64x32xf32, #tpu.memory_space<vmem>>, %arg13: memref<2x32x64xf32, #tpu.memory_space<vmem>>, %arg14: memref<3x64x64xf32, #tpu.memory_space<vmem>>, %arg15: memref<64x1xf32, #tpu.memory_space<vmem>>, %arg16: memref<1x2x256xf32, #tpu.memory_space<vmem>>, %arg17: memref<1x64x128xf32, #tpu.memory_space<vmem>>, %arg18: memref<1x64x128xf32, #tpu.memory_space<vmem>>) attributes {dimension_semantics = [#tpu.dimension_semantics<parallel>], iteration_bounds = array<i64: 2>, scalar_prefetch = 0 : i64, scratch_operands = 0 : i64, tpu.core_type = #tpu.core_type<tc>, window_params = [{transform_indices = @transform_0, window_bounds = array<i64: 1, 8, 256>}, {pipeline_mode = #tpu.pipeline_mode<synchronous>, transform_indices = @transform_1, window_bounds = array<i64: 3, 8, 4>}, {pipeline_mode = #tpu.pipeline_mode<synchronous>, transform_indices = @transform_2, window_bounds = array<i64: 8, 1>}, {pipeline_mode = #tpu.pipeline_mode<synchronous>, transform_indices = @transform_3, window_bounds = array<i64: 2, 256, 128>}, {pipeline_mode = #tpu.pipeline_mode<synchronous>, transform_indices = @transform_4, window_bounds = array<i64: 2, 128, 256>}, {pipeline_mode = #tpu.pipeline_mode<synchronous>, transform_indices = @transform_5, window_bounds = array<i64: 3, 16, 8>}, {pipeline_mode = #tpu.pipeline_mode<synchronous>, transform_indices = @transform_6, window_bounds = array<i64: 16, 1>}, {pipeline_mode = #tpu.pipeline_mode<synchronous>, transform_indices = @transform_7, window_bounds = array<i64: 2, 128, 64>}, {pipeline_mode = #tpu.pipeline_mode<synchronous>, transform_indices = @transform_8, window_bounds = array<i64: 2, 64, 128>}, {pipeline_mode = #tpu.pipeline_mode<synchronous>, transform_indices = @transform_9, window_bounds = array<i64: 3, 32, 16>}, {pipeline_mode = #tpu.pipeline_mode<synchronous>, transform_indices = @transform_10, window_bounds = array<i64: 32, 1>}, {pipeline_mode = #tpu.pipeline_mode<synchronous>, transform_indices = @transform_11, window_bounds = array<i64: 2, 64, 32>}, {pipeline_mode = #tpu.pipeline_mode<synchronous>, transform_indices = @transform_12, window_bounds = array<i64: 2, 32, 64>}, {pipeline_mode = #tpu.pipeline_mode<synchronous>, transform_indices = @transform_13, window_bounds = array<i64: 3, 64, 64>}, {pipeline_mode = #tpu.pipeline_mode<synchronous>, transform_indices = @transform_14, window_bounds = array<i64: 64, 1>}, {transform_indices = @transform_15, window_bounds = array<i64: 1, 2, 256>}, {transform_indices = @transform_16, window_bounds = array<i64: 1, 64, 128>}, {transform_indices = @transform_17, window_bounds = array<i64: 1, 64, 128>}]} {
    %c0 = arith.constant 0 : index
    %c0_0 = arith.constant 0 : index
    %c0_1 = arith.constant 0 : index
    %0 = vector.load %arg1[%c0, %c0_0, %c0_1] : memref<1x8x256xf32, #tpu.memory_space<vmem>>, vector<1x8x256xf32>
    %1 = vector.shape_cast %0 : vector<1x8x256xf32> to vector<8x256xf32>
    %2 = vector.extract_strided_slice %1 {offsets = [0, 0], sizes = [4, 256], strides = [1, 1]} : vector<8x256xf32> to vector<4x256xf32>
    %3 = vector.extract_strided_slice %1 {offsets = [4, 0], sizes = [4, 256], strides = [1, 1]} : vector<8x256xf32> to vector<4x256xf32>
    %c0_2 = arith.constant 0 : index
    %c0_3 = arith.constant 0 : index
    %c0_4 = arith.constant 0 : index
    %4 = vector.load %arg4[%c0_2, %c0_3, %c0_4] : memref<2x256x128xf32, #tpu.memory_space<vmem>>, vector<1x256x128xf32>
    %5 = vector.shape_cast %4 : vector<1x256x128xf32> to vector<256x128xf32>
    %cst = arith.constant dense<0.000000e+00> : vector<4x128xf32>
    %6 = tpu.matmul %3, %5, %cst {dimension_numbers = #tpu.dot_dimension_numbers<[1], [0], [0], [1], [0, 0, 1, 1], [], []>} : vector<4x256xf32>, vector<256x128xf32>, vector<4x128xf32> -> vector<4x128xf32>
    %cst_5 = arith.constant dense<0.000000e+00> : vector<4x128xf32>
    %7 = tpu.matmul %2, %5, %cst_5 {dimension_numbers = #tpu.dot_dimension_numbers<[1], [0], [0], [1], [0, 0, 1, 1], [], []>} : vector<4x256xf32>, vector<256x128xf32>, vector<4x128xf32> -> vector<4x128xf32>
    %c1 = arith.constant 1 : index
    %c0_6 = arith.constant 0 : index
    %c0_7 = arith.constant 0 : index
    %8 = vector.load %arg4[%c1, %c0_6, %c0_7] : memref<2x256x128xf32, #tpu.memory_space<vmem>>, vector<1x256x128xf32>
    %9 = vector.shape_cast %8 : vector<1x256x128xf32> to vector<256x128xf32>
    %cst_8 = arith.constant dense<0.000000e+00> : vector<4x128xf32>
    %10 = tpu.matmul %3, %9, %cst_8 {dimension_numbers = #tpu.dot_dimension_numbers<[1], [0], [0], [1], [0, 0, 1, 1], [], []>} : vector<4x256xf32>, vector<256x128xf32>, vector<4x128xf32> -> vector<4x128xf32>
    %cst_9 = arith.constant dense<0.000000e+00> : vector<4x128xf32>
    %11 = tpu.matmul %2, %9, %cst_9 {dimension_numbers = #tpu.dot_dimension_numbers<[1], [0], [0], [1], [0, 0, 1, 1], [], []>} : vector<4x256xf32>, vector<256x128xf32>, vector<4x128xf32> -> vector<4x128xf32>
    %cst_10 = arith.constant 0.000000e+00 : f32
    %12 = vector.broadcast %cst_10 : f32 to vector<4x1xf32>
    %13 = vector.extract_strided_slice %10 {offsets = [0, 0], sizes = [4, 127], strides = [1, 1]} : vector<4x128xf32> to vector<4x127xf32>
    %14 = tpu.concatenate %12, %13 in 1 : vector<4x1xf32>, vector<4x127xf32> -> vector<4x128xf32>
    %c0_11 = arith.constant 0 : index
    %c0_12 = arith.constant 0 : index
    %c0_13 = arith.constant 0 : index
    %15 = vector.load %arg2[%c0_11, %c0_12, %c0_13] : memref<3x8x4xf32, #tpu.memory_space<vmem>>, vector<1x8x4xf32>
    %16 = vector.shape_cast %15 : vector<1x8x4xf32> to vector<8x4xf32>
    %cst_14 = arith.constant dense<0.000000e+00> : vector<8x128xf32>
    %17 = tpu.matmul %16, %14, %cst_14 {dimension_numbers = #tpu.dot_dimension_numbers<[1], [0], [0], [1], [0, 0, 1, 1], [], []>} : vector<8x4xf32>, vector<4x128xf32>, vector<8x128xf32> -> vector<8x128xf32>
    %c1_15 = arith.constant 1 : index
    %c0_16 = arith.constant 0 : index
    %c0_17 = arith.constant 0 : index
    %18 = vector.load %arg2[%c1_15, %c0_16, %c0_17] : memref<3x8x4xf32, #tpu.memory_space<vmem>>, vector<1x8x4xf32>
    %19 = vector.shape_cast %18 : vector<1x8x4xf32> to vector<8x4xf32>
    %cst_18 = arith.constant dense<0.000000e+00> : vector<8x128xf32>
    %20 = tpu.matmul %19, %6, %cst_18 {dimension_numbers = #tpu.dot_dimension_numbers<[1], [0], [0], [1], [0, 0, 1, 1], [], []>} : vector<8x4xf32>, vector<4x128xf32>, vector<8x128xf32> -> vector<8x128xf32>
    %21 = arith.addf %17, %20 : vector<8x128xf32>
    %c2 = arith.constant 2 : index
    %c0_19 = arith.constant 0 : index
    %c0_20 = arith.constant 0 : index
    %22 = vector.load %arg2[%c2, %c0_19, %c0_20] : memref<3x8x4xf32, #tpu.memory_space<vmem>>, vector<1x8x4xf32>
    %23 = vector.shape_cast %22 : vector<1x8x4xf32> to vector<8x4xf32>
    %cst_21 = arith.constant dense<0.000000e+00> : vector<8x128xf32>
    %24 = tpu.matmul %23, %10, %cst_21 {dimension_numbers = #tpu.dot_dimension_numbers<[1], [0], [0], [1], [0, 0, 1, 1], [], []>} : vector<8x4xf32>, vector<4x128xf32>, vector<8x128xf32> -> vector<8x128xf32>
    %25 = arith.addf %21, %24 : vector<8x128xf32>
    %c0_22 = arith.constant 0 : index
    %c0_23 = arith.constant 0 : index
    %26 = vector.load %arg3[%c0_22, %c0_23] : memref<8x1xf32, #tpu.memory_space<vmem>>, vector<8x1xf32>
    %27 = vector.broadcast %26 : vector<8x1xf32> to vector<8x128xf32>
    %28 = arith.addf %25, %27 : vector<8x128xf32>
    %29 = tpu.concatenate %6, %10 in 0 : vector<4x128xf32>, vector<4x128xf32> -> vector<8x128xf32>
    %30 = tpu.concatenate %7, %11 in 0 : vector<4x128xf32>, vector<4x128xf32> -> vector<8x128xf32>
    %31 = arith.addf %30, %28 : vector<8x128xf32>
    %c0_24 = arith.constant 0 : index
    %c0_25 = arith.constant 0 : index
    %c0_26 = arith.constant 0 : index
    %32 = vector.load %arg8[%c0_24, %c0_25, %c0_26] : memref<2x128x64xf32, #tpu.memory_space<vmem>>, vector<1x128x64xf32>
    %33 = vector.shape_cast %32 : vector<1x128x64xf32> to vector<128x64xf32>
    %cst_27 = arith.constant dense<0.000000e+00> : vector<8x64xf32>
    %34 = tpu.matmul %31, %33, %cst_27 {dimension_numbers = #tpu.dot_dimension_numbers<[1], [0], [0], [1], [0, 0, 1, 1], [], []>} : vector<8x128xf32>, vector<128x64xf32>, vector<8x64xf32> -> vector<8x64xf32>
    %cst_28 = arith.constant dense<0.000000e+00> : vector<8x64xf32>
    %35 = tpu.matmul %29, %33, %cst_28 {dimension_numbers = #tpu.dot_dimension_numbers<[1], [0], [0], [1], [0, 0, 1, 1], [], []>} : vector<8x128xf32>, vector<128x64xf32>, vector<8x64xf32> -> vector<8x64xf32>
    %c1_29 = arith.constant 1 : index
    %c0_30 = arith.constant 0 : index
    %c0_31 = arith.constant 0 : index
    %36 = vector.load %arg8[%c1_29, %c0_30, %c0_31] : memref<2x128x64xf32, #tpu.memory_space<vmem>>, vector<1x128x64xf32>
    %37 = vector.shape_cast %36 : vector<1x128x64xf32> to vector<128x64xf32>
    %cst_32 = arith.constant dense<0.000000e+00> : vector<8x64xf32>
    %38 = tpu.matmul %31, %37, %cst_32 {dimension_numbers = #tpu.dot_dimension_numbers<[1], [0], [0], [1], [0, 0, 1, 1], [], []>} : vector<8x128xf32>, vector<128x64xf32>, vector<8x64xf32> -> vector<8x64xf32>
    %cst_33 = arith.constant dense<0.000000e+00> : vector<8x64xf32>
    %39 = tpu.matmul %29, %37, %cst_33 {dimension_numbers = #tpu.dot_dimension_numbers<[1], [0], [0], [1], [0, 0, 1, 1], [], []>} : vector<8x128xf32>, vector<128x64xf32>, vector<8x64xf32> -> vector<8x64xf32>
    %cst_34 = arith.constant 0.000000e+00 : f32
    %40 = vector.broadcast %cst_34 : f32 to vector<8x1xf32>
    %41 = vector.extract_strided_slice %38 {offsets = [0, 0], sizes = [8, 63], strides = [1, 1]} : vector<8x64xf32> to vector<8x63xf32>
    %42 = tpu.concatenate %40, %41 in 1 : vector<8x1xf32>, vector<8x63xf32> -> vector<8x64xf32>
    %c0_35 = arith.constant 0 : index
    %c0_36 = arith.constant 0 : index
    %c0_37 = arith.constant 0 : index
    %43 = vector.load %arg6[%c0_35, %c0_36, %c0_37] : memref<3x16x8xf32, #tpu.memory_space<vmem>>, vector<1x16x8xf32>
    %44 = vector.shape_cast %43 : vector<1x16x8xf32> to vector<16x8xf32>
    %cst_38 = arith.constant dense<0.000000e+00> : vector<16x64xf32>
    %45 = tpu.matmul %44, %42, %cst_38 {dimension_numbers = #tpu.dot_dimension_numbers<[1], [0], [0], [1], [0, 0, 1, 1], [], []>} : vector<16x8xf32>, vector<8x64xf32>, vector<16x64xf32> -> vector<16x64xf32>
    %c1_39 = arith.constant 1 : index
    %c0_40 = arith.constant 0 : index
    %c0_41 = arith.constant 0 : index
    %46 = vector.load %arg6[%c1_39, %c0_40, %c0_41] : memref<3x16x8xf32, #tpu.memory_space<vmem>>, vector<1x16x8xf32>
    %47 = vector.shape_cast %46 : vector<1x16x8xf32> to vector<16x8xf32>
    %cst_42 = arith.constant dense<0.000000e+00> : vector<16x64xf32>
    %48 = tpu.matmul %47, %34, %cst_42 {dimension_numbers = #tpu.dot_dimension_numbers<[1], [0], [0], [1], [0, 0, 1, 1], [], []>} : vector<16x8xf32>, vector<8x64xf32>, vector<16x64xf32> -> vector<16x64xf32>
    %49 = arith.addf %45, %48 : vector<16x64xf32>
    %c2_43 = arith.constant 2 : index
    %c0_44 = arith.constant 0 : index
    %c0_45 = arith.constant 0 : index
    %50 = vector.load %arg6[%c2_43, %c0_44, %c0_45] : memref<3x16x8xf32, #tpu.memory_space<vmem>>, vector<1x16x8xf32>
    %51 = vector.shape_cast %50 : vector<1x16x8xf32> to vector<16x8xf32>
    %cst_46 = arith.constant dense<0.000000e+00> : vector<16x64xf32>
    %52 = tpu.matmul %51, %38, %cst_46 {dimension_numbers = #tpu.dot_dimension_numbers<[1], [0], [0], [1], [0, 0, 1, 1], [], []>} : vector<16x8xf32>, vector<8x64xf32>, vector<16x64xf32> -> vector<16x64xf32>
    %53 = arith.addf %49, %52 : vector<16x64xf32>
    %c0_47 = arith.constant 0 : index
    %c0_48 = arith.constant 0 : index
    %54 = vector.load %arg7[%c0_47, %c0_48] : memref<16x1xf32, #tpu.memory_space<vmem>>, vector<16x1xf32>
    %55 = vector.broadcast %54 : vector<16x1xf32> to vector<16x64xf32>
    %56 = arith.addf %53, %55 : vector<16x64xf32>
    %57 = tpu.concatenate %34, %38 in 0 : vector<8x64xf32>, vector<8x64xf32> -> vector<16x64xf32>
    %58 = tpu.concatenate %35, %39 in 0 : vector<8x64xf32>, vector<8x64xf32> -> vector<16x64xf32>
    %59 = arith.addf %58, %56 : vector<16x64xf32>
    %c0_49 = arith.constant 0 : index
    %c0_50 = arith.constant 0 : index
    %c0_51 = arith.constant 0 : index
    %60 = vector.load %arg12[%c0_49, %c0_50, %c0_51] : memref<2x64x32xf32, #tpu.memory_space<vmem>>, vector<1x64x32xf32>
    %61 = vector.shape_cast %60 : vector<1x64x32xf32> to vector<64x32xf32>
    %cst_52 = arith.constant dense<0.000000e+00> : vector<16x32xf32>
    %62 = tpu.matmul %59, %61, %cst_52 {dimension_numbers = #tpu.dot_dimension_numbers<[1], [0], [0], [1], [0, 0, 1, 1], [], []>} : vector<16x64xf32>, vector<64x32xf32>, vector<16x32xf32> -> vector<16x32xf32>
    %cst_53 = arith.constant dense<0.000000e+00> : vector<16x32xf32>
    %63 = tpu.matmul %57, %61, %cst_53 {dimension_numbers = #tpu.dot_dimension_numbers<[1], [0], [0], [1], [0, 0, 1, 1], [], []>} : vector<16x64xf32>, vector<64x32xf32>, vector<16x32xf32> -> vector<16x32xf32>
    %c1_54 = arith.constant 1 : index
    %c0_55 = arith.constant 0 : index
    %c0_56 = arith.constant 0 : index
    %64 = vector.load %arg12[%c1_54, %c0_55, %c0_56] : memref<2x64x32xf32, #tpu.memory_space<vmem>>, vector<1x64x32xf32>
    %65 = vector.shape_cast %64 : vector<1x64x32xf32> to vector<64x32xf32>
    %cst_57 = arith.constant dense<0.000000e+00> : vector<16x32xf32>
    %66 = tpu.matmul %59, %65, %cst_57 {dimension_numbers = #tpu.dot_dimension_numbers<[1], [0], [0], [1], [0, 0, 1, 1], [], []>} : vector<16x64xf32>, vector<64x32xf32>, vector<16x32xf32> -> vector<16x32xf32>
    %cst_58 = arith.constant dense<0.000000e+00> : vector<16x32xf32>
    %67 = tpu.matmul %57, %65, %cst_58 {dimension_numbers = #tpu.dot_dimension_numbers<[1], [0], [0], [1], [0, 0, 1, 1], [], []>} : vector<16x64xf32>, vector<64x32xf32>, vector<16x32xf32> -> vector<16x32xf32>
    %cst_59 = arith.constant 0.000000e+00 : f32
    %68 = vector.broadcast %cst_59 : f32 to vector<16x1xf32>
    %69 = vector.extract_strided_slice %66 {offsets = [0, 0], sizes = [16, 31], strides = [1, 1]} : vector<16x32xf32> to vector<16x31xf32>
    %70 = tpu.concatenate %68, %69 in 1 : vector<16x1xf32>, vector<16x31xf32> -> vector<16x32xf32>
    %c0_60 = arith.constant 0 : index
    %c0_61 = arith.constant 0 : index
    %c0_62 = arith.constant 0 : index
    %71 = vector.load %arg10[%c0_60, %c0_61, %c0_62] : memref<3x32x16xf32, #tpu.memory_space<vmem>>, vector<1x32x16xf32>
    %72 = vector.shape_cast %71 : vector<1x32x16xf32> to vector<32x16xf32>
    %cst_63 = arith.constant dense<0.000000e+00> : vector<32x32xf32>
    %73 = tpu.matmul %72, %70, %cst_63 {dimension_numbers = #tpu.dot_dimension_numbers<[1], [0], [0], [1], [0, 0, 1, 1], [], []>} : vector<32x16xf32>, vector<16x32xf32>, vector<32x32xf32> -> vector<32x32xf32>
    %c1_64 = arith.constant 1 : index
    %c0_65 = arith.constant 0 : index
    %c0_66 = arith.constant 0 : index
    %74 = vector.load %arg10[%c1_64, %c0_65, %c0_66] : memref<3x32x16xf32, #tpu.memory_space<vmem>>, vector<1x32x16xf32>
    %75 = vector.shape_cast %74 : vector<1x32x16xf32> to vector<32x16xf32>
    %cst_67 = arith.constant dense<0.000000e+00> : vector<32x32xf32>
    %76 = tpu.matmul %75, %62, %cst_67 {dimension_numbers = #tpu.dot_dimension_numbers<[1], [0], [0], [1], [0, 0, 1, 1], [], []>} : vector<32x16xf32>, vector<16x32xf32>, vector<32x32xf32> -> vector<32x32xf32>
    %77 = arith.addf %73, %76 : vector<32x32xf32>
    %c2_68 = arith.constant 2 : index
    %c0_69 = arith.constant 0 : index
    %c0_70 = arith.constant 0 : index
    %78 = vector.load %arg10[%c2_68, %c0_69, %c0_70] : memref<3x32x16xf32, #tpu.memory_space<vmem>>, vector<1x32x16xf32>
    %79 = vector.shape_cast %78 : vector<1x32x16xf32> to vector<32x16xf32>
    %cst_71 = arith.constant dense<0.000000e+00> : vector<32x32xf32>
    %80 = tpu.matmul %79, %66, %cst_71 {dimension_numbers = #tpu.dot_dimension_numbers<[1], [0], [0], [1], [0, 0, 1, 1], [], []>} : vector<32x16xf32>, vector<16x32xf32>, vector<32x32xf32> -> vector<32x32xf32>
    %81 = arith.addf %77, %80 : vector<32x32xf32>
    %c0_72 = arith.constant 0 : index
    %c0_73 = arith.constant 0 : index
    %82 = vector.load %arg11[%c0_72, %c0_73] : memref<32x1xf32, #tpu.memory_space<vmem>>, vector<32x1xf32>
    %83 = vector.broadcast %82 : vector<32x1xf32> to vector<32x32xf32>
    %84 = arith.addf %81, %83 : vector<32x32xf32>
    %85 = tpu.concatenate %62, %66 in 0 : vector<16x32xf32>, vector<16x32xf32> -> vector<32x32xf32>
    %86 = tpu.concatenate %63, %67 in 0 : vector<16x32xf32>, vector<16x32xf32> -> vector<32x32xf32>
    %87 = arith.addf %86, %84 : vector<32x32xf32>
    %88 = tpu.concatenate %85, %87 in 0 : vector<32x32xf32>, vector<32x32xf32> -> vector<64x32xf32>
    %cst_74 = arith.constant 0.000000e+00 : f32
    %89 = vector.broadcast %cst_74 : f32 to vector<64x1xf32>
    %90 = vector.extract_strided_slice %88 {offsets = [0, 0], sizes = [64, 31], strides = [1, 1]} : vector<64x32xf32> to vector<64x31xf32>
    %91 = tpu.concatenate %89, %90 in 1 : vector<64x1xf32>, vector<64x31xf32> -> vector<64x32xf32>
    %c0_75 = arith.constant 0 : index
    %c0_76 = arith.constant 0 : index
    %c0_77 = arith.constant 0 : index
    %92 = vector.load %arg14[%c0_75, %c0_76, %c0_77] : memref<3x64x64xf32, #tpu.memory_space<vmem>>, vector<1x64x64xf32>
    %93 = vector.shape_cast %92 : vector<1x64x64xf32> to vector<64x64xf32>
    %cst_78 = arith.constant dense<0.000000e+00> : vector<64x32xf32>
    %94 = tpu.matmul %93, %91, %cst_78 {dimension_numbers = #tpu.dot_dimension_numbers<[1], [0], [0], [1], [0, 0, 1, 1], [], []>} : vector<64x64xf32>, vector<64x32xf32>, vector<64x32xf32> -> vector<64x32xf32>
    %c1_79 = arith.constant 1 : index
    %c0_80 = arith.constant 0 : index
    %c0_81 = arith.constant 0 : index
    %95 = vector.load %arg14[%c1_79, %c0_80, %c0_81] : memref<3x64x64xf32, #tpu.memory_space<vmem>>, vector<1x64x64xf32>
    %96 = vector.shape_cast %95 : vector<1x64x64xf32> to vector<64x64xf32>
    %cst_82 = arith.constant dense<0.000000e+00> : vector<64x32xf32>
    %97 = tpu.matmul %96, %88, %cst_82 {dimension_numbers = #tpu.dot_dimension_numbers<[1], [0], [0], [1], [0, 0, 1, 1], [], []>} : vector<64x64xf32>, vector<64x32xf32>, vector<64x32xf32> -> vector<64x32xf32>
    %98 = arith.addf %94, %97 : vector<64x32xf32>
    %cst_83 = arith.constant 0.000000e+00 : f32
    %99 = vector.broadcast %cst_83 : f32 to vector<64x1xf32>
    %100 = vector.extract_strided_slice %88 {offsets = [0, 1], sizes = [64, 31], strides = [1, 1]} : vector<64x32xf32> to vector<64x31xf32>
    %101 = tpu.concatenate %100, %99 in 1 : vector<64x31xf32>, vector<64x1xf32> -> vector<64x32xf32>
    %c2_84 = arith.constant 2 : index
    %c0_85 = arith.constant 0 : index
    %c0_86 = arith.constant 0 : index
    %102 = vector.load %arg14[%c2_84, %c0_85, %c0_86] : memref<3x64x64xf32, #tpu.memory_space<vmem>>, vector<1x64x64xf32>
    %103 = vector.shape_cast %102 : vector<1x64x64xf32> to vector<64x64xf32>
    %cst_87 = arith.constant dense<0.000000e+00> : vector<64x32xf32>
    %104 = tpu.matmul %103, %101, %cst_87 {dimension_numbers = #tpu.dot_dimension_numbers<[1], [0], [0], [1], [0, 0, 1, 1], [], []>} : vector<64x64xf32>, vector<64x32xf32>, vector<64x32xf32> -> vector<64x32xf32>
    %105 = arith.addf %98, %104 : vector<64x32xf32>
    %c0_88 = arith.constant 0 : index
    %c0_89 = arith.constant 0 : index
    %106 = vector.load %arg15[%c0_88, %c0_89] : memref<64x1xf32, #tpu.memory_space<vmem>>, vector<64x1xf32>
    %107 = vector.broadcast %106 : vector<64x1xf32> to vector<64x32xf32>
    %108 = arith.addf %105, %107 : vector<64x32xf32>
    %109 = arith.negf %108 : vector<64x32xf32>
    %110 = math.exp %109 : vector<64x32xf32>
    %cst_90 = arith.constant 1.000000e+00 : f32
    %111 = vector.broadcast %cst_90 : f32 to vector<64x32xf32>
    %112 = arith.addf %111, %110 : vector<64x32xf32>
    %113 = arith.divf %111, %112 : vector<64x32xf32>
    %114 = arith.mulf %113, %88 : vector<64x32xf32>
    %cst_91 = arith.constant 0.000000e+00 : f32
    %115 = vector.broadcast %cst_91 : f32 to vector<64x96xf32>
    %116 = tpu.concatenate %88, %115 in 1 : vector<64x32xf32>, vector<64x96xf32> -> vector<64x128xf32>
    %c0_92 = arith.constant 0 : index
    %c0_93 = arith.constant 0 : index
    %c0_94 = arith.constant 0 : index
    %117 = vector.load %arg17[%c0_92, %c0_93, %c0_94] : memref<1x64x128xf32, #tpu.memory_space<vmem>>, vector<1x64x128xf32>
    %118 = vector.shape_cast %117 : vector<1x64x128xf32> to vector<64x128xf32>
    %119 = vector.shape_cast %116 : vector<64x128xf32> to vector<1x64x128xf32>
    tpu.vector_store %arg17[%c0_92, %c0_93, %c0_94], %119 {strides = array<i32>} : memref<1x64x128xf32, #tpu.memory_space<vmem>>, vector<1x64x128xf32>,
    %120 = tpu.concatenate %113, %115 in 1 : vector<64x32xf32>, vector<64x96xf32> -> vector<64x128xf32>
    %c0_95 = arith.constant 0 : index
    %c0_96 = arith.constant 0 : index
    %c0_97 = arith.constant 0 : index
    %121 = vector.load %arg18[%c0_95, %c0_96, %c0_97] : memref<1x64x128xf32, #tpu.memory_space<vmem>>, vector<1x64x128xf32>
    %122 = vector.shape_cast %121 : vector<1x64x128xf32> to vector<64x128xf32>
    %123 = vector.shape_cast %120 : vector<64x128xf32> to vector<1x64x128xf32>
    tpu.vector_store %arg18[%c0_95, %c0_96, %c0_97], %123 {strides = array<i32>} : memref<1x64x128xf32, #tpu.memory_space<vmem>>, vector<1x64x128xf32>,
    %124 = vector.extract_strided_slice %114 {offsets = [0, 0], sizes = [32, 32], strides = [1, 1]} : vector<64x32xf32> to vector<32x32xf32>
    %125 = vector.extract_strided_slice %114 {offsets = [32, 0], sizes = [32, 32], strides = [1, 1]} : vector<64x32xf32> to vector<32x32xf32>
    %126 = vector.extract_strided_slice %124 {offsets = [0, 0], sizes = [16, 32], strides = [1, 1]} : vector<32x32xf32> to vector<16x32xf32>
    %127 = vector.extract_strided_slice %124 {offsets = [16, 0], sizes = [16, 32], strides = [1, 1]} : vector<32x32xf32> to vector<16x32xf32>
    %cst_98 = arith.constant 0.000000e+00 : f32
    %128 = vector.broadcast %cst_98 : f32 to vector<16x1xf32>
    %129 = vector.extract_strided_slice %127 {offsets = [0, 0], sizes = [16, 31], strides = [1, 1]} : vector<16x32xf32> to vector<16x31xf32>
    %130 = tpu.concatenate %128, %129 in 1 : vector<16x1xf32>, vector<16x31xf32> -> vector<16x32xf32>
    %c0_99 = arith.constant 0 : index
    %c0_100 = arith.constant 0 : index
    %c0_101 = arith.constant 0 : index
    %131 = vector.load %arg10[%c0_99, %c0_100, %c0_101] : memref<3x32x16xf32, #tpu.memory_space<vmem>>, vector<1x32x16xf32>
    %132 = vector.shape_cast %131 : vector<1x32x16xf32> to vector<32x16xf32>
    %cst_102 = arith.constant dense<0.000000e+00> : vector<32x32xf32>
    %133 = tpu.matmul %132, %130, %cst_102 {dimension_numbers = #tpu.dot_dimension_numbers<[1], [0], [0], [1], [0, 0, 1, 1], [], []>} : vector<32x16xf32>, vector<16x32xf32>, vector<32x32xf32> -> vector<32x32xf32>
    %c1_103 = arith.constant 1 : index
    %c0_104 = arith.constant 0 : index
    %c0_105 = arith.constant 0 : index
    %134 = vector.load %arg10[%c1_103, %c0_104, %c0_105] : memref<3x32x16xf32, #tpu.memory_space<vmem>>, vector<1x32x16xf32>
    %135 = vector.shape_cast %134 : vector<1x32x16xf32> to vector<32x16xf32>
    %cst_106 = arith.constant dense<0.000000e+00> : vector<32x32xf32>
    %136 = tpu.matmul %135, %126, %cst_106 {dimension_numbers = #tpu.dot_dimension_numbers<[1], [0], [0], [1], [0, 0, 1, 1], [], []>} : vector<32x16xf32>, vector<16x32xf32>, vector<32x32xf32> -> vector<32x32xf32>
    %137 = arith.addf %133, %136 : vector<32x32xf32>
    %c2_107 = arith.constant 2 : index
    %c0_108 = arith.constant 0 : index
    %c0_109 = arith.constant 0 : index
    %138 = vector.load %arg10[%c2_107, %c0_108, %c0_109] : memref<3x32x16xf32, #tpu.memory_space<vmem>>, vector<1x32x16xf32>
    %139 = vector.shape_cast %138 : vector<1x32x16xf32> to vector<32x16xf32>
    %cst_110 = arith.constant dense<0.000000e+00> : vector<32x32xf32>
    %140 = tpu.matmul %139, %127, %cst_110 {dimension_numbers = #tpu.dot_dimension_numbers<[1], [0], [0], [1], [0, 0, 1, 1], [], []>} : vector<32x16xf32>, vector<16x32xf32>, vector<32x32xf32> -> vector<32x32xf32>
    %141 = arith.addf %137, %140 : vector<32x32xf32>
    %c0_111 = arith.constant 0 : index
    %c0_112 = arith.constant 0 : index
    %142 = vector.load %arg11[%c0_111, %c0_112] : memref<32x1xf32, #tpu.memory_space<vmem>>, vector<32x1xf32>
    %143 = vector.broadcast %142 : vector<32x1xf32> to vector<32x32xf32>
    %144 = arith.addf %141, %143 : vector<32x32xf32>
    %145 = arith.subf %125, %144 : vector<32x32xf32>
    %c0_113 = arith.constant 0 : index
    %c0_114 = arith.constant 0 : index
    %c0_115 = arith.constant 0 : index
    %146 = vector.load %arg13[%c0_113, %c0_114, %c0_115] : memref<2x32x64xf32, #tpu.memory_space<vmem>>, vector<1x32x64xf32>
    %147 = vector.shape_cast %146 : vector<1x32x64xf32> to vector<32x64xf32>
    %cst_116 = arith.constant dense<0.000000e+00> : vector<16x64xf32>
    %148 = tpu.matmul %126, %147, %cst_116 {dimension_numbers = #tpu.dot_dimension_numbers<[1], [0], [0], [1], [0, 0, 1, 1], [], []>} : vector<16x32xf32>, vector<32x64xf32>, vector<16x64xf32> -> vector<16x64xf32>
    %149 = vector.extract_strided_slice %145 {offsets = [0, 0], sizes = [16, 32], strides = [1, 1]} : vector<32x32xf32> to vector<16x32xf32>
    %cst_117 = arith.constant dense<0.000000e+00> : vector<16x64xf32>
    %150 = tpu.matmul %149, %147, %cst_117 {dimension_numbers = #tpu.dot_dimension_numbers<[1], [0], [0], [1], [0, 0, 1, 1], [], []>} : vector<16x32xf32>, vector<32x64xf32>, vector<16x64xf32> -> vector<16x64xf32>
    %c1_118 = arith.constant 1 : index
    %c0_119 = arith.constant 0 : index
    %c0_120 = arith.constant 0 : index
    %151 = vector.load %arg13[%c1_118, %c0_119, %c0_120] : memref<2x32x64xf32, #tpu.memory_space<vmem>>, vector<1x32x64xf32>
    %152 = vector.shape_cast %151 : vector<1x32x64xf32> to vector<32x64xf32>
    %cst_121 = arith.constant dense<0.000000e+00> : vector<16x64xf32>
    %153 = tpu.matmul %127, %152, %cst_121 {dimension_numbers = #tpu.dot_dimension_numbers<[1], [0], [0], [1], [0, 0, 1, 1], [], []>} : vector<16x32xf32>, vector<32x64xf32>, vector<16x64xf32> -> vector<16x64xf32>
    %154 = vector.extract_strided_slice %145 {offsets = [16, 0], sizes = [16, 32], strides = [1, 1]} : vector<32x32xf32> to vector<16x32xf32>
    %cst_122 = arith.constant dense<0.000000e+00> : vector<16x64xf32>
    %155 = tpu.matmul %154, %152, %cst_122 {dimension_numbers = #tpu.dot_dimension_numbers<[1], [0], [0], [1], [0, 0, 1, 1], [], []>} : vector<16x32xf32>, vector<32x64xf32>, vector<16x64xf32> -> vector<16x64xf32>
    %156 = arith.addf %148, %153 : vector<16x64xf32>
    %157 = arith.addf %150, %155 : vector<16x64xf32>
    %158 = vector.extract_strided_slice %157 {offsets = [0, 0], sizes = [8, 64], strides = [1, 1]} : vector<16x64xf32> to vector<8x64xf32>
    %159 = vector.extract_strided_slice %157 {offsets = [8, 0], sizes = [8, 64], strides = [1, 1]} : vector<16x64xf32> to vector<8x64xf32>
    %cst_123 = arith.constant 0.000000e+00 : f32
    %160 = vector.broadcast %cst_123 : f32 to vector<8x1xf32>
    %161 = vector.extract_strided_slice %159 {offsets = [0, 0], sizes = [8, 63], strides = [1, 1]} : vector<8x64xf32> to vector<8x63xf32>
    %162 = tpu.concatenate %160, %161 in 1 : vector<8x1xf32>, vector<8x63xf32> -> vector<8x64xf32>
    %c0_124 = arith.constant 0 : index
    %c0_125 = arith.constant 0 : index
    %c0_126 = arith.constant 0 : index
    %163 = vector.load %arg6[%c0_124, %c0_125, %c0_126] : memref<3x16x8xf32, #tpu.memory_space<vmem>>, vector<1x16x8xf32>
    %164 = vector.shape_cast %163 : vector<1x16x8xf32> to vector<16x8xf32>
    %cst_127 = arith.constant dense<0.000000e+00> : vector<16x64xf32>
    %165 = tpu.matmul %164, %162, %cst_127 {dimension_numbers = #tpu.dot_dimension_numbers<[1], [0], [0], [1], [0, 0, 1, 1], [], []>} : vector<16x8xf32>, vector<8x64xf32>, vector<16x64xf32> -> vector<16x64xf32>
    %c1_128 = arith.constant 1 : index
    %c0_129 = arith.constant 0 : index
    %c0_130 = arith.constant 0 : index
    %166 = vector.load %arg6[%c1_128, %c0_129, %c0_130] : memref<3x16x8xf32, #tpu.memory_space<vmem>>, vector<1x16x8xf32>
    %167 = vector.shape_cast %166 : vector<1x16x8xf32> to vector<16x8xf32>
    %cst_131 = arith.constant dense<0.000000e+00> : vector<16x64xf32>
    %168 = tpu.matmul %167, %158, %cst_131 {dimension_numbers = #tpu.dot_dimension_numbers<[1], [0], [0], [1], [0, 0, 1, 1], [], []>} : vector<16x8xf32>, vector<8x64xf32>, vector<16x64xf32> -> vector<16x64xf32>
    %169 = arith.addf %165, %168 : vector<16x64xf32>
    %c2_132 = arith.constant 2 : index
    %c0_133 = arith.constant 0 : index
    %c0_134 = arith.constant 0 : index
    %170 = vector.load %arg6[%c2_132, %c0_133, %c0_134] : memref<3x16x8xf32, #tpu.memory_space<vmem>>, vector<1x16x8xf32>
    %171 = vector.shape_cast %170 : vector<1x16x8xf32> to vector<16x8xf32>
    %cst_135 = arith.constant dense<0.000000e+00> : vector<16x64xf32>
    %172 = tpu.matmul %171, %159, %cst_135 {dimension_numbers = #tpu.dot_dimension_numbers<[1], [0], [0], [1], [0, 0, 1, 1], [], []>} : vector<16x8xf32>, vector<8x64xf32>, vector<16x64xf32> -> vector<16x64xf32>
    %173 = arith.addf %169, %172 : vector<16x64xf32>
    %c0_136 = arith.constant 0 : index
    %c0_137 = arith.constant 0 : index
    %174 = vector.load %arg7[%c0_136, %c0_137] : memref<16x1xf32, #tpu.memory_space<vmem>>, vector<16x1xf32>
    %175 = vector.broadcast %174 : vector<16x1xf32> to vector<16x64xf32>
    %176 = arith.addf %173, %175 : vector<16x64xf32>
    %177 = arith.subf %156, %176 : vector<16x64xf32>
    %c0_138 = arith.constant 0 : index
    %c0_139 = arith.constant 0 : index
    %c0_140 = arith.constant 0 : index
    %178 = vector.load %arg9[%c0_138, %c0_139, %c0_140] : memref<2x64x128xf32, #tpu.memory_space<vmem>>, vector<1x64x128xf32>
    %179 = vector.shape_cast %178 : vector<1x64x128xf32> to vector<64x128xf32>
    %cst_141 = arith.constant dense<0.000000e+00> : vector<8x128xf32>
    %180 = tpu.matmul %158, %179, %cst_141 {dimension_numbers = #tpu.dot_dimension_numbers<[1], [0], [0], [1], [0, 0, 1, 1], [], []>} : vector<8x64xf32>, vector<64x128xf32>, vector<8x128xf32> -> vector<8x128xf32>
    %181 = vector.extract_strided_slice %177 {offsets = [0, 0], sizes = [8, 64], strides = [1, 1]} : vector<16x64xf32> to vector<8x64xf32>
    %cst_142 = arith.constant dense<0.000000e+00> : vector<8x128xf32>
    %182 = tpu.matmul %181, %179, %cst_142 {dimension_numbers = #tpu.dot_dimension_numbers<[1], [0], [0], [1], [0, 0, 1, 1], [], []>} : vector<8x64xf32>, vector<64x128xf32>, vector<8x128xf32> -> vector<8x128xf32>
    %c1_143 = arith.constant 1 : index
    %c0_144 = arith.constant 0 : index
    %c0_145 = arith.constant 0 : index
    %183 = vector.load %arg9[%c1_143, %c0_144, %c0_145] : memref<2x64x128xf32, #tpu.memory_space<vmem>>, vector<1x64x128xf32>
    %184 = vector.shape_cast %183 : vector<1x64x128xf32> to vector<64x128xf32>
    %cst_146 = arith.constant dense<0.000000e+00> : vector<8x128xf32>
    %185 = tpu.matmul %159, %184, %cst_146 {dimension_numbers = #tpu.dot_dimension_numbers<[1], [0], [0], [1], [0, 0, 1, 1], [], []>} : vector<8x64xf32>, vector<64x128xf32>, vector<8x128xf32> -> vector<8x128xf32>
    %186 = vector.extract_strided_slice %177 {offsets = [8, 0], sizes = [8, 64], strides = [1, 1]} : vector<16x64xf32> to vector<8x64xf32>
    %cst_147 = arith.constant dense<0.000000e+00> : vector<8x128xf32>
    %187 = tpu.matmul %186, %184, %cst_147 {dimension_numbers = #tpu.dot_dimension_numbers<[1], [0], [0], [1], [0, 0, 1, 1], [], []>} : vector<8x64xf32>, vector<64x128xf32>, vector<8x128xf32> -> vector<8x128xf32>
    %188 = arith.addf %180, %185 : vector<8x128xf32>
    %189 = arith.addf %182, %187 : vector<8x128xf32>
    %190 = vector.extract_strided_slice %189 {offsets = [0, 0], sizes = [4, 128], strides = [1, 1]} : vector<8x128xf32> to vector<4x128xf32>
    %191 = vector.extract_strided_slice %189 {offsets = [4, 0], sizes = [4, 128], strides = [1, 1]} : vector<8x128xf32> to vector<4x128xf32>
    %cst_148 = arith.constant 0.000000e+00 : f32
    %192 = vector.broadcast %cst_148 : f32 to vector<4x1xf32>
    %193 = vector.extract_strided_slice %191 {offsets = [0, 0], sizes = [4, 127], strides = [1, 1]} : vector<4x128xf32> to vector<4x127xf32>
    %194 = tpu.concatenate %192, %193 in 1 : vector<4x1xf32>, vector<4x127xf32> -> vector<4x128xf32>
    %c0_149 = arith.constant 0 : index
    %c0_150 = arith.constant 0 : index
    %c0_151 = arith.constant 0 : index
    %195 = vector.load %arg2[%c0_149, %c0_150, %c0_151] : memref<3x8x4xf32, #tpu.memory_space<vmem>>, vector<1x8x4xf32>
    %196 = vector.shape_cast %195 : vector<1x8x4xf32> to vector<8x4xf32>
    %cst_152 = arith.constant dense<0.000000e+00> : vector<8x128xf32>
    %197 = tpu.matmul %196, %194, %cst_152 {dimension_numbers = #tpu.dot_dimension_numbers<[1], [0], [0], [1], [0, 0, 1, 1], [], []>} : vector<8x4xf32>, vector<4x128xf32>, vector<8x128xf32> -> vector<8x128xf32>
    %c1_153 = arith.constant 1 : index
    %c0_154 = arith.constant 0 : index
    %c0_155 = arith.constant 0 : index
    %198 = vector.load %arg2[%c1_153, %c0_154, %c0_155] : memref<3x8x4xf32, #tpu.memory_space<vmem>>, vector<1x8x4xf32>
    %199 = vector.shape_cast %198 : vector<1x8x4xf32> to vector<8x4xf32>
    %cst_156 = arith.constant dense<0.000000e+00> : vector<8x128xf32>
    %200 = tpu.matmul %199, %190, %cst_156 {dimension_numbers = #tpu.dot_dimension_numbers<[1], [0], [0], [1], [0, 0, 1, 1], [], []>} : vector<8x4xf32>, vector<4x128xf32>, vector<8x128xf32> -> vector<8x128xf32>
    %201 = arith.addf %197, %200 : vector<8x128xf32>
    %c2_157 = arith.constant 2 : index
    %c0_158 = arith.constant 0 : index
    %c0_159 = arith.constant 0 : index
    %202 = vector.load %arg2[%c2_157, %c0_158, %c0_159] : memref<3x8x4xf32, #tpu.memory_space<vmem>>, vector<1x8x4xf32>
    %203 = vector.shape_cast %202 : vector<1x8x4xf32> to vector<8x4xf32>
    %cst_160 = arith.constant dense<0.000000e+00> : vector<8x128xf32>
    %204 = tpu.matmul %203, %191, %cst_160 {dimension_numbers = #tpu.dot_dimension_numbers<[1], [0], [0], [1], [0, 0, 1, 1], [], []>} : vector<8x4xf32>, vector<4x128xf32>, vector<8x128xf32> -> vector<8x128xf32>
    %205 = arith.addf %201, %204 : vector<8x128xf32>
    %c0_161 = arith.constant 0 : index
    %c0_162 = arith.constant 0 : index
    %206 = vector.load %arg3[%c0_161, %c0_162] : memref<8x1xf32, #tpu.memory_space<vmem>>, vector<8x1xf32>
    %207 = vector.broadcast %206 : vector<8x1xf32> to vector<8x128xf32>
    %208 = arith.addf %205, %207 : vector<8x128xf32>
    %209 = arith.subf %188, %208 : vector<8x128xf32>
    %c0_163 = arith.constant 0 : index
    %c0_164 = arith.constant 0 : index
    %c0_165 = arith.constant 0 : index
    %210 = vector.load %arg5[%c0_163, %c0_164, %c0_165] : memref<2x128x256xf32, #tpu.memory_space<vmem>>, vector<1x128x256xf32>
    %211 = vector.shape_cast %210 : vector<1x128x256xf32> to vector<128x256xf32>
    %cst_166 = arith.constant dense<0.000000e+00> : vector<4x256xf32>
    %212 = tpu.matmul %190, %211, %cst_166 {dimension_numbers = #tpu.dot_dimension_numbers<[1], [0], [0], [1], [0, 0, 1, 1], [], []>} : vector<4x128xf32>, vector<128x256xf32>, vector<4x256xf32> -> vector<4x256xf32>
    %213 = vector.extract_strided_slice %209 {offsets = [0, 0], sizes = [4, 128], strides = [1, 1]} : vector<8x128xf32> to vector<4x128xf32>
    %cst_167 = arith.constant dense<0.000000e+00> : vector<4x256xf32>
    %214 = tpu.matmul %213, %211, %cst_167 {dimension_numbers = #tpu.dot_dimension_numbers<[1], [0], [0], [1], [0, 0, 1, 1], [], []>} : vector<4x128xf32>, vector<128x256xf32>, vector<4x256xf32> -> vector<4x256xf32>
    %c1_168 = arith.constant 1 : index
    %c0_169 = arith.constant 0 : index
    %c0_170 = arith.constant 0 : index
    %215 = vector.load %arg5[%c1_168, %c0_169, %c0_170] : memref<2x128x256xf32, #tpu.memory_space<vmem>>, vector<1x128x256xf32>
    %216 = vector.shape_cast %215 : vector<1x128x256xf32> to vector<128x256xf32>
    %cst_171 = arith.constant dense<0.000000e+00> : vector<4x256xf32>
    %217 = tpu.matmul %191, %216, %cst_171 {dimension_numbers = #tpu.dot_dimension_numbers<[1], [0], [0], [1], [0, 0, 1, 1], [], []>} : vector<4x128xf32>, vector<128x256xf32>, vector<4x256xf32> -> vector<4x256xf32>
    %218 = vector.extract_strided_slice %209 {offsets = [4, 0], sizes = [4, 128], strides = [1, 1]} : vector<8x128xf32> to vector<4x128xf32>
    %cst_172 = arith.constant dense<0.000000e+00> : vector<4x256xf32>
    %219 = tpu.matmul %218, %216, %cst_172 {dimension_numbers = #tpu.dot_dimension_numbers<[1], [0], [0], [1], [0, 0, 1, 1], [], []>} : vector<4x128xf32>, vector<128x256xf32>, vector<4x256xf32> -> vector<4x256xf32>
    %220 = arith.addf %212, %217 : vector<4x256xf32>
    %221 = arith.addf %214, %219 : vector<4x256xf32>
    %222 = vector.extract_strided_slice %221 {offsets = [0, 0], sizes = [1, 256], strides = [1, 1]} : vector<4x256xf32> to vector<1x256xf32>
    %223 = vector.extract_strided_slice %220 {offsets = [0, 0], sizes = [1, 256], strides = [1, 1]} : vector<4x256xf32> to vector<1x256xf32>
    %224 = tpu.concatenate %222, %223 in 0 : vector<1x256xf32>, vector<1x256xf32> -> vector<2x256xf32>
    %c0_173 = arith.constant 0 : index
    %c0_174 = arith.constant 0 : index
    %c0_175 = arith.constant 0 : index
    %225 = vector.load %arg16[%c0_173, %c0_174, %c0_175] : memref<1x2x256xf32, #tpu.memory_space<vmem>>, vector<1x2x256xf32>
    %226 = vector.shape_cast %225 : vector<1x2x256xf32> to vector<2x256xf32>
    %227 = vector.shape_cast %224 : vector<2x256xf32> to vector<1x2x256xf32>
    tpu.vector_store %arg16[%c0_173, %c0_174, %c0_175], %227 {strides = array<i32>} : memref<1x2x256xf32, #tpu.memory_space<vmem>>, vector<1x2x256xf32>,
    return
  }
  func.func @transform_0(%arg0: i32) -> (i32, i32, i32) {
    %c0_i32 = arith.constant 0 : i32
    %c0_i32_0 = arith.constant 0 : i32
    %c0_i32_1 = arith.constant 0 : i32
    return %arg0, %c0_i32, %c0_i32_0 : i32, i32, i32
  }
  func.func @transform_1(%arg0: i32) -> (i32, i32, i32) {
    %c0_i32 = arith.constant 0 : i32
    %c0_i32_0 = arith.constant 0 : i32
    %c0_i32_1 = arith.constant 0 : i32
    %c0_i32_2 = arith.constant 0 : i32
    return %c0_i32, %c0_i32_0, %c0_i32_1 : i32, i32, i32
  }
  func.func @transform_2(%arg0: i32) -> (i32, i32) {
    %c0_i32 = arith.constant 0 : i32
    %c0_i32_0 = arith.constant 0 : i32
    %c0_i32_1 = arith.constant 0 : i32
    return %c0_i32, %c0_i32_0 : i32, i32
  }
  func.func @transform_3(%arg0: i32) -> (i32, i32, i32) {
    %c0_i32 = arith.constant 0 : i32
    %c0_i32_0 = arith.constant 0 : i32
    %c0_i32_1 = arith.constant 0 : i32
    %c0_i32_2 = arith.constant 0 : i32
    return %c0_i32, %c0_i32_0, %c0_i32_1 : i32, i32, i32
  }
  func.func @transform_4(%arg0: i32) -> (i32, i32, i32) {
    %c0_i32 = arith.constant 0 : i32
    %c0_i32_0 = arith.constant 0 : i32
    %c0_i32_1 = arith.constant 0 : i32
    %c0_i32_2 = arith.constant 0 : i32
    return %c0_i32, %c0_i32_0, %c0_i32_1 : i32, i32, i32
  }
  func.func @transform_5(%arg0: i32) -> (i32, i32, i32) {
    %c0_i32 = arith.constant 0 : i32
    %c0_i32_0 = arith.constant 0 : i32
    %c0_i32_1 = arith.constant 0 : i32
    %c0_i32_2 = arith.constant 0 : i32
    return %c0_i32, %c0_i32_0, %c0_i32_1 : i32, i32, i32
  }
  func.func @transform_6(%arg0: i32) -> (i32, i32) {
    %c0_i32 = arith.constant 0 : i32
    %c0_i32_0 = arith.constant 0 : i32
    %c0_i32_1 = arith.constant 0 : i32
    return %c0_i32, %c0_i32_0 : i32, i32
  }
  func.func @transform_7(%arg0: i32) -> (i32, i32, i32) {
    %c0_i32 = arith.constant 0 : i32
    %c0_i32_0 = arith.constant 0 : i32
    %c0_i32_1 = arith.constant 0 : i32
    %c0_i32_2 = arith.constant 0 : i32
    return %c0_i32, %c0_i32_0, %c0_i32_1 : i32, i32, i32
  }
  func.func @transform_8(%arg0: i32) -> (i32, i32, i32) {
    %c0_i32 = arith.constant 0 : i32
    %c0_i32_0 = arith.constant 0 : i32
    %c0_i32_1 = arith.constant 0 : i32
    %c0_i32_2 = arith.constant 0 : i32
    return %c0_i32, %c0_i32_0, %c0_i32_1 : i32, i32, i32
  }
  func.func @transform_9(%arg0: i32) -> (i32, i32, i32) {
    %c0_i32 = arith.constant 0 : i32
    %c0_i32_0 = arith.constant 0 : i32
    %c0_i32_1 = arith.constant 0 : i32
    %c0_i32_2 = arith.constant 0 : i32
    return %c0_i32, %c0_i32_0, %c0_i32_1 : i32, i32, i32
  }
  func.func @transform_10(%arg0: i32) -> (i32, i32) {
    %c0_i32 = arith.constant 0 : i32
    %c0_i32_0 = arith.constant 0 : i32
    %c0_i32_1 = arith.constant 0 : i32
    return %c0_i32, %c0_i32_0 : i32, i32
  }
  func.func @transform_11(%arg0: i32) -> (i32, i32, i32) {
    %c0_i32 = arith.constant 0 : i32
    %c0_i32_0 = arith.constant 0 : i32
    %c0_i32_1 = arith.constant 0 : i32
    %c0_i32_2 = arith.constant 0 : i32
    return %c0_i32, %c0_i32_0, %c0_i32_1 : i32, i32, i32
  }
  func.func @transform_12(%arg0: i32) -> (i32, i32, i32) {
    %c0_i32 = arith.constant 0 : i32
    %c0_i32_0 = arith.constant 0 : i32
    %c0_i32_1 = arith.constant 0 : i32
    %c0_i32_2 = arith.constant 0 : i32
    return %c0_i32, %c0_i32_0, %c0_i32_1 : i32, i32, i32
  }
  func.func @transform_13(%arg0: i32) -> (i32, i32, i32) {
    %c0_i32 = arith.constant 0 : i32
    %c0_i32_0 = arith.constant 0 : i32
    %c0_i32_1 = arith.constant 0 : i32
    %c0_i32_2 = arith.constant 0 : i32
    return %c0_i32, %c0_i32_0, %c0_i32_1 : i32, i32, i32
  }
  func.func @transform_14(%arg0: i32) -> (i32, i32) {
    %c0_i32 = arith.constant 0 : i32
    %c0_i32_0 = arith.constant 0 : i32
    %c0_i32_1 = arith.constant 0 : i32
    return %c0_i32, %c0_i32_0 : i32, i32
  }
  func.func @transform_15(%arg0: i32) -> (i32, i32, i32) {
    %c0_i32 = arith.constant 0 : i32
    %c0_i32_0 = arith.constant 0 : i32
    %c0_i32_1 = arith.constant 0 : i32
    return %arg0, %c0_i32, %c0_i32_0 : i32, i32, i32
  }
  func.func @transform_16(%arg0: i32) -> (i32, i32, i32) {
    %c0_i32 = arith.constant 0 : i32
    %c0_i32_0 = arith.constant 0 : i32
    %c0_i32_1 = arith.constant 0 : i32
    return %arg0, %c0_i32, %c0_i32_0 : i32, i32, i32
  }
  func.func @transform_17(%arg0: i32) -> (i32, i32, i32) {
    %c0_i32 = arith.constant 0 : i32
    %c0_i32_0 = arith.constant 0 : i32
    %c0_i32_1 = arith.constant 0 : i32
    return %arg0, %c0_i32, %c0_i32_0 : i32, i32, i32
  }
}

</mosaic_0001>

<llo_original>
// kernel: tpu_custom_call.1
$region0: #{tpu_custom_call.1}
  #allocation0 [shape = 'u32[]', space=smem, size = 0x4, offset = 0x4, fixed_abs, tag = 'smem constant byte address 0x4 - core index']
  #allocation1 [shape = 'u32[144,128]{1,0:T(1,128)}', space=vmem, size = 0x12000, scoped, tag = 'internal scratch']
  %s0 = inlined_call_operand.hbm [shape: f32[2,8,256], index: 0, kind: input, shape index: {}]
  %s1 = inlined_call_operand.vmem [shape: f32[3,8,4], index: 1, kind: input, shape index: {}]
  %s2 = inlined_call_operand.vmem [shape: f32[8,1], index: 2, kind: input, shape index: {}]
  %s3 = inlined_call_operand.vmem [shape: f32[2,256,128], index: 3, kind: input, shape index: {}]
  %s4 = inlined_call_operand.hbm [shape: f32[2,128,256], index: 4, kind: input, shape index: {}]
  %s5 = inlined_call_operand.vmem [shape: f32[3,16,8], index: 5, kind: input, shape index: {}]
  %s6 = inlined_call_operand.vmem [shape: f32[16,1], index: 6, kind: input, shape index: {}]
  %s7 = inlined_call_operand.vmem [shape: f32[2,128,64], index: 7, kind: input, shape index: {}]
  %s8 = inlined_call_operand.vmem [shape: f32[2,64,128], index: 8, kind: input, shape index: {}]
  %s9 = inlined_call_operand.vmem [shape: f32[3,32,16], index: 9, kind: input, shape index: {}]
  %s10 = inlined_call_operand.vmem [shape: f32[32,1], index: 10, kind: input, shape index: {}]
  %s11 = inlined_call_operand.vmem [shape: f32[2,64,32], index: 11, kind: input, shape index: {}]
  %s12 = inlined_call_operand.hbm [shape: f32[2,32,64], index: 12, kind: input, shape index: {}]
  %s13 = inlined_call_operand.vmem [shape: f32[3,64,64], index: 13, kind: input, shape index: {}]
  %s14 = inlined_call_operand.vmem [shape: f32[64,1], index: 14, kind: input, shape index: {}]
  %s15 = inlined_call_operand.hbm [shape: f32[2,2,256], index: 15, kind: output, shape index: {0}]
  %s16 = inlined_call_operand.hbm [shape: f32[2,64,128], index: 16, kind: output, shape index: {1}]
  %s17 = inlined_call_operand.hbm [shape: f32[2,64,128], index: 17, kind: output, shape index: {2}]
  %18 = xla_tuple %s15, %s16, %s17
  %s19 = sld [smem:[#allocation0]]
  $region121: #{tpu_custom_call.1} parent=0
    _
  %s21 = ssub.s32 1, %s19
  %s22 = scalar_select 0, %s21, %s19
  $region1: #{tpu_custom_call.1} parent=0
    #allocation2 [shape = 'u8[16384]{0}', space=vmem, size = 0x4000, scoped, tag = 'input window, operand 0']
    #allocation3 [shape = 's32[2]{0}', space=sflag, size = 0x8, scoped, tag = 'scoped memory for tpu_custom_call.1']
    #allocation4 [shape = 's32[2]{0}', space=sflag, size = 0x8, scoped, tag = 'scoped memory for tpu_custom_call.1']
    #allocation5 [shape = 'u8[262144]{0}', space=vmem, size = 0x40000, scoped, tag = 'input window, operand 4, single buffered']
    #allocation6 [shape = 's32[1]{0}', space=sflag, size = 0x4, scoped, tag = 'scoped memory for tpu_custom_call.1']
    #allocation7 [shape = 'u8[32768]{0}', space=vmem, size = 0x8000, scoped, tag = 'input window, operand 12, single buffered']
    #allocation8 [shape = 'u8[4096]{0}', space=vmem, size = 0x1000, scoped, tag = 'output window, operand 0']
    #allocation9 [shape = 'u8[65536]{0}', space=vmem, size = 0x10000, scoped, tag = 'output window, operand 1']
    #allocation10 [shape = 's32[2]{0}', space=sflag, size = 0x8, scoped, tag = 'scoped memory for tpu_custom_call.1']
    #allocation11 [shape = 'u8[65536]{0}', space=vmem, size = 0x10000, scoped, tag = 'output window, operand 2']
    %23 = vsyncpa [#allocation3], 0
    %s24 = scalar_lea.sflag [#allocation3], 1
    %25 = vsyncpa %s24, 0
    %26 = vsyncpa [#allocation6], 0
    %27 = vsyncpa [#allocation4], 0
    %s28 = scalar_lea.sflag [#allocation4], 1
    %29 = vsyncpa %s28, 0
    %30 = vsyncpa [#allocation10], 0
    %s31 = scalar_lea.sflag [#allocation10], 1
    %32 = vsyncpa %s31, 0
    loop: start=0, step=1, limit=4
    $region2: #{tpu_custom_call.1} parent=1 // loop_pre_header
      _
    $region3: #{tpu_custom_call.1} parent=1 // loop_header
      %s34 = sphi 0, %s38
      %p35 = scmp.ge.s32.totalorder %s34, 4
      %s44 = sphi 0, %s46
      %s47 = sphi 0, %s44
      %s48 = sphi 0, %s47
      %s64 = sphi 0, %s48
      %s68 = sphi 0, %s68
      %s70 = sphi 0, %s68
      %s71 = sphi 0, %s70
      %s85 = sphi 0, %s71
      %s89 = sphi 0, %s89
      %s91 = sphi 0, %s89
      %s92 = sphi 0, %s91
      %s106 = sphi 0, %s92
      %s110 = sphi 0, %s110
      %s112 = sphi 0, %s110
      %s113 = sphi 0, %s112
      %s127 = sphi 0, %s113
      %s131 = sphi 0, %s131
      %s133 = sphi 0, %s131
      %s134 = sphi 0, %s133
      %s148 = sphi 0, %s134
      %s152 = sphi 0, %s152
      %s154 = sphi 0, %s152
      %s155 = sphi 0, %s154
      %s169 = sphi 0, %s155
      %s173 = sphi 0, %s173
      %s175 = sphi 0, %s173
      %s176 = sphi 0, %s175
      %s190 = sphi 0, %s176
      %s194 = sphi 0, %s194
      %s196 = sphi 0, %s194
      %s197 = sphi 0, %s196
      %s211 = sphi 0, %s197
      %s215 = sphi 0, %s215
      %s217 = sphi 0, %s215
      %s218 = sphi 0, %s217
      %s232 = sphi 0, %s218
      %s236 = sphi 0, %s236
      %s238 = sphi 0, %s236
      %s239 = sphi 0, %s238
      %s253 = sphi 0, %s239
      %s257 = sphi 0, %s257
      %s259 = sphi 0, %s257
      %s260 = sphi 0, %s259
      %s274 = sphi 0, %s260
      %s278 = sphi 0, %s278
      %s280 = sphi 0, %s278
      %s281 = sphi 0, %s280
      %s295 = sphi 0, %s281
      %s299 = sphi 0, %s299
      %s301 = sphi 0, %s299
      %s302 = sphi 0, %s301
      %s316 = sphi 0, %s302
      %s320 = sphi 0, %s320
      %s322 = sphi 0, %s320
      %s323 = sphi 0, %s322
      %s337 = sphi 0, %s323
      %s341 = sphi 0, %s341
      %s343 = sphi 0, %s341
      %s344 = sphi 0, %s343
      %s358 = sphi 0, %s344
      %s364 = sphi 0, %s366
      %s367 = sphi 0, %s364
      %s368 = sphi 0, %s367
      %s384 = sphi 0, %s368
      %s390 = sphi 0, %s392
      %s393 = sphi 0, %s390
      %s394 = sphi 0, %s393
      %s410 = sphi 0, %s394
      %s416 = sphi 0, %s418
      %s419 = sphi 0, %s416
      %s420 = sphi 0, %s419
      %s436 = sphi 0, %s420
    $region4: #{tpu_custom_call.1} parent=1 // loop_header_branch
      %37 = sbr.rel (%p35) target = $region8
    $region5: #{tpu_custom_call.1} parent=1 // loop_body
      %s39 = ssub.s32 %s34, 1
      %s40 = ssub.s32 %s34, 2
      %s41 = sadd.s32 %s34, 1
      %s42 = ssub.s32 %s34, %s41
      %p43 = scmp.eq.s32.totalorder %s42, 0
      %s45 = sadd.s32 %s44, 1
      %s46 = scalar_select %p43, %s44, %s45
      %p49 = pneg %p43
      %p50 = scmp.eq.s32.totalorder %s34, 1
      %p51 = por %p49, %p50
      %p52 = scmp.ne.s32.totalorder %s44, %s47
      %p53 = scmp.eq.s32.totalorder %s34, 0
      %p54 = por %p52, %p53
      %p55 = scmp.ne.s32.totalorder %s44, %s47
      %p56 = scmp.eq.s32.totalorder %s39, 1
      %p57 = por %p55, %p56
      %p58 = scmp.ne.s32.totalorder %s47, %s48
      %p59 = scmp.eq.s32.totalorder %s39, 0
      %p60 = por %p58, %p59
      %p61 = scmp.ne.s32.totalorder %s47, %s48
      %p62 = scmp.eq.s32.totalorder %s40, 1
      %p63 = por %p61, %p62
      %p65 = scmp.ne.s32.totalorder %s48, %s64
      %p66 = scmp.eq.s32.totalorder %s40, 0
      %p67 = por %p65, %p66
      %s69 = sadd.s32 %s68, 1
      %p72 = scmp.eq.s32.totalorder %s34, 1
      %p73 = scmp.ne.s32.totalorder %s68, %s70
      %p74 = scmp.eq.s32.totalorder %s34, 0
      %p75 = por %p73, %p74
      %p76 = scmp.ne.s32.totalorder %s68, %s70
      %p77 = scmp.eq.s32.totalorder %s39, 1
      %p78 = por %p76, %p77
      %p79 = scmp.ne.s32.totalorder %s70, %s71
      %p80 = scmp.eq.s32.totalorder %s39, 0
      %p81 = por %p79, %p80
      %p82 = scmp.ne.s32.totalorder %s70, %s71
      %p83 = scmp.eq.s32.totalorder %s40, 1
      %p84 = por %p82, %p83
      %p86 = scmp.ne.s32.totalorder %s71, %s85
      %p87 = scmp.eq.s32.totalorder %s40, 0
      %p88 = por %p86, %p87
      %s90 = sadd.s32 %s89, 1
      %p93 = scmp.eq.s32.totalorder %s34, 1
      %p94 = scmp.ne.s32.totalorder %s89, %s91
      %p95 = scmp.eq.s32.totalorder %s34, 0
      %p96 = por %p94, %p95
      %p97 = scmp.ne.s32.totalorder %s89, %s91
      %p98 = scmp.eq.s32.totalorder %s39, 1
      %p99 = por %p97, %p98
      %p100 = scmp.ne.s32.totalorder %s91, %s92
      %p101 = scmp.eq.s32.totalorder %s39, 0
      %p102 = por %p100, %p101
      %p103 = scmp.ne.s32.totalorder %s91, %s92
      %p104 = scmp.eq.s32.totalorder %s40, 1
      %p105 = por %p103, %p104
      %p107 = scmp.ne.s32.totalorder %s92, %s106
      %p108 = scmp.eq.s32.totalorder %s40, 0
      %p109 = por %p107, %p108
      %s111 = sadd.s32 %s110, 1
      %p114 = scmp.eq.s32.totalorder %s34, 1
      %p115 = scmp.ne.s32.totalorder %s110, %s112
      %p116 = scmp.eq.s32.totalorder %s34, 0
      %p117 = por %p115, %p116
      %p118 = scmp.ne.s32.totalorder %s110, %s112
      %p119 = scmp.eq.s32.totalorder %s39, 1
      %p120 = por %p118, %p119
      %p121 = scmp.ne.s32.totalorder %s112, %s113
      %p122 = scmp.eq.s32.totalorder %s39, 0
      %p123 = por %p121, %p122
      %p124 = scmp.ne.s32.totalorder %s112, %s113
      %p125 = scmp.eq.s32.totalorder %s40, 1
      %p126 = por %p124, %p125
      %p128 = scmp.ne.s32.totalorder %s113, %s127
      %p129 = scmp.eq.s32.totalorder %s40, 0
      %p130 = por %p128, %p129
      %s132 = sadd.s32 %s131, 1
      %p135 = scmp.eq.s32.totalorder %s34, 1
      %p136 = scmp.ne.s32.totalorder %s131, %s133
      %p137 = scmp.eq.s32.totalorder %s34, 0
      %p138 = por %p136, %p137
      %p139 = scmp.ne.s32.totalorder %s131, %s133
      %p140 = scmp.eq.s32.totalorder %s39, 1
      %p141 = por %p139, %p140
      %p142 = scmp.ne.s32.totalorder %s133, %s134
      %p143 = scmp.eq.s32.totalorder %s39, 0
      %p144 = por %p142, %p143
      %p145 = scmp.ne.s32.totalorder %s133, %s134
      %p146 = scmp.eq.s32.totalorder %s40, 1
      %p147 = por %p145, %p146
      %p149 = scmp.ne.s32.totalorder %s134, %s148
      %p150 = scmp.eq.s32.totalorder %s40, 0
      %p151 = por %p149, %p150
      %s153 = sadd.s32 %s152, 1
      %p156 = scmp.eq.s32.totalorder %s34, 1
      %p157 = scmp.ne.s32.totalorder %s152, %s154
      %p158 = scmp.eq.s32.totalorder %s34, 0
      %p159 = por %p157, %p158
      %p160 = scmp.ne.s32.totalorder %s152, %s154
      %p161 = scmp.eq.s32.totalorder %s39, 1
      %p162 = por %p160, %p161
      %p163 = scmp.ne.s32.totalorder %s154, %s155
      %p164 = scmp.eq.s32.totalorder %s39, 0
      %p165 = por %p163, %p164
      %p166 = scmp.ne.s32.totalorder %s154, %s155
      %p167 = scmp.eq.s32.totalorder %s40, 1
      %p168 = por %p166, %p167
      %p170 = scmp.ne.s32.totalorder %s155, %s169
      %p171 = scmp.eq.s32.totalorder %s40, 0
      %p172 = por %p170, %p171
      %s174 = sadd.s32 %s173, 1
      %p177 = scmp.eq.s32.totalorder %s34, 1
      %p178 = scmp.ne.s32.totalorder %s173, %s175
      %p179 = scmp.eq.s32.totalorder %s34, 0
      %p180 = por %p178, %p179
      %p181 = scmp.ne.s32.totalorder %s173, %s175
      %p182 = scmp.eq.s32.totalorder %s39, 1
      %p183 = por %p181, %p182
      %p184 = scmp.ne.s32.totalorder %s175, %s176
      %p185 = scmp.eq.s32.totalorder %s39, 0
      %p186 = por %p184, %p185
      %p187 = scmp.ne.s32.totalorder %s175, %s176
      %p188 = scmp.eq.s32.totalorder %s40, 1
      %p189 = por %p187, %p188
      %p191 = scmp.ne.s32.totalorder %s176, %s190
      %p192 = scmp.eq.s32.totalorder %s40, 0
      %p193 = por %p191, %p192
      %s195 = sadd.s32 %s194, 1
      %p198 = scmp.eq.s32.totalorder %s34, 1
      %p199 = scmp.ne.s32.totalorder %s194, %s196
      %p200 = scmp.eq.s32.totalorder %s34, 0
      %p201 = por %p199, %p200
      %p202 = scmp.ne.s32.totalorder %s194, %s196
      %p203 = scmp.eq.s32.totalorder %s39, 1
      %p204 = por %p202, %p203
      %p205 = scmp.ne.s32.totalorder %s196, %s197
      %p206 = scmp.eq.s32.totalorder %s39, 0
      %p207 = por %p205, %p206
      %p208 = scmp.ne.s32.totalorder %s196, %s197
      %p209 = scmp.eq.s32.totalorder %s40, 1
      %p210 = por %p208, %p209
      %p212 = scmp.ne.s32.totalorder %s197, %s211
      %p213 = scmp.eq.s32.totalorder %s40, 0
      %p214 = por %p212, %p213
      %s216 = sadd.s32 %s215, 1
      %p219 = scmp.eq.s32.totalorder %s34, 1
      %p220 = scmp.ne.s32.totalorder %s215, %s217
      %p221 = scmp.eq.s32.totalorder %s34, 0
      %p222 = por %p220, %p221
      %p223 = scmp.ne.s32.totalorder %s215, %s217
      %p224 = scmp.eq.s32.totalorder %s39, 1
      %p225 = por %p223, %p224
      %p226 = scmp.ne.s32.totalorder %s217, %s218
      %p227 = scmp.eq.s32.totalorder %s39, 0
      %p228 = por %p226, %p227
      %p229 = scmp.ne.s32.totalorder %s217, %s218
      %p230 = scmp.eq.s32.totalorder %s40, 1
      %p231 = por %p229, %p230
      %p233 = scmp.ne.s32.totalorder %s218, %s232
      %p234 = scmp.eq.s32.totalorder %s40, 0
      %p235 = por %p233, %p234
      %s237 = sadd.s32 %s236, 1
      %p240 = scmp.eq.s32.totalorder %s34, 1
      %p241 = scmp.ne.s32.totalorder %s236, %s238
      %p242 = scmp.eq.s32.totalorder %s34, 0
      %p243 = por %p241, %p242
      %p244 = scmp.ne.s32.totalorder %s236, %s238
      %p245 = scmp.eq.s32.totalorder %s39, 1
      %p246 = por %p244, %p245
      %p247 = scmp.ne.s32.totalorder %s238, %s239
      %p248 = scmp.eq.s32.totalorder %s39, 0
      %p249 = por %p247, %p248
      %p250 = scmp.ne.s32.totalorder %s238, %s239
      %p251 = scmp.eq.s32.totalorder %s40, 1
      %p252 = por %p250, %p251
      %p254 = scmp.ne.s32.totalorder %s239, %s253
      %p255 = scmp.eq.s32.totalorder %s40, 0
      %p256 = por %p254, %p255
      %s258 = sadd.s32 %s257, 1
      %p261 = scmp.eq.s32.totalorder %s34, 1
      %p262 = scmp.ne.s32.totalorder %s257, %s259
      %p263 = scmp.eq.s32.totalorder %s34, 0
      %p264 = por %p262, %p263
      %p265 = scmp.ne.s32.totalorder %s257, %s259
      %p266 = scmp.eq.s32.totalorder %s39, 1
      %p267 = por %p265, %p266
      %p268 = scmp.ne.s32.totalorder %s259, %s260
      %p269 = scmp.eq.s32.totalorder %s39, 0
      %p270 = por %p268, %p269
      %p271 = scmp.ne.s32.totalorder %s259, %s260
      %p272 = scmp.eq.s32.totalorder %s40, 1
      %p273 = por %p271, %p272
      %p275 = scmp.ne.s32.totalorder %s260, %s274
      %p276 = scmp.eq.s32.totalorder %s40, 0
      %p277 = por %p275, %p276
      %s279 = sadd.s32 %s278, 1
      %p282 = scmp.eq.s32.totalorder %s34, 1
      %p283 = scmp.ne.s32.totalorder %s278, %s280
      %p284 = scmp.eq.s32.totalorder %s34, 0
      %p285 = por %p283, %p284
      %p286 = scmp.ne.s32.totalorder %s278, %s280
      %p287 = scmp.eq.s32.totalorder %s39, 1
      %p288 = por %p286, %p287
      %p289 = scmp.ne.s32.totalorder %s280, %s281
      %p290 = scmp.eq.s32.totalorder %s39, 0
      %p291 = por %p289, %p290
      %p292 = scmp.ne.s32.totalorder %s280, %s281
      %p293 = scmp.eq.s32.totalorder %s40, 1
      %p294 = por %p292, %p293
      %p296 = scmp.ne.s32.totalorder %s281, %s295
      %p297 = scmp.eq.s32.totalorder %s40, 0
      %p298 = por %p296, %p297
      %s300 = sadd.s32 %s299, 1
      %p303 = scmp.eq.s32.totalorder %s34, 1
      %p304 = scmp.ne.s32.totalorder %s299, %s301
      %p305 = scmp.eq.s32.totalorder %s34, 0
      %p306 = por %p304, %p305
      %p307 = scmp.ne.s32.totalorder %s299, %s301
      %p308 = scmp.eq.s32.totalorder %s39, 1
      %p309 = por %p307, %p308
      %p310 = scmp.ne.s32.totalorder %s301, %s302
      %p311 = scmp.eq.s32.totalorder %s39, 0
      %p312 = por %p310, %p311
      %p313 = scmp.ne.s32.totalorder %s301, %s302
      %p314 = scmp.eq.s32.totalorder %s40, 1
      %p315 = por %p313, %p314
      %p317 = scmp.ne.s32.totalorder %s302, %s316
      %p318 = scmp.eq.s32.totalorder %s40, 0
      %p319 = por %p317, %p318
      %s321 = sadd.s32 %s320, 1
      %p324 = scmp.eq.s32.totalorder %s34, 1
      %p325 = scmp.ne.s32.totalorder %s320, %s322
      %p326 = scmp.eq.s32.totalorder %s34, 0
      %p327 = por %p325, %p326
      %p328 = scmp.ne.s32.totalorder %s320, %s322
      %p329 = scmp.eq.s32.totalorder %s39, 1
      %p330 = por %p328, %p329
      %p331 = scmp.ne.s32.totalorder %s322, %s323
      %p332 = scmp.eq.s32.totalorder %s39, 0
      %p333 = por %p331, %p332
      %p334 = scmp.ne.s32.totalorder %s322, %s323
      %p335 = scmp.eq.s32.totalorder %s40, 1
      %p336 = por %p334, %p335
      %p338 = scmp.ne.s32.totalorder %s323, %s337
      %p339 = scmp.eq.s32.totalorder %s40, 0
      %p340 = por %p338, %p339
      %s342 = sadd.s32 %s341, 1
      %p345 = scmp.eq.s32.totalorder %s34, 1
      %p346 = scmp.ne.s32.totalorder %s341, %s343
      %p347 = scmp.eq.s32.totalorder %s34, 0
      %p348 = por %p346, %p347
      %p349 = scmp.ne.s32.totalorder %s341, %s343
      %p350 = scmp.eq.s32.totalorder %s39, 1
      %p351 = por %p349, %p350
      %p352 = scmp.ne.s32.totalorder %s343, %s344
      %p353 = scmp.eq.s32.totalorder %s39, 0
      %p354 = por %p352, %p353
      %p355 = scmp.ne.s32.totalorder %s343, %s344
      %p356 = scmp.eq.s32.totalorder %s40, 1
      %p357 = por %p355, %p356
      %p359 = scmp.ne.s32.totalorder %s344, %s358
      %p360 = scmp.eq.s32.totalorder %s40, 0
      %p361 = por %p359, %p360
      %s362 = ssub.s32 %s34, %s41
      %p363 = scmp.eq.s32.totalorder %s362, 0
      %s365 = sadd.s32 %s364, 1
      %s366 = scalar_select %p363, %s364, %s365
      %p369 = pneg %p363
      %p370 = scmp.eq.s32.totalorder %s34, 1
      %p371 = por %p369, %p370
      %p372 = scmp.ne.s32.totalorder %s364, %s367
      %p373 = scmp.eq.s32.totalorder %s34, 0
      %p374 = por %p372, %p373
      %p375 = scmp.ne.s32.totalorder %s364, %s367
      %p376 = scmp.eq.s32.totalorder %s39, 1
      %p377 = por %p375, %p376
      %p378 = scmp.ne.s32.totalorder %s367, %s368
      %p379 = scmp.eq.s32.totalorder %s39, 0
      %p380 = por %p378, %p379
      %p381 = scmp.ne.s32.totalorder %s367, %s368
      %p382 = scmp.eq.s32.totalorder %s40, 1
      %p383 = por %p381, %p382
      %p385 = scmp.ne.s32.totalorder %s368, %s384
      %p386 = scmp.eq.s32.totalorder %s40, 0
      %p387 = por %p385, %p386
      %s388 = ssub.s32 %s34, %s41
      %p389 = scmp.eq.s32.totalorder %s388, 0
      %s391 = sadd.s32 %s390, 1
      %s392 = scalar_select %p389, %s390, %s391
      %p395 = pneg %p389
      %p396 = scmp.eq.s32.totalorder %s34, 1
      %p397 = por %p395, %p396
      %p398 = scmp.ne.s32.totalorder %s390, %s393
      %p399 = scmp.eq.s32.totalorder %s34, 0
      %p400 = por %p398, %p399
      %p401 = scmp.ne.s32.totalorder %s390, %s393
      %p402 = scmp.eq.s32.totalorder %s39, 1
      %p403 = por %p401, %p402
      %p404 = scmp.ne.s32.totalorder %s393, %s394
      %p405 = scmp.eq.s32.totalorder %s39, 0
      %p406 = por %p404, %p405
      %p407 = scmp.ne.s32.totalorder %s393, %s394
      %p408 = scmp.eq.s32.totalorder %s40, 1
      %p409 = por %p407, %p408
      %p411 = scmp.ne.s32.totalorder %s394, %s410
      %p412 = scmp.eq.s32.totalorder %s40, 0
      %p413 = por %p411, %p412
      %s414 = ssub.s32 %s34, %s41
      %p415 = scmp.eq.s32.totalorder %s414, 0
      %s417 = sadd.s32 %s416, 1
      %s418 = scalar_select %p415, %s416, %s417
      %p421 = pneg %p415
      %p422 = scmp.eq.s32.totalorder %s34, 1
      %p423 = por %p421, %p422
      %p424 = scmp.ne.s32.totalorder %s416, %s419
      %p425 = scmp.eq.s32.totalorder %s34, 0
      %p426 = por %p424, %p425
      %p427 = scmp.ne.s32.totalorder %s416, %s419
      %p428 = scmp.eq.s32.totalorder %s39, 1
      %p429 = por %p427, %p428
      %p430 = scmp.ne.s32.totalorder %s419, %s420
      %p431 = scmp.eq.s32.totalorder %s39, 0
      %p432 = por %p430, %p431
      %p433 = scmp.ne.s32.totalorder %s419, %s420
      %p434 = scmp.eq.s32.totalorder %s40, 1
      %p435 = por %p433, %p434
      %p437 = scmp.ne.s32.totalorder %s420, %s436
      %p438 = scmp.eq.s32.totalorder %s40, 0
      %p439 = por %p437, %p438
      %p440 = scmp.le.s32.totalorder 1, %s34
      %p441 = scmp.lt.s32.totalorder %s34, 3
      %p442 = pnand %p440, %p441
      %p443 = pneg %p442
      // Predicated region
      $region9: #{tpu_custom_call.1} parent=5 // pred_check
        _
      $region10: #{tpu_custom_call.1} parent=5 // pred_check_branch
        %445 = sbr.rel (%p442) target = $region12
      $region11: #{tpu_custom_call.1} parent=5 // pred_region
        %s446 = ssub.s32 %s34, 1
        // Predicated region
        $region13: #{tpu_custom_call.1} parent=11 // pred_check
          %p447 = pneg %p81
        $region14: #{tpu_custom_call.1} parent=11 // pred_check_branch
          %449 = sbr.rel (%p447) target = $region16
        $region15: #{tpu_custom_call.1} parent=11 // pred_region
          _
        $region16: #{tpu_custom_call.1} parent=11 // pred_fallthru
          _
        // Predicated region
        $region17: #{tpu_custom_call.1} parent=11 // pred_check
          %p450 = pneg %p102
        $region18: #{tpu_custom_call.1} parent=11 // pred_check_branch
          %452 = sbr.rel (%p450) target = $region20
        $region19: #{tpu_custom_call.1} parent=11 // pred_region
          _
        $region20: #{tpu_custom_call.1} parent=11 // pred_fallthru
          _
        // Predicated region
        $region21: #{tpu_custom_call.1} parent=11 // pred_check
          %p453 = pneg %p123
        $region22: #{tpu_custom_call.1} parent=11 // pred_check_branch
          %455 = sbr.rel (%p453) target = $region24
        $region23: #{tpu_custom_call.1} parent=11 // pred_region
          _
        $region24: #{tpu_custom_call.1} parent=11 // pred_fallthru
          _
        // Predicated region
        $region25: #{tpu_custom_call.1} parent=11 // pred_check
          %p456 = pneg %p144
        $region26: #{tpu_custom_call.1} parent=11 // pred_check_branch
          %458 = sbr.rel (%p456) target = $region28
        $region27: #{tpu_custom_call.1} parent=11 // pred_region
          %s460 = ssub.s32 8192, 8192
          %461 = vsyncadd [#allocation6], %s460
          %s462 = sshll.u32 [#allocation5], 4
          %s463 = int_to_ptr.vmem [resolvable:$true] %s462
          %468 = dma.hbm_to_vmem [thread:$0]  %s4, 8192, %s463, [#allocation6], 256, 256, 16
        $region28: #{tpu_custom_call.1} parent=11 // pred_fallthru
          _
        // Predicated region
        $region29: #{tpu_custom_call.1} parent=11 // pred_check
          %p469 = pneg %p165
        $region30: #{tpu_custom_call.1} parent=11 // pred_check_branch
          %471 = sbr.rel (%p469) target = $region32
        $region31: #{tpu_custom_call.1} parent=11 // pred_region
          _
        $region32: #{tpu_custom_call.1} parent=11 // pred_fallthru
          _
        // Predicated region
        $region33: #{tpu_custom_call.1} parent=11 // pred_check
          %p472 = pneg %p186
        $region34: #{tpu_custom_call.1} parent=11 // pred_check_branch
          %474 = sbr.rel (%p472) target = $region36
        $region35: #{tpu_custom_call.1} parent=11 // pred_region
          _
        $region36: #{tpu_custom_call.1} parent=11 // pred_fallthru
          _
        // Predicated region
        $region37: #{tpu_custom_call.1} parent=11 // pred_check
          %p475 = pneg %p207
        $region38: #{tpu_custom_call.1} parent=11 // pred_check_branch
          %477 = sbr.rel (%p475) target = $region40
        $region39: #{tpu_custom_call.1} parent=11 // pred_region
          _
        $region40: #{tpu_custom_call.1} parent=11 // pred_fallthru
          _
        // Predicated region
        $region41: #{tpu_custom_call.1} parent=11 // pred_check
          %p478 = pneg %p228
        $region42: #{tpu_custom_call.1} parent=11 // pred_check_branch
          %480 = sbr.rel (%p478) target = $region44
        $region43: #{tpu_custom_call.1} parent=11 // pred_region
          _
        $region44: #{tpu_custom_call.1} parent=11 // pred_fallthru
          _
        // Predicated region
        $region45: #{tpu_custom_call.1} parent=11 // pred_check
          %p481 = pneg %p249
        $region46: #{tpu_custom_call.1} parent=11 // pred_check_branch
          %483 = sbr.rel (%p481) target = $region48
        $region47: #{tpu_custom_call.1} parent=11 // pred_region
          _
        $region48: #{tpu_custom_call.1} parent=11 // pred_fallthru
          _
        // Predicated region
        $region49: #{tpu_custom_call.1} parent=11 // pred_check
          %p484 = pneg %p270
        $region50: #{tpu_custom_call.1} parent=11 // pred_check_branch
          %486 = sbr.rel (%p484) target = $region52
        $region51: #{tpu_custom_call.1} parent=11 // pred_region
          _
        $region52: #{tpu_custom_call.1} parent=11 // pred_fallthru
          _
        // Predicated region
        $region53: #{tpu_custom_call.1} parent=11 // pred_check
          %p487 = pneg %p291
        $region54: #{tpu_custom_call.1} parent=11 // pred_check_branch
          %489 = sbr.rel (%p487) target = $region56
        $region55: #{tpu_custom_call.1} parent=11 // pred_region
          _
        $region56: #{tpu_custom_call.1} parent=11 // pred_fallthru
          _
        // Predicated region
        $region57: #{tpu_custom_call.1} parent=11 // pred_check
          %p490 = pneg %p312
        $region58: #{tpu_custom_call.1} parent=11 // pred_check_branch
          %492 = sbr.rel (%p490) target = $region60
        $region59: #{tpu_custom_call.1} parent=11 // pred_region
          %s494 = ssub.s32 1024, 1024
          %495 = vsyncadd [#allocation6], %s494
          %s496 = sshll.u32 [#allocation7], 4
          %s497 = int_to_ptr.vmem [resolvable:$true] %s496
          %502 = dma.hbm_to_vmem [thread:$0]  %s12, 1024, %s497, [#allocation6], 128, 128, 8
        $region60: #{tpu_custom_call.1} parent=11 // pred_fallthru
          _
        // Predicated region
        $region61: #{tpu_custom_call.1} parent=11 // pred_check
          %p503 = pneg %p333
        $region62: #{tpu_custom_call.1} parent=11 // pred_check_branch
          %505 = sbr.rel (%p503) target = $region64
        $region63: #{tpu_custom_call.1} parent=11 // pred_region
          _
        $region64: #{tpu_custom_call.1} parent=11 // pred_fallthru
          _
        // Predicated region
        $region65: #{tpu_custom_call.1} parent=11 // pred_check
          %p506 = pneg %p354
        $region66: #{tpu_custom_call.1} parent=11 // pred_check_branch
          %508 = sbr.rel (%p506) target = $region68
        $region67: #{tpu_custom_call.1} parent=11 // pred_region
          _
        $region68: #{tpu_custom_call.1} parent=11 // pred_fallthru
          _
      $region12: #{tpu_custom_call.1} parent=5 // pred_fallthru
        _
      %p509 = scmp.lt.s32.totalorder %s34, 2
      // Predicated region
      $region69: #{tpu_custom_call.1} parent=5 // pred_check
        %p510 = pneg %p509
      $region70: #{tpu_custom_call.1} parent=5 // pred_check_branch
        %512 = sbr.rel (%p510) target = $region72
      $region71: #{tpu_custom_call.1} parent=5 // pred_region
        // Predicated region
        $region73: #{tpu_custom_call.1} parent=71 // pred_check
          %p513 = pneg %p54
        $region74: #{tpu_custom_call.1} parent=71 // pred_check_branch
          %515 = sbr.rel (%p513) target = $region76
        $region75: #{tpu_custom_call.1} parent=71 // pred_region
          %s516 = sand.u32 %s44, 1
          %s517 = scalar_lea.sflag [#allocation3], %s516
          %s518 = sand.u32 %s44, 1
          %s519 = smul.addr %s518, 16
          %s520 = scalar_lea.vmem [#allocation2], %s519
          %s522 = ssub.s32 256, 256
          %523 = vsyncadd %s517, %s522
          %s524 = smul.addr %s34, 2
          %s525 = smul.addr %s524, 128
          %s526 = scalar_lea.hbm %s0, %s525
          %s528 = sshll.u32 %s520, 4
          %s529 = int_to_ptr.vmem [resolvable:$true] %s528
          %531 = dma.hbm_to_vmem [thread:$0]  %s526, 256, %s529, %s517
        $region76: #{tpu_custom_call.1} parent=71 // pred_fallthru
          _
      $region72: #{tpu_custom_call.1} parent=5 // pred_fallthru
        _
      %p532 = scmp.le.s32.totalorder 1, %s34
      %p533 = scmp.lt.s32.totalorder %s34, 3
      %p534 = pnand %p532, %p533
      %p535 = pneg %p534
      // Predicated region
      $region77: #{tpu_custom_call.1} parent=5 // pred_check
        _
      $region78: #{tpu_custom_call.1} parent=5 // pred_check_branch
        %537 = sbr.rel (%p534) target = $region80
      $region79: #{tpu_custom_call.1} parent=5 // pred_region
        %s538 = ssub.s32 %s34, 1
        %s539 = sand.u32 %s47, 1
        %s540 = scalar_lea.sflag [#allocation3], %s539
        %s541 = sand.u32 %s47, 1
        %s542 = smul.addr %s541, 16
        %s543 = scalar_lea.vmem [#allocation2], %s542
        // Predicated region
        $region81: #{tpu_custom_call.1} parent=79 // pred_check
          %p544 = pneg %p60
        $region82: #{tpu_custom_call.1} parent=79 // pred_check_branch
          %546 = sbr.rel (%p544) target = $region84
        $region83: #{tpu_custom_call.1} parent=79 // pred_region
          %547 = dma.done %s540, 256
        $region84: #{tpu_custom_call.1} parent=79 // pred_fallthru
          _
        // Predicated region
        $region85: #{tpu_custom_call.1} parent=79 // pred_check
          %p548 = pneg %p144
        $region86: #{tpu_custom_call.1} parent=79 // pred_check_branch
          %550 = sbr.rel (%p548) target = $region88
        $region87: #{tpu_custom_call.1} parent=79 // pred_region
          %551 = dma.done [#allocation6], 8192
        $region88: #{tpu_custom_call.1} parent=79 // pred_fallthru
          _
        // Predicated region
        $region89: #{tpu_custom_call.1} parent=79 // pred_check
          %p552 = pneg %p312
        $region90: #{tpu_custom_call.1} parent=79 // pred_check_branch
          %554 = sbr.rel (%p552) target = $region92
        $region91: #{tpu_custom_call.1} parent=79 // pred_region
          %555 = dma.done [#allocation6], 1024
        $region92: #{tpu_custom_call.1} parent=79 // pred_fallthru
          _
        %s556 = sand.u32 %s47, 1
        %s557 = scalar_lea.sflag [#allocation3], %s556
        %s558 = sand.u32 %s47, 1
        %s559 = smul.addr %s558, 16
        %s560 = scalar_lea.vmem [#allocation2], %s559
        %p561 = pneg %p60
        %p562 = pneg %p57
        %p563 = pneg %p81
        %p564 = pneg %p78
        %p565 = pneg %p102
        %p566 = pneg %p99
        %p567 = pneg %p123
        %p568 = pneg %p120
        %p569 = pneg %p144
        %p570 = pneg %p141
        %p571 = pneg %p165
        %p572 = pneg %p162
        %p573 = pneg %p186
        %p574 = pneg %p183
        %p575 = pneg %p207
        %p576 = pneg %p204
        %p577 = pneg %p228
        %p578 = pneg %p225
        %p579 = pneg %p249
        %p580 = pneg %p246
        %p581 = pneg %p270
        %p582 = pneg %p267
        %p583 = pneg %p291
        %p584 = pneg %p288
        %p585 = pneg %p312
        %p586 = pneg %p309
        %p587 = pneg %p333
        %p588 = pneg %p330
        %p589 = pneg %p354
        %p590 = pneg %p351
        %p591 = pneg %p380
        %p592 = pneg %p377
        %s593 = sand.u32 %s367, 1
        %s594 = scalar_lea.sflag [#allocation4], %s593
        %s595 = sand.u32 %s367, 1
        %s596 = smul.addr %s595, 4
        %s597 = scalar_lea.vmem [#allocation8], %s596
        %p598 = pneg %p406
        %p599 = pneg %p403
        %s600 = sand.u32 %s39, 1
        %s601 = scalar_lea.sflag [#allocation10], %s600
        %s602 = sand.u32 %s393, 1
        %s603 = smul.addr %s602, 64
        %s604 = scalar_lea.vmem [#allocation9], %s603
        %p605 = pneg %p432
        %p606 = pneg %p429
        %s607 = sand.u32 %s39, 1
        %s608 = scalar_lea.sflag [#allocation10], %s607
        %s609 = sand.u32 %s419, 1
        %s610 = smul.addr %s609, 64
        %s611 = scalar_lea.vmem [#allocation11], %s610
        %v612 = vld [vmem:[%s543] sm:$0xff]
        %v613 = vld [vmem:[%s543 + $0x8] sm:$0xff]
        %v614 = vld [vmem:[%s3] sm:$0xff]
        %v615 = vld [vmem:[%s3 + $0x8] sm:$0xff]
        %v616 = vld [vmem:[%s3 + $0x10] sm:$0xff]
        %v617 = vld [vmem:[%s3 + $0x18] sm:$0xff]
        %v618 = vld [vmem:[%s3 + $0x20] sm:$0xff]
        %v619 = vld [vmem:[%s3 + $0x28] sm:$0xff]
        %v620 = vld [vmem:[%s3 + $0x30] sm:$0xff]
        %v621 = vld [vmem:[%s3 + $0x38] sm:$0xff]
        %v622 = vld [vmem:[%s3 + $0x40] sm:$0xff]
        %v623 = vld [vmem:[%s3 + $0x48] sm:$0xff]
        %v624 = vld [vmem:[%s3 + $0x50] sm:$0xff]
        %v625 = vld [vmem:[%s3 + $0x58] sm:$0xff]
        %v626 = vld [vmem:[%s3 + $0x60] sm:$0xff]
        %v627 = vld [vmem:[%s3 + $0x68] sm:$0xff]
        %v628 = vld [vmem:[%s3 + $0x70] sm:$0xff]
        %v629 = vld [vmem:[%s3 + $0x78] sm:$0xff]
        %v630 = vld [vmem:[%s3 + $0x80] sm:$0xff]
        %v631 = vld [vmem:[%s3 + $0x88] sm:$0xff]
        %v632 = vld [vmem:[%s3 + $0x90] sm:$0xff]
        %v633 = vld [vmem:[%s3 + $0x98] sm:$0xff]
        %v634 = vld [vmem:[%s3 + $0xa0] sm:$0xff]
        %v635 = vld [vmem:[%s3 + $0xa8] sm:$0xff]
        %v636 = vld [vmem:[%s3 + $0xb0] sm:$0xff]
        %v637 = vld [vmem:[%s3 + $0xb8] sm:$0xff]
        %v638 = vld [vmem:[%s3 + $0xc0] sm:$0xff]
        %v639 = vld [vmem:[%s3 + $0xc8] sm:$0xff]
        %v640 = vld [vmem:[%s3 + $0xd0] sm:$0xff]
        %v641 = vld [vmem:[%s3 + $0xd8] sm:$0xff]
        %v642 = vld [vmem:[%s3 + $0xe0] sm:$0xff]
        %v643 = vld [vmem:[%s3 + $0xe8] sm:$0xff]
        %v644 = vld [vmem:[%s3 + $0xf0] sm:$0xff]
        %v645 = vld [vmem:[%s3 + $0xf8] sm:$0xff]
        %v648 = vrot.slane %v612, 4
        %v649 = vrot.slane %v613, 4
        %652 = vmatprep.subr.mxu0 0.0
        %653 = vmatpush1.msra.mxu0 %v614
        %654 = vmatprep.subr.mxu0 0.0
        %655 = vmatpush1.msra.mxu0 %v615
        %656 = vmatprep.subr.mxu0 0.0
        %657 = vmatpush1.msra.mxu0 %v616
        %658 = vmatprep.subr.mxu0 0.0
        %659 = vmatpush1.msra.mxu0 %v617
        %660 = vmatprep.subr.mxu0 0.0
        %661 = vmatpush1.msra.mxu0 %v618
        %662 = vmatprep.subr.mxu0 0.0
        %663 = vmatpush1.msra.mxu0 %v619
        %664 = vmatprep.subr.mxu0 0.0
        %665 = vmatpush1.msra.mxu0 %v620
        %666 = vmatprep.subr.mxu0 0.0
        %667 = vmatpush1.msra.mxu0 %v621
        %668 = vmatprep.subr.mxu0 0.0
        %669 = vmatpush1.msra.mxu0 %v622
        %670 = vmatprep.subr.mxu0 0.0
        %671 = vmatpush1.msra.mxu0 %v623
        %672 = vmatprep.subr.mxu0 0.0
        %673 = vmatpush1.msra.mxu0 %v624
        %674 = vmatprep.subr.mxu0 0.0
        %675 = vmatpush1.msra.mxu0 %v625
        %676 = vmatprep.subr.mxu0 0.0
        %677 = vmatpush1.msra.mxu0 %v626
        %678 = vmatprep.subr.mxu0 0.0
        %679 = vmatpush1.msra.mxu0 %v627
        %680 = vmatprep.subr.mxu0 0.0
        %681 = vmatpush1.msra.mxu0 %v628
        %682 = vmatprep.subr.mxu0 0.0
        %683 = vmatpush1.msra.mxu0 %v629
        %684 = vmatprep.subr.mxu0 0.0
        %685 = vmatpush1.msra.mxu0 %v630
        %686 = vmatprep.subr.mxu0 0.0
        %687 = vmatpush1.msra.mxu0 %v631
        %688 = vmatprep.subr.mxu0 0.0
        %689 = vmatpush1.msra.mxu0 %v632
        %690 = vmatprep.subr.mxu0 0.0
        %691 = vmatpush1.msra.mxu0 %v633
        %692 = vmatprep.subr.mxu0 0.0
        %693 = vmatpush1.msra.mxu0 %v634
        %694 = vmatprep.subr.mxu0 0.0
        %695 = vmatpush1.msra.mxu0 %v635
        %696 = vmatprep.subr.mxu0 0.0
        %697 = vmatpush1.msra.mxu0 %v636
        %698 = vmatprep.subr.mxu0 0.0
        %699 = vmatpush1.msra.mxu0 %v637
        %700 = vmatprep.subr.mxu0 0.0
        %701 = vmatpush1.msra.mxu0 %v638
        %702 = vmatprep.subr.mxu0 0.0
        %703 = vmatpush1.msra.mxu0 %v639
        %704 = vmatprep.subr.mxu0 0.0
        %705 = vmatpush1.msra.mxu0 %v640
        %706 = vmatprep.subr.mxu0 0.0
        %707 = vmatpush1.msra.mxu0 %v641
        %708 = vmatprep.subr.mxu0 0.0
        %709 = vmatpush1.msra.mxu0 %v642
        %710 = vmatprep.subr.mxu0 0.0
        %711 = vmatpush1.msra.mxu0 %v643
        %712 = vmatprep.subr.mxu0 0.0
        %713 = vmatpush1.msra.mxu0 %v644
        %714 = vmatprep.subr.mxu0 0.0
        %715 = vmatpush1.msra.mxu0 %v645
        %716 = vmatprep.mubr.f32.mxu0 %v649
        %717 = vmatmul.mubr.f32.gmra.mrb[0].mxu0 %v648
        %v718 = vpop.f32.mrb[0].mxu0
        %v719 = vadd.f32 0.0, %v718
        %v720 = vpop.f32.mrb[0].mxu0
        %721 = vdwg.mxu0
        %722 = vmatprep.subr.mxu0 0.0
        %723 = vmatpush1.msra.mxu0 %v614
        %724 = vmatprep.subr.mxu0 0.0
        %725 = vmatpush1.msra.mxu0 %v615
        %726 = vmatprep.subr.mxu0 0.0
        %727 = vmatpush1.msra.mxu0 %v616
        %728 = vmatprep.subr.mxu0 0.0
        %729 = vmatpush1.msra.mxu0 %v617
        %730 = vmatprep.subr.mxu0 0.0
        %731 = vmatpush1.msra.mxu0 %v618
        %732 = vmatprep.subr.mxu0 0.0
        %733 = vmatpush1.msra.mxu0 %v619
        %734 = vmatprep.subr.mxu0 0.0
        %735 = vmatpush1.msra.mxu0 %v620
        %736 = vmatprep.subr.mxu0 0.0
        %737 = vmatpush1.msra.mxu0 %v621
        %738 = vmatprep.subr.mxu0 0.0
        %739 = vmatpush1.msra.mxu0 %v622
        %740 = vmatprep.subr.mxu0 0.0
        %741 = vmatpush1.msra.mxu0 %v623
        %742 = vmatprep.subr.mxu0 0.0
        %743 = vmatpush1.msra.mxu0 %v624
        %744 = vmatprep.subr.mxu0 0.0
        %745 = vmatpush1.msra.mxu0 %v625
        %746 = vmatprep.subr.mxu0 0.0
        %747 = vmatpush1.msra.mxu0 %v626
        %748 = vmatprep.subr.mxu0 0.0
        %749 = vmatpush1.msra.mxu0 %v627
        %750 = vmatprep.subr.mxu0 0.0
        %751 = vmatpush1.msra.mxu0 %v628
        %752 = vmatprep.subr.mxu0 0.0
        %753 = vmatpush1.msra.mxu0 %v629
        %754 = vmatprep.subr.mxu0 0.0
        %755 = vmatpush1.msra.mxu0 %v630
        %756 = vmatprep.subr.mxu0 0.0
        %757 = vmatpush1.msra.mxu0 %v631
        %758 = vmatprep.subr.mxu0 0.0
        %759 = vmatpush1.msra.mxu0 %v632
        %760 = vmatprep.subr.mxu0 0.0
        %761 = vmatpush1.msra.mxu0 %v633
        %762 = vmatprep.subr.mxu0 0.0
        %763 = vmatpush1.msra.mxu0 %v634
        %764 = vmatprep.subr.mxu0 0.0
        %765 = vmatpush1.msra.mxu0 %v635
        %766 = vmatprep.subr.mxu0 0.0
        %767 = vmatpush1.msra.mxu0 %v636
        %768 = vmatprep.subr.mxu0 0.0
        %769 = vmatpush1.msra.mxu0 %v637
        %770 = vmatprep.subr.mxu0 0.0
        %771 = vmatpush1.msra.mxu0 %v638
        %772 = vmatprep.subr.mxu0 0.0
        %773 = vmatpush1.msra.mxu0 %v639
        %774 = vmatprep.subr.mxu0 0.0
        %775 = vmatpush1.msra.mxu0 %v640
        %776 = vmatprep.subr.mxu0 0.0
        %777 = vmatpush1.msra.mxu0 %v641
        %778 = vmatprep.subr.mxu0 0.0
        %779 = vmatpush1.msra.mxu0 %v642
        %780 = vmatprep.subr.mxu0 0.0
        %781 = vmatpush1.msra.mxu0 %v643
        %782 = vmatprep.subr.mxu0 0.0
        %783 = vmatpush1.msra.mxu0 %v644
        %784 = vmatprep.subr.mxu0 0.0
        %785 = vmatpush1.msra.mxu0 %v645
        %786 = vmatprep.mubr.f32.mxu0 %v613
        %787 = vmatmul.mubr.f32.gmra.mrb[0].mxu0 %v612
        %v788 = vpop.f32.mrb[0].mxu0
        %v789 = vadd.f32 0.0, %v788
        %v790 = vpop.f32.mrb[0].mxu0
        %791 = vdwg.mxu0
        %s792 = scalar_lea.vmem %s3, 256
        %v793 = vld [vmem:[%s792] sm:$0xff]
        %v794 = vld [vmem:[%s792 + $0x8] sm:$0xff]
        %v795 = vld [vmem:[%s792 + $0x10] sm:$0xff]
        %v796 = vld [vmem:[%s792 + $0x18] sm:$0xff]
        %v797 = vld [vmem:[%s792 + $0x20] sm:$0xff]
        %v798 = vld [vmem:[%s792 + $0x28] sm:$0xff]
        %v799 = vld [vmem:[%s792 + $0x30] sm:$0xff]
        %v800 = vld [vmem:[%s792 + $0x38] sm:$0xff]
        %v801 = vld [vmem:[%s792 + $0x40] sm:$0xff]
        %v802 = vld [vmem:[%s792 + $0x48] sm:$0xff]
        %v803 = vld [vmem:[%s792 + $0x50] sm:$0xff]
        %v804 = vld [vmem:[%s792 + $0x58] sm:$0xff]
        %v805 = vld [vmem:[%s792 + $0x60] sm:$0xff]
        %v806 = vld [vmem:[%s792 + $0x68] sm:$0xff]
        %v807 = vld [vmem:[%s792 + $0x70] sm:$0xff]
        %v808 = vld [vmem:[%s792 + $0x78] sm:$0xff]
        %v809 = vld [vmem:[%s792 + $0x80] sm:$0xff]
        %v810 = vld [vmem:[%s792 + $0x88] sm:$0xff]
        %v811 = vld [vmem:[%s792 + $0x90] sm:$0xff]
        %v812 = vld [vmem:[%s792 + $0x98] sm:$0xff]
        %v813 = vld [vmem:[%s792 + $0xa0] sm:$0xff]
        %v814 = vld [vmem:[%s792 + $0xa8] sm:$0xff]
        %v815 = vld [vmem:[%s792 + $0xb0] sm:$0xff]
        %v816 = vld [vmem:[%s792 + $0xb8] sm:$0xff]
        %v817 = vld [vmem:[%s792 + $0xc0] sm:$0xff]
        %v818 = vld [vmem:[%s792 + $0xc8] sm:$0xff]
        %v819 = vld [vmem:[%s792 + $0xd0] sm:$0xff]
        %v820 = vld [vmem:[%s792 + $0xd8] sm:$0xff]
        %v821 = vld [vmem:[%s792 + $0xe0] sm:$0xff]
        %v822 = vld [vmem:[%s792 + $0xe8] sm:$0xff]
        %v823 = vld [vmem:[%s792 + $0xf0] sm:$0xff]
        %v824 = vld [vmem:[%s792 + $0xf8] sm:$0xff]
        %825 = vmatprep.subr.mxu0 0.0
        %826 = vmatpush1.msra.mxu0 %v793
        %827 = vmatprep.subr.mxu0 0.0
        %828 = vmatpush1.msra.mxu0 %v794
        %829 = vmatprep.subr.mxu0 0.0
        %830 = vmatpush1.msra.mxu0 %v795
        %831 = vmatprep.subr.mxu0 0.0
        %832 = vmatpush1.msra.mxu0 %v796
        %833 = vmatprep.subr.mxu0 0.0
        %834 = vmatpush1.msra.mxu0 %v797
        %835 = vmatprep.subr.mxu0 0.0
        %836 = vmatpush1.msra.mxu0 %v798
        %837 = vmatprep.subr.mxu0 0.0
        %838 = vmatpush1.msra.mxu0 %v799
        %839 = vmatprep.subr.mxu0 0.0
        %840 = vmatpush1.msra.mxu0 %v800
        %841 = vmatprep.subr.mxu0 0.0
        %842 = vmatpush1.msra.mxu0 %v801
        %843 = vmatprep.subr.mxu0 0.0
        %844 = vmatpush1.msra.mxu0 %v802
        %845 = vmatprep.subr.mxu0 0.0
        %846 = vmatpush1.msra.mxu0 %v803
        %847 = vmatprep.subr.mxu0 0.0
        %848 = vmatpush1.msra.mxu0 %v804
        %849 = vmatprep.subr.mxu0 0.0
        %850 = vmatpush1.msra.mxu0 %v805
        %851 = vmatprep.subr.mxu0 0.0
        %852 = vmatpush1.msra.mxu0 %v806
        %853 = vmatprep.subr.mxu0 0.0
        %854 = vmatpush1.msra.mxu0 %v807
        %855 = vmatprep.subr.mxu0 0.0
        %856 = vmatpush1.msra.mxu0 %v808
        %857 = vmatprep.subr.mxu0 0.0
        %858 = vmatpush1.msra.mxu0 %v809
        %859 = vmatprep.subr.mxu0 0.0
        %860 = vmatpush1.msra.mxu0 %v810
        %861 = vmatprep.subr.mxu0 0.0
        %862 = vmatpush1.msra.mxu0 %v811
        %863 = vmatprep.subr.mxu0 0.0
        %864 = vmatpush1.msra.mxu0 %v812
        %865 = vmatprep.subr.mxu0 0.0
        %866 = vmatpush1.msra.mxu0 %v813
        %867 = vmatprep.subr.mxu0 0.0
        %868 = vmatpush1.msra.mxu0 %v814
        %869 = vmatprep.subr.mxu0 0.0
        %870 = vmatpush1.msra.mxu0 %v815
        %871 = vmatprep.subr.mxu0 0.0
        %872 = vmatpush1.msra.mxu0 %v816
        %873 = vmatprep.subr.mxu0 0.0
        %874 = vmatpush1.msra.mxu0 %v817
        %875 = vmatprep.subr.mxu0 0.0
        %876 = vmatpush1.msra.mxu0 %v818
        %877 = vmatprep.subr.mxu0 0.0
        %878 = vmatpush1.msra.mxu0 %v819
        %879 = vmatprep.subr.mxu0 0.0
        %880 = vmatpush1.msra.mxu0 %v820
        %881 = vmatprep.subr.mxu0 0.0
        %882 = vmatpush1.msra.mxu0 %v821
        %883 = vmatprep.subr.mxu0 0.0
        %884 = vmatpush1.msra.mxu0 %v822
        %885 = vmatprep.subr.mxu0 0.0
        %886 = vmatpush1.msra.mxu0 %v823
        %887 = vmatprep.subr.mxu0 0.0
        %888 = vmatpush1.msra.mxu0 %v824
        %889 = vmatprep.mubr.f32.mxu0 %v649
        %890 = vmatmul.mubr.f32.gmra.mrb[0].mxu0 %v648
        %v891 = vpop.f32.mrb[0].mxu0
        %v892 = vadd.f32 0.0, %v891
        %v893 = vpop.f32.mrb[0].mxu0
        %894 = vdwg.mxu0
        %895 = vmatprep.subr.mxu0 0.0
        %896 = vmatpush1.msra.mxu0 %v793
        %897 = vmatprep.subr.mxu0 0.0
        %898 = vmatpush1.msra.mxu0 %v794
        %899 = vmatprep.subr.mxu0 0.0
        %900 = vmatpush1.msra.mxu0 %v795
        %901 = vmatprep.subr.mxu0 0.0
        %902 = vmatpush1.msra.mxu0 %v796
        %903 = vmatprep.subr.mxu0 0.0
        %904 = vmatpush1.msra.mxu0 %v797
        %905 = vmatprep.subr.mxu0 0.0
        %906 = vmatpush1.msra.mxu0 %v798
        %907 = vmatprep.subr.mxu0 0.0
        %908 = vmatpush1.msra.mxu0 %v799
        %909 = vmatprep.subr.mxu0 0.0
        %910 = vmatpush1.msra.mxu0 %v800
        %911 = vmatprep.subr.mxu0 0.0
        %912 = vmatpush1.msra.mxu0 %v801
        %913 = vmatprep.subr.mxu0 0.0
        %914 = vmatpush1.msra.mxu0 %v802
        %915 = vmatprep.subr.mxu0 0.0
        %916 = vmatpush1.msra.mxu0 %v803
        %917 = vmatprep.subr.mxu0 0.0
        %918 = vmatpush1.msra.mxu0 %v804
        %919 = vmatprep.subr.mxu0 0.0
        %920 = vmatpush1.msra.mxu0 %v805
        %921 = vmatprep.subr.mxu0 0.0
        %922 = vmatpush1.msra.mxu0 %v806
        %923 = vmatprep.subr.mxu0 0.0
        %924 = vmatpush1.msra.mxu0 %v807
        %925 = vmatprep.subr.mxu0 0.0
        %926 = vmatpush1.msra.mxu0 %v808
        %927 = vmatprep.subr.mxu0 0.0
        %928 = vmatpush1.msra.mxu0 %v809
        %929 = vmatprep.subr.mxu0 0.0
        %930 = vmatpush1.msra.mxu0 %v810
        %931 = vmatprep.subr.mxu0 0.0
        %932 = vmatpush1.msra.mxu0 %v811
        %933 = vmatprep.subr.mxu0 0.0
        %934 = vmatpush1.msra.mxu0 %v812
        %935 = vmatprep.subr.mxu0 0.0
        %936 = vmatpush1.msra.mxu0 %v813
        %937 = vmatprep.subr.mxu0 0.0
        %938 = vmatpush1.msra.mxu0 %v814
        %939 = vmatprep.subr.mxu0 0.0
        %940 = vmatpush1.msra.mxu0 %v815
        %941 = vmatprep.subr.mxu0 0.0
        %942 = vmatpush1.msra.mxu0 %v816
        %943 = vmatprep.subr.mxu0 0.0
        %944 = vmatpush1.msra.mxu0 %v817
        %945 = vmatprep.subr.mxu0 0.0
        %946 = vmatpush1.msra.mxu0 %v818
        %947 = vmatprep.subr.mxu0 0.0
        %948 = vmatpush1.msra.mxu0 %v819
        %949 = vmatprep.subr.mxu0 0.0
        %950 = vmatpush1.msra.mxu0 %v820
        %951 = vmatprep.subr.mxu0 0.0
        %952 = vmatpush1.msra.mxu0 %v821
        %953 = vmatprep.subr.mxu0 0.0
        %954 = vmatpush1.msra.mxu0 %v822
        %955 = vmatprep.subr.mxu0 0.0
        %956 = vmatpush1.msra.mxu0 %v823
        %957 = vmatprep.subr.mxu0 0.0
        %958 = vmatpush1.msra.mxu0 %v824
        %959 = vmatprep.mubr.f32.mxu0 %v613
        %960 = vmatmul.mubr.f32.gmra.mrb[0].mxu0 %v612
        %v961 = vpop.f32.mrb[0].mxu0
        %v962 = vadd.f32 0.0, %v961
        %v963 = vpop.f32.mrb[0].mxu0
        %964 = vdwg.mxu0
        %966 = vrot.lane.b32.xlu0 %v892, 1
        %v967 = vpop.permute.xlu0 %966
        %vm969 = vcmask 7168
        %v970 = vsel %vm969, 0.0, %v967
        %v971 = vld [vmem:[%s1] sm:$0xff]
        %s972 = scalar_lea.vmem %s1, 8
        %v973 = vld [vmem:[%s972] sm:$0xff]
        %vm974 = vcmask 31744
        %v976 = vsel %vm974, %v973, 0
        %vm978 = vcmask 1043456
        %v980 = vsel %vm978, %v719, 0
        %982 = vmatprep.subr.mxu0 0.0
        %983 = vmatpush1.msra.mxu0 %v980
        %984 = vmatprep.subr.mxu0 0.0
        %985 = vmatpush1.msra.mxu0 0.0
        %986 = vmatprep.subr.mxu0 0.0
        %987 = vmatpush1.msra.mxu0 0.0
        %988 = vmatprep.subr.mxu0 0.0
        %989 = vmatpush1.msra.mxu0 0.0
        %990 = vmatprep.subr.mxu0 0.0
        %991 = vmatpush1.msra.mxu0 0.0
        %992 = vmatprep.subr.mxu0 0.0
        %993 = vmatpush1.msra.mxu0 0.0
        %994 = vmatprep.subr.mxu0 0.0
        %995 = vmatpush1.msra.mxu0 0.0
        %996 = vmatprep.subr.mxu0 0.0
        %997 = vmatpush1.msra.mxu0 0.0
        %998 = vmatprep.subr.mxu0 0.0
        %999 = vmatpush1.msra.mxu0 0.0
        %1000 = vmatprep.subr.mxu0 0.0
        %1001 = vmatpush1.msra.mxu0 0.0
        %1002 = vmatprep.subr.mxu0 0.0
        %1003 = vmatpush1.msra.mxu0 0.0
        %1004 = vmatprep.subr.mxu0 0.0
        %1005 = vmatpush1.msra.mxu0 0.0
        %1006 = vmatprep.subr.mxu0 0.0
        %1007 = vmatpush1.msra.mxu0 0.0
        %1008 = vmatprep.subr.mxu0 0.0
        %1009 = vmatpush1.msra.mxu0 0.0
        %1010 = vmatprep.subr.mxu0 0.0
        %1011 = vmatpush1.msra.mxu0 0.0
        %1012 = vmatprep.subr.mxu0 0.0
        %1013 = vmatpush1.msra.mxu0 0.0
        %1014 = vmatprep.subr.mxu0 0.0
        %1015 = vmatpush1.msra.mxu0 0.0
        %1016 = vmatprep.subr.mxu0 0.0
        %1017 = vmatpush1.msra.mxu0 0.0
        %1018 = vmatprep.subr.mxu0 0.0
        %1019 = vmatpush1.msra.mxu0 0.0
        %1020 = vmatprep.subr.mxu0 0.0
        %1021 = vmatpush1.msra.mxu0 0.0
        %1022 = vmatprep.subr.mxu0 0.0
        %1023 = vmatpush1.msra.mxu0 0.0
        %1024 = vmatprep.subr.mxu0 0.0
        %1025 = vmatpush1.msra.mxu0 0.0
        %1026 = vmatprep.subr.mxu0 0.0
        %1027 = vmatpush1.msra.mxu0 0.0
        %1028 = vmatprep.subr.mxu0 0.0
        %1029 = vmatpush1.msra.mxu0 0.0
        %1030 = vmatprep.subr.mxu0 0.0
        %1031 = vmatpush1.msra.mxu0 0.0
        %1032 = vmatprep.subr.mxu0 0.0
        %1033 = vmatpush1.msra.mxu0 0.0
        %1034 = vmatprep.subr.mxu0 0.0
        %1035 = vmatpush1.msra.mxu0 0.0
        %1036 = vmatprep.subr.mxu0 0.0
        %1037 = vmatpush1.msra.mxu0 0.0
        %1038 = vmatprep.subr.mxu0 0.0
        %1039 = vmatpush1.msra.mxu0 0.0
        %1040 = vmatprep.subr.mxu0 0.0
        %1041 = vmatpush1.msra.mxu0 0.0
        %1042 = vmatprep.subr.mxu0 0.0
        %1043 = vmatpush1.msra.mxu0 0.0
        %1044 = vmatprep.subr.mxu0 0.0
        %1045 = vmatpush1.msra.mxu0 0.0
        %1046 = vmatprep.mubr.f32.mxu0 0.0
        %1047 = vmatmul.mubr.f32.gmra.mrb[0].mxu0 %v976
        %v1048 = vpop.f32.mrb[0].mxu0
        %v1049 = vadd.f32 0.0, %v1048
        %v1050 = vpop.f32.mrb[0].mxu0
        %1051 = vdwg.mxu0
        %v1053 = vsel %vm974, %v971, 0
        %v1056 = vsel %vm978, %v970, 0
        %1058 = vmatprep.subr.mxu0 0.0
        %1059 = vmatpush1.msra.mxu0 %v1056
        %1060 = vmatprep.subr.mxu0 0.0
        %1061 = vmatpush1.msra.mxu0 0.0
        %1062 = vmatprep.subr.mxu0 0.0
        %1063 = vmatpush1.msra.mxu0 0.0
        %1064 = vmatprep.subr.mxu0 0.0
        %1065 = vmatpush1.msra.mxu0 0.0
        %1066 = vmatprep.subr.mxu0 0.0
        %1067 = vmatpush1.msra.mxu0 0.0
        %1068 = vmatprep.subr.mxu0 0.0
        %1069 = vmatpush1.msra.mxu0 0.0
        %1070 = vmatprep.subr.mxu0 0.0
        %1071 = vmatpush1.msra.mxu0 0.0
        %1072 = vmatprep.subr.mxu0 0.0
        %1073 = vmatpush1.msra.mxu0 0.0
        %1074 = vmatprep.subr.mxu0 0.0
        %1075 = vmatpush1.msra.mxu0 0.0
        %1076 = vmatprep.subr.mxu0 0.0
        %1077 = vmatpush1.msra.mxu0 0.0
        %1078 = vmatprep.subr.mxu0 0.0
        %1079 = vmatpush1.msra.mxu0 0.0
        %1080 = vmatprep.subr.mxu0 0.0
        %1081 = vmatpush1.msra.mxu0 0.0
        %1082 = vmatprep.subr.mxu0 0.0
        %1083 = vmatpush1.msra.mxu0 0.0
        %1084 = vmatprep.subr.mxu0 0.0
        %1085 = vmatpush1.msra.mxu0 0.0
        %1086 = vmatprep.subr.mxu0 0.0
        %1087 = vmatpush1.msra.mxu0 0.0
        %1088 = vmatprep.subr.mxu0 0.0
        %1089 = vmatpush1.msra.mxu0 0.0
        %1090 = vmatprep.subr.mxu0 0.0
        %1091 = vmatpush1.msra.mxu0 0.0
        %1092 = vmatprep.subr.mxu0 0.0
        %1093 = vmatpush1.msra.mxu0 0.0
        %1094 = vmatprep.subr.mxu0 0.0
        %1095 = vmatpush1.msra.mxu0 0.0
        %1096 = vmatprep.subr.mxu0 0.0
        %1097 = vmatpush1.msra.mxu0 0.0
        %1098 = vmatprep.subr.mxu0 0.0
        %1099 = vmatpush1.msra.mxu0 0.0
        %1100 = vmatprep.subr.mxu0 0.0
        %1101 = vmatpush1.msra.mxu0 0.0
        %1102 = vmatprep.subr.mxu0 0.0
        %1103 = vmatpush1.msra.mxu0 0.0
        %1104 = vmatprep.subr.mxu0 0.0
        %1105 = vmatpush1.msra.mxu0 0.0
        %1106 = vmatprep.subr.mxu0 0.0
        %1107 = vmatpush1.msra.mxu0 0.0
        %1108 = vmatprep.subr.mxu0 0.0
        %1109 = vmatpush1.msra.mxu0 0.0
        %1110 = vmatprep.subr.mxu0 0.0
        %1111 = vmatpush1.msra.mxu0 0.0
        %1112 = vmatprep.subr.mxu0 0.0
        %1113 = vmatpush1.msra.mxu0 0.0
        %1114 = vmatprep.subr.mxu0 0.0
        %1115 = vmatpush1.msra.mxu0 0.0
        %1116 = vmatprep.subr.mxu0 0.0
        %1117 = vmatpush1.msra.mxu0 0.0
        %1118 = vmatprep.subr.mxu0 0.0
        %1119 = vmatpush1.msra.mxu0 0.0
        %1120 = vmatprep.subr.mxu0 0.0
        %1121 = vmatpush1.msra.mxu0 0.0
        %1122 = vmatprep.mubr.f32.mxu0 0.0
        %1123 = vmatmul.mubr.f32.gmra.mrb[0].mxu0 %v1053
        %v1124 = vpop.f32.mrb[0].mxu0
        %v1125 = vadd.f32 %v1049, %v1124
        %v1126 = vpop.f32.mrb[0].mxu0
        %1127 = vdwg.mxu0
        %s1128 = scalar_lea.vmem %s1, 16
        %v1129 = vld [vmem:[%s1128] sm:$0xff]
        %v1131 = vsel %vm974, %v1129, 0
        %v1133 = vsel %vm978, %v892, 0
        %1135 = vmatprep.subr.mxu0 0.0
        %1136 = vmatpush1.msra.mxu0 %v1133
        %1137 = vmatprep.subr.mxu0 0.0
        %1138 = vmatpush1.msra.mxu0 0.0
        %1139 = vmatprep.subr.mxu0 0.0
        %1140 = vmatpush1.msra.mxu0 0.0
        %1141 = vmatprep.subr.mxu0 0.0
        %1142 = vmatpush1.msra.mxu0 0.0
        %1143 = vmatprep.subr.mxu0 0.0
        %1144 = vmatpush1.msra.mxu0 0.0
        %1145 = vmatprep.subr.mxu0 0.0
        %1146 = vmatpush1.msra.mxu0 0.0
        %1147 = vmatprep.subr.mxu0 0.0
        %1148 = vmatpush1.msra.mxu0 0.0
        %1149 = vmatprep.subr.mxu0 0.0
        %1150 = vmatpush1.msra.mxu0 0.0
        %1151 = vmatprep.subr.mxu0 0.0
        %1152 = vmatpush1.msra.mxu0 0.0
        %1153 = vmatprep.subr.mxu0 0.0
        %1154 = vmatpush1.msra.mxu0 0.0
        %1155 = vmatprep.subr.mxu0 0.0
        %1156 = vmatpush1.msra.mxu0 0.0
        %1157 = vmatprep.subr.mxu0 0.0
        %1158 = vmatpush1.msra.mxu0 0.0
        %1159 = vmatprep.subr.mxu0 0.0
        %1160 = vmatpush1.msra.mxu0 0.0
        %1161 = vmatprep.subr.mxu0 0.0
        %1162 = vmatpush1.msra.mxu0 0.0
        %1163 = vmatprep.subr.mxu0 0.0
        %1164 = vmatpush1.msra.mxu0 0.0
        %1165 = vmatprep.subr.mxu0 0.0
        %1166 = vmatpush1.msra.mxu0 0.0
        %1167 = vmatprep.subr.mxu0 0.0
        %1168 = vmatpush1.msra.mxu0 0.0
        %1169 = vmatprep.subr.mxu0 0.0
        %1170 = vmatpush1.msra.mxu0 0.0
        %1171 = vmatprep.subr.mxu0 0.0
        %1172 = vmatpush1.msra.mxu0 0.0
        %1173 = vmatprep.subr.mxu0 0.0
        %1174 = vmatpush1.msra.mxu0 0.0
        %1175 = vmatprep.subr.mxu0 0.0
        %1176 = vmatpush1.msra.mxu0 0.0
        %1177 = vmatprep.subr.mxu0 0.0
        %1178 = vmatpush1.msra.mxu0 0.0
        %1179 = vmatprep.subr.mxu0 0.0
        %1180 = vmatpush1.msra.mxu0 0.0
        %1181 = vmatprep.subr.mxu0 0.0
        %1182 = vmatpush1.msra.mxu0 0.0
        %1183 = vmatprep.subr.mxu0 0.0
        %1184 = vmatpush1.msra.mxu0 0.0
        %1185 = vmatprep.subr.mxu0 0.0
        %1186 = vmatpush1.msra.mxu0 0.0
        %1187 = vmatprep.subr.mxu0 0.0
        %1188 = vmatpush1.msra.mxu0 0.0
        %1189 = vmatprep.subr.mxu0 0.0
        %1190 = vmatpush1.msra.mxu0 0.0
        %1191 = vmatprep.subr.mxu0 0.0
        %1192 = vmatpush1.msra.mxu0 0.0
        %1193 = vmatprep.subr.mxu0 0.0
        %1194 = vmatpush1.msra.mxu0 0.0
        %1195 = vmatprep.subr.mxu0 0.0
        %1196 = vmatpush1.msra.mxu0 0.0
        %1197 = vmatprep.subr.mxu0 0.0
        %1198 = vmatpush1.msra.mxu0 0.0
        %1199 = vmatprep.mubr.f32.mxu0 0.0
        %1200 = vmatmul.mubr.f32.gmra.mrb[0].mxu0 %v1131
        %v1201 = vpop.f32.mrb[0].mxu0
        %v1202 = vadd.f32 0.0, %v1201
        %v1203 = vpop.f32.mrb[0].mxu0
        %1204 = vdwg.mxu0
        %v1205 = vadd.f32 %v1125, %v1202
        %v1206 = vld [vmem:[%s2] sm:$0xff]
        %1208 = vset.pattern.permute.xlu0 0
        %1209 = vperm.xlu0 %1208, %v1206
        %v1210 = vpop.permute.xlu0 %1209
        %v1212 = vadd.f32 %v1205, %v1210
        %v1213 = vrot.slane %v892, 4
        %v1215 = vsel %vm978, %v719, %v1213
        %v1217 = vrot.slane %v962, 4
        %v1219 = vsel %vm978, %v789, %v1217
        %v1220 = vadd.f32 %v1219, %v1212
        %v1221 = vld [vmem:[%s7] sm:$0xff]
        %v1222 = vld [vmem:[%s7 + $0x8] sm:$0xff]
        %v1223 = vld [vmem:[%s7 + $0x10] sm:$0xff]
        %v1224 = vld [vmem:[%s7 + $0x18] sm:$0xff]
        %v1225 = vld [vmem:[%s7 + $0x20] sm:$0xff]
        %v1226 = vld [vmem:[%s7 + $0x28] sm:$0xff]
        %v1227 = vld [vmem:[%s7 + $0x30] sm:$0xff]
        %v1228 = vld [vmem:[%s7 + $0x38] sm:$0xff]
        %v1229 = vld [vmem:[%s7 + $0x40] sm:$0xff]
        %v1230 = vld [vmem:[%s7 + $0x48] sm:$0xff]
        %v1231 = vld [vmem:[%s7 + $0x50] sm:$0xff]
        %v1232 = vld [vmem:[%s7 + $0x58] sm:$0xff]
        %v1233 = vld [vmem:[%s7 + $0x60] sm:$0xff]
        %v1234 = vld [vmem:[%s7 + $0x68] sm:$0xff]
        %v1235 = vld [vmem:[%s7 + $0x70] sm:$0xff]
        %v1236 = vld [vmem:[%s7 + $0x78] sm:$0xff]
        %1237 = vmatprep.subr.mxu0 0.0
        %1238 = vmatpush1.msra.mxu0 %v1221
        %1239 = vmatprep.subr.mxu0 0.0
        %1240 = vmatpush1.msra.mxu0 %v1222
        %1241 = vmatprep.subr.mxu0 0.0
        %1242 = vmatpush1.msra.mxu0 %v1223
        %1243 = vmatprep.subr.mxu0 0.0
        %1244 = vmatpush1.msra.mxu0 %v1224
        %1245 = vmatprep.subr.mxu0 0.0
        %1246 = vmatpush1.msra.mxu0 %v1225
        %1247 = vmatprep.subr.mxu0 0.0
        %1248 = vmatpush1.msra.mxu0 %v1226
        %1249 = vmatprep.subr.mxu0 0.0
        %1250 = vmatpush1.msra.mxu0 %v1227
        %1251 = vmatprep.subr.mxu0 0.0
        %1252 = vmatpush1.msra.mxu0 %v1228
        %1253 = vmatprep.subr.mxu0 0.0
        %1254 = vmatpush1.msra.mxu0 %v1229
        %1255 = vmatprep.subr.mxu0 0.0
        %1256 = vmatpush1.msra.mxu0 %v1230
        %1257 = vmatprep.subr.mxu0 0.0
        %1258 = vmatpush1.msra.mxu0 %v1231
        %1259 = vmatprep.subr.mxu0 0.0
        %1260 = vmatpush1.msra.mxu0 %v1232
        %1261 = vmatprep.subr.mxu0 0.0
        %1262 = vmatpush1.msra.mxu0 %v1233
        %1263 = vmatprep.subr.mxu0 0.0
        %1264 = vmatpush1.msra.mxu0 %v1234
        %1265 = vmatprep.subr.mxu0 0.0
        %1266 = vmatpush1.msra.mxu0 %v1235
        %1267 = vmatprep.subr.mxu0 0.0
        %1268 = vmatpush1.msra.mxu0 %v1236
        %1269 = vmatprep.subr.mxu0 0.0
        %1270 = vmatpush1.msra.mxu0 0.0
        %1271 = vmatprep.subr.mxu0 0.0
        %1272 = vmatpush1.msra.mxu0 0.0
        %1273 = vmatprep.subr.mxu0 0.0
        %1274 = vmatpush1.msra.mxu0 0.0
        %1275 = vmatprep.subr.mxu0 0.0
        %1276 = vmatpush1.msra.mxu0 0.0
        %1277 = vmatprep.subr.mxu0 0.0
        %1278 = vmatpush1.msra.mxu0 0.0
        %1279 = vmatprep.subr.mxu0 0.0
        %1280 = vmatpush1.msra.mxu0 0.0
        %1281 = vmatprep.subr.mxu0 0.0
        %1282 = vmatpush1.msra.mxu0 0.0
        %1283 = vmatprep.subr.mxu0 0.0
        %1284 = vmatpush1.msra.mxu0 0.0
        %1285 = vmatprep.subr.mxu0 0.0
        %1286 = vmatpush1.msra.mxu0 0.0
        %1287 = vmatprep.subr.mxu0 0.0
        %1288 = vmatpush1.msra.mxu0 0.0
        %1289 = vmatprep.subr.mxu0 0.0
        %1290 = vmatpush1.msra.mxu0 0.0
        %1291 = vmatprep.subr.mxu0 0.0
        %1292 = vmatpush1.msra.mxu0 0.0
        %1293 = vmatprep.subr.mxu0 0.0
        %1294 = vmatpush1.msra.mxu0 0.0
        %1295 = vmatprep.subr.mxu0 0.0
        %1296 = vmatpush1.msra.mxu0 0.0
        %1297 = vmatprep.subr.mxu0 0.0
        %1298 = vmatpush1.msra.mxu0 0.0
        %1299 = vmatprep.subr.mxu0 0.0
        %1300 = vmatpush1.msra.mxu0 0.0
        %1301 = vmatprep.mubr.f32.mxu0 0.0
        %1302 = vmatmul.mubr.f32.gmra.mrb[0].mxu0 %v1220
        %v1303 = vpop.f32.mrb[0].mxu0
        %v1304 = vadd.f32 0.0, %v1303
        %v1305 = vpop.f32.mrb[0].mxu0
        %1306 = vdwg.mxu0
        %1307 = vmatprep.subr.mxu0 0.0
        %1308 = vmatpush1.msra.mxu0 %v1221
        %1309 = vmatprep.subr.mxu0 0.0
        %1310 = vmatpush1.msra.mxu0 %v1222
        %1311 = vmatprep.subr.mxu0 0.0
        %1312 = vmatpush1.msra.mxu0 %v1223
        %1313 = vmatprep.subr.mxu0 0.0
        %1314 = vmatpush1.msra.mxu0 %v1224
        %1315 = vmatprep.subr.mxu0 0.0
        %1316 = vmatpush1.msra.mxu0 %v1225
        %1317 = vmatprep.subr.mxu0 0.0
        %1318 = vmatpush1.msra.mxu0 %v1226
        %1319 = vmatprep.subr.mxu0 0.0
        %1320 = vmatpush1.msra.mxu0 %v1227
        %1321 = vmatprep.subr.mxu0 0.0
        %1322 = vmatpush1.msra.mxu0 %v1228
        %1323 = vmatprep.subr.mxu0 0.0
        %1324 = vmatpush1.msra.mxu0 %v1229
        %1325 = vmatprep.subr.mxu0 0.0
        %1326 = vmatpush1.msra.mxu0 %v1230
        %1327 = vmatprep.subr.mxu0 0.0
        %1328 = vmatpush1.msra.mxu0 %v1231
        %1329 = vmatprep.subr.mxu0 0.0
        %1330 = vmatpush1.msra.mxu0 %v1232
        %1331 = vmatprep.subr.mxu0 0.0
        %1332 = vmatpush1.msra.mxu0 %v1233
        %1333 = vmatprep.subr.mxu0 0.0
        %1334 = vmatpush1.msra.mxu0 %v1234
        %1335 = vmatprep.subr.mxu0 0.0
        %1336 = vmatpush1.msra.mxu0 %v1235
        %1337 = vmatprep.subr.mxu0 0.0
        %1338 = vmatpush1.msra.mxu0 %v1236
        %1339 = vmatprep.subr.mxu0 0.0
        %1340 = vmatpush1.msra.mxu0 0.0
        %1341 = vmatprep.subr.mxu0 0.0
        %1342 = vmatpush1.msra.mxu0 0.0
        %1343 = vmatprep.subr.mxu0 0.0
        %1344 = vmatpush1.msra.mxu0 0.0
        %1345 = vmatprep.subr.mxu0 0.0
        %1346 = vmatpush1.msra.mxu0 0.0
        %1347 = vmatprep.subr.mxu0 0.0
        %1348 = vmatpush1.msra.mxu0 0.0
        %1349 = vmatprep.subr.mxu0 0.0
        %1350 = vmatpush1.msra.mxu0 0.0
        %1351 = vmatprep.subr.mxu0 0.0
        %1352 = vmatpush1.msra.mxu0 0.0
        %1353 = vmatprep.subr.mxu0 0.0
        %1354 = vmatpush1.msra.mxu0 0.0
        %1355 = vmatprep.subr.mxu0 0.0
        %1356 = vmatpush1.msra.mxu0 0.0
        %1357 = vmatprep.subr.mxu0 0.0
        %1358 = vmatpush1.msra.mxu0 0.0
        %1359 = vmatprep.subr.mxu0 0.0
        %1360 = vmatpush1.msra.mxu0 0.0
        %1361 = vmatprep.subr.mxu0 0.0
        %1362 = vmatpush1.msra.mxu0 0.0
        %1363 = vmatprep.subr.mxu0 0.0
        %1364 = vmatpush1.msra.mxu0 0.0
        %1365 = vmatprep.subr.mxu0 0.0
        %1366 = vmatpush1.msra.mxu0 0.0
        %1367 = vmatprep.subr.mxu0 0.0
        %1368 = vmatpush1.msra.mxu0 0.0
        %1369 = vmatprep.subr.mxu0 0.0
        %1370 = vmatpush1.msra.mxu0 0.0
        %1371 = vmatprep.mubr.f32.mxu0 0.0
        %1372 = vmatmul.mubr.f32.gmra.mrb[0].mxu0 %v1215
        %v1373 = vpop.f32.mrb[0].mxu0
        %v1374 = vadd.f32 0.0, %v1373
        %v1375 = vpop.f32.mrb[0].mxu0
        %1376 = vdwg.mxu0
        %s1377 = scalar_lea.vmem %s7, 128
        %v1378 = vld [vmem:[%s1377] sm:$0xff]
        %v1379 = vld [vmem:[%s1377 + $0x8] sm:$0xff]
        %v1380 = vld [vmem:[%s1377 + $0x10] sm:$0xff]
        %v1381 = vld [vmem:[%s1377 + $0x18] sm:$0xff]
        %v1382 = vld [vmem:[%s1377 + $0x20] sm:$0xff]
        %v1383 = vld [vmem:[%s1377 + $0x28] sm:$0xff]
        %v1384 = vld [vmem:[%s1377 + $0x30] sm:$0xff]
        %v1385 = vld [vmem:[%s1377 + $0x38] sm:$0xff]
        %v1386 = vld [vmem:[%s1377 + $0x40] sm:$0xff]
        %v1387 = vld [vmem:[%s1377 + $0x48] sm:$0xff]
        %v1388 = vld [vmem:[%s1377 + $0x50] sm:$0xff]
        %v1389 = vld [vmem:[%s1377 + $0x58] sm:$0xff]
        %v1390 = vld [vmem:[%s1377 + $0x60] sm:$0xff]
        %v1391 = vld [vmem:[%s1377 + $0x68] sm:$0xff]
        %v1392 = vld [vmem:[%s1377 + $0x70] sm:$0xff]
        %v1393 = vld [vmem:[%s1377 + $0x78] sm:$0xff]
        %1394 = vmatprep.subr.mxu0 0.0
        %1395 = vmatpush1.msra.mxu0 %v1378
        %1396 = vmatprep.subr.mxu0 0.0
        %1397 = vmatpush1.msra.mxu0 %v1379
        %1398 = vmatprep.subr.mxu0 0.0
        %1399 = vmatpush1.msra.mxu0 %v1380
        %1400 = vmatprep.subr.mxu0 0.0
        %1401 = vmatpush1.msra.mxu0 %v1381
        %1402 = vmatprep.subr.mxu0 0.0
        %1403 = vmatpush1.msra.mxu0 %v1382
        %1404 = vmatprep.subr.mxu0 0.0
        %1405 = vmatpush1.msra.mxu0 %v1383
        %1406 = vmatprep.subr.mxu0 0.0
        %1407 = vmatpush1.msra.mxu0 %v1384
        %1408 = vmatprep.subr.mxu0 0.0
        %1409 = vmatpush1.msra.mxu0 %v1385
        %1410 = vmatprep.subr.mxu0 0.0
        %1411 = vmatpush1.msra.mxu0 %v1386
        %1412 = vmatprep.subr.mxu0 0.0
        %1413 = vmatpush1.msra.mxu0 %v1387
        %1414 = vmatprep.subr.mxu0 0.0
        %1415 = vmatpush1.msra.mxu0 %v1388
        %1416 = vmatprep.subr.mxu0 0.0
        %1417 = vmatpush1.msra.mxu0 %v1389
        %1418 = vmatprep.subr.mxu0 0.0
        %1419 = vmatpush1.msra.mxu0 %v1390
        %1420 = vmatprep.subr.mxu0 0.0
        %1421 = vmatpush1.msra.mxu0 %v1391
        %1422 = vmatprep.subr.mxu0 0.0
        %1423 = vmatpush1.msra.mxu0 %v1392
        %1424 = vmatprep.subr.mxu0 0.0
        %1425 = vmatpush1.msra.mxu0 %v1393
        %1426 = vmatprep.subr.mxu0 0.0
        %1427 = vmatpush1.msra.mxu0 0.0
        %1428 = vmatprep.subr.mxu0 0.0
        %1429 = vmatpush1.msra.mxu0 0.0
        %1430 = vmatprep.subr.mxu0 0.0
        %1431 = vmatpush1.msra.mxu0 0.0
        %1432 = vmatprep.subr.mxu0 0.0
        %1433 = vmatpush1.msra.mxu0 0.0
        %1434 = vmatprep.subr.mxu0 0.0
        %1435 = vmatpush1.msra.mxu0 0.0
        %1436 = vmatprep.subr.mxu0 0.0
        %1437 = vmatpush1.msra.mxu0 0.0
        %1438 = vmatprep.subr.mxu0 0.0
        %1439 = vmatpush1.msra.mxu0 0.0
        %1440 = vmatprep.subr.mxu0 0.0
        %1441 = vmatpush1.msra.mxu0 0.0
        %1442 = vmatprep.subr.mxu0 0.0
        %1443 = vmatpush1.msra.mxu0 0.0
        %1444 = vmatprep.subr.mxu0 0.0
        %1445 = vmatpush1.msra.mxu0 0.0
        %1446 = vmatprep.subr.mxu0 0.0
        %1447 = vmatpush1.msra.mxu0 0.0
        %1448 = vmatprep.subr.mxu0 0.0
        %1449 = vmatpush1.msra.mxu0 0.0
        %1450 = vmatprep.subr.mxu0 0.0
        %1451 = vmatpush1.msra.mxu0 0.0
        %1452 = vmatprep.subr.mxu0 0.0
        %1453 = vmatpush1.msra.mxu0 0.0
        %1454 = vmatprep.subr.mxu0 0.0
        %1455 = vmatpush1.msra.mxu0 0.0
        %1456 = vmatprep.subr.mxu0 0.0
        %1457 = vmatpush1.msra.mxu0 0.0
        %1458 = vmatprep.mubr.f32.mxu0 0.0
        %1459 = vmatmul.mubr.f32.gmra.mrb[0].mxu0 %v1220
        %v1460 = vpop.f32.mrb[0].mxu0
        %v1461 = vadd.f32 0.0, %v1460
        %v1462 = vpop.f32.mrb[0].mxu0
        %1463 = vdwg.mxu0
        %1464 = vmatprep.subr.mxu0 0.0
        %1465 = vmatpush1.msra.mxu0 %v1378
        %1466 = vmatprep.subr.mxu0 0.0
        %1467 = vmatpush1.msra.mxu0 %v1379
        %1468 = vmatprep.subr.mxu0 0.0
        %1469 = vmatpush1.msra.mxu0 %v1380
        %1470 = vmatprep.subr.mxu0 0.0
        %1471 = vmatpush1.msra.mxu0 %v1381
        %1472 = vmatprep.subr.mxu0 0.0
        %1473 = vmatpush1.msra.mxu0 %v1382
        %1474 = vmatprep.subr.mxu0 0.0
        %1475 = vmatpush1.msra.mxu0 %v1383
        %1476 = vmatprep.subr.mxu0 0.0
        %1477 = vmatpush1.msra.mxu0 %v1384
        %1478 = vmatprep.subr.mxu0 0.0
        %1479 = vmatpush1.msra.mxu0 %v1385
        %1480 = vmatprep.subr.mxu0 0.0
        %1481 = vmatpush1.msra.mxu0 %v1386
        %1482 = vmatprep.subr.mxu0 0.0
        %1483 = vmatpush1.msra.mxu0 %v1387
        %1484 = vmatprep.subr.mxu0 0.0
        %1485 = vmatpush1.msra.mxu0 %v1388
        %1486 = vmatprep.subr.mxu0 0.0
        %1487 = vmatpush1.msra.mxu0 %v1389
        %1488 = vmatprep.subr.mxu0 0.0
        %1489 = vmatpush1.msra.mxu0 %v1390
        %1490 = vmatprep.subr.mxu0 0.0
        %1491 = vmatpush1.msra.mxu0 %v1391
        %1492 = vmatprep.subr.mxu0 0.0
        %1493 = vmatpush1.msra.mxu0 %v1392
        %1494 = vmatprep.subr.mxu0 0.0
        %1495 = vmatpush1.msra.mxu0 %v1393
        %1496 = vmatprep.subr.mxu0 0.0
        %1497 = vmatpush1.msra.mxu0 0.0
        %1498 = vmatprep.subr.mxu0 0.0
        %1499 = vmatpush1.msra.mxu0 0.0
        %1500 = vmatprep.subr.mxu0 0.0
        %1501 = vmatpush1.msra.mxu0 0.0
        %1502 = vmatprep.subr.mxu0 0.0
        %1503 = vmatpush1.msra.mxu0 0.0
        %1504 = vmatprep.subr.mxu0 0.0
        %1505 = vmatpush1.msra.mxu0 0.0
        %1506 = vmatprep.subr.mxu0 0.0
        %1507 = vmatpush1.msra.mxu0 0.0
        %1508 = vmatprep.subr.mxu0 0.0
        %1509 = vmatpush1.msra.mxu0 0.0
        %1510 = vmatprep.subr.mxu0 0.0
        %1511 = vmatpush1.msra.mxu0 0.0
        %1512 = vmatprep.subr.mxu0 0.0
        %1513 = vmatpush1.msra.mxu0 0.0
        %1514 = vmatprep.subr.mxu0 0.0
        %1515 = vmatpush1.msra.mxu0 0.0
        %1516 = vmatprep.subr.mxu0 0.0
        %1517 = vmatpush1.msra.mxu0 0.0
        %1518 = vmatprep.subr.mxu0 0.0
        %1519 = vmatpush1.msra.mxu0 0.0
        %1520 = vmatprep.subr.mxu0 0.0
        %1521 = vmatpush1.msra.mxu0 0.0
        %1522 = vmatprep.subr.mxu0 0.0
        %1523 = vmatpush1.msra.mxu0 0.0
        %1524 = vmatprep.subr.mxu0 0.0
        %1525 = vmatpush1.msra.mxu0 0.0
        %1526 = vmatprep.subr.mxu0 0.0
        %1527 = vmatpush1.msra.mxu0 0.0
        %1528 = vmatprep.mubr.f32.mxu0 0.0
        %1529 = vmatmul.mubr.f32.gmra.mrb[0].mxu0 %v1215
        %v1530 = vpop.f32.mrb[0].mxu0
        %v1531 = vadd.f32 0.0, %v1530
        %v1532 = vpop.f32.mrb[0].mxu0
        %1533 = vdwg.mxu0
        %1535 = vrot.lane.b32.xlu0 %v1461, 1
        %v1536 = vpop.permute.xlu0 %1535
        %v1538 = vsel %vm969, 0.0, %v1536
        %v1539 = vld [vmem:[%s5] sm:$0xff]
        %v1540 = vld [vmem:[%s5 + $0x8] sm:$0xff]
        %s1541 = scalar_lea.vmem %s5, 16
        %v1542 = vld [vmem:[%s1541] sm:$0xff]
        %v1543 = vld [vmem:[%s1541 + $0x8] sm:$0xff]
        %vm1544 = vcmask 64512
        %v1546 = vsel %vm1544, %v1542, 0
        %v1549 = vsel %vm1544, %v1543, 0
        %1551 = vmatprep.subr.mxu0 0.0
        %1552 = vmatpush1.msra.mxu0 %v1304
        %1553 = vmatprep.subr.mxu0 0.0
        %1554 = vmatpush1.msra.mxu0 0.0
        %1555 = vmatprep.subr.mxu0 0.0
        %1556 = vmatpush1.msra.mxu0 0.0
        %1557 = vmatprep.subr.mxu0 0.0
        %1558 = vmatpush1.msra.mxu0 0.0
        %1559 = vmatprep.subr.mxu0 0.0
        %1560 = vmatpush1.msra.mxu0 0.0
        %1561 = vmatprep.subr.mxu0 0.0
        %1562 = vmatpush1.msra.mxu0 0.0
        %1563 = vmatprep.subr.mxu0 0.0
        %1564 = vmatpush1.msra.mxu0 0.0
        %1565 = vmatprep.subr.mxu0 0.0
        %1566 = vmatpush1.msra.mxu0 0.0
        %1567 = vmatprep.subr.mxu0 0.0
        %1568 = vmatpush1.msra.mxu0 0.0
        %1569 = vmatprep.subr.mxu0 0.0
        %1570 = vmatpush1.msra.mxu0 0.0
        %1571 = vmatprep.subr.mxu0 0.0
        %1572 = vmatpush1.msra.mxu0 0.0
        %1573 = vmatprep.subr.mxu0 0.0
        %1574 = vmatpush1.msra.mxu0 0.0
        %1575 = vmatprep.subr.mxu0 0.0
        %1576 = vmatpush1.msra.mxu0 0.0
        %1577 = vmatprep.subr.mxu0 0.0
        %1578 = vmatpush1.msra.mxu0 0.0
        %1579 = vmatprep.subr.mxu0 0.0
        %1580 = vmatpush1.msra.mxu0 0.0
        %1581 = vmatprep.subr.mxu0 0.0
        %1582 = vmatpush1.msra.mxu0 0.0
        %1583 = vmatprep.subr.mxu0 0.0
        %1584 = vmatpush1.msra.mxu0 0.0
        %1585 = vmatprep.subr.mxu0 0.0
        %1586 = vmatpush1.msra.mxu0 0.0
        %1587 = vmatprep.subr.mxu0 0.0
        %1588 = vmatpush1.msra.mxu0 0.0
        %1589 = vmatprep.subr.mxu0 0.0
        %1590 = vmatpush1.msra.mxu0 0.0
        %1591 = vmatprep.subr.mxu0 0.0
        %1592 = vmatpush1.msra.mxu0 0.0
        %1593 = vmatprep.subr.mxu0 0.0
        %1594 = vmatpush1.msra.mxu0 0.0
        %1595 = vmatprep.subr.mxu0 0.0
        %1596 = vmatpush1.msra.mxu0 0.0
        %1597 = vmatprep.subr.mxu0 0.0
        %1598 = vmatpush1.msra.mxu0 0.0
        %1599 = vmatprep.subr.mxu0 0.0
        %1600 = vmatpush1.msra.mxu0 0.0
        %1601 = vmatprep.subr.mxu0 0.0
        %1602 = vmatpush1.msra.mxu0 0.0
        %1603 = vmatprep.subr.mxu0 0.0
        %1604 = vmatpush1.msra.mxu0 0.0
        %1605 = vmatprep.subr.mxu0 0.0
        %1606 = vmatpush1.msra.mxu0 0.0
        %1607 = vmatprep.subr.mxu0 0.0
        %1608 = vmatpush1.msra.mxu0 0.0
        %1609 = vmatprep.subr.mxu0 0.0
        %1610 = vmatpush1.msra.mxu0 0.0
        %1611 = vmatprep.subr.mxu0 0.0
        %1612 = vmatpush1.msra.mxu0 0.0
        %1613 = vmatprep.subr.mxu0 0.0
        %1614 = vmatpush1.msra.mxu0 0.0
        %1615 = vmatprep.mubr.f32.mxu0 0.0
        %1616 = vmatmul.mubr.f32.gmra.mrb[0].mxu0 %v1546
        %v1617 = vpop.f32.mrb[0].mxu0
        %v1618 = vadd.f32 0.0, %v1617
        %v1619 = vpop.f32.mrb[0].mxu0
        %1620 = vmatprep.mubr.f32.mxu0 0.0
        %1621 = vmatmul.mubr.f32.gmra.mrb[0].mxu0 %v1549
        %v1622 = vpop.f32.mrb[0].mxu0
        %v1623 = vadd.f32 0.0, %v1622
        %v1624 = vpop.f32.mrb[0].mxu0
        %1625 = vdwg.mxu0
        %v1627 = vsel %vm1544, %v1539, 0
        %v1630 = vsel %vm1544, %v1540, 0
        %1632 = vmatprep.subr.mxu0 0.0
        %1633 = vmatpush1.msra.mxu0 %v1538
        %1634 = vmatprep.subr.mxu0 0.0
        %1635 = vmatpush1.msra.mxu0 0.0
        %1636 = vmatprep.subr.mxu0 0.0
        %1637 = vmatpush1.msra.mxu0 0.0
        %1638 = vmatprep.subr.mxu0 0.0
        %1639 = vmatpush1.msra.mxu0 0.0
        %1640 = vmatprep.subr.mxu0 0.0
        %1641 = vmatpush1.msra.mxu0 0.0
        %1642 = vmatprep.subr.mxu0 0.0
        %1643 = vmatpush1.msra.mxu0 0.0
        %1644 = vmatprep.subr.mxu0 0.0
        %1645 = vmatpush1.msra.mxu0 0.0
        %1646 = vmatprep.subr.mxu0 0.0
        %1647 = vmatpush1.msra.mxu0 0.0
        %1648 = vmatprep.subr.mxu0 0.0
        %1649 = vmatpush1.msra.mxu0 0.0
        %1650 = vmatprep.subr.mxu0 0.0
        %1651 = vmatpush1.msra.mxu0 0.0
        %1652 = vmatprep.subr.mxu0 0.0
        %1653 = vmatpush1.msra.mxu0 0.0
        %1654 = vmatprep.subr.mxu0 0.0
        %1655 = vmatpush1.msra.mxu0 0.0
        %1656 = vmatprep.subr.mxu0 0.0
        %1657 = vmatpush1.msra.mxu0 0.0
        %1658 = vmatprep.subr.mxu0 0.0
        %1659 = vmatpush1.msra.mxu0 0.0
        %1660 = vmatprep.subr.mxu0 0.0
        %1661 = vmatpush1.msra.mxu0 0.0
        %1662 = vmatprep.subr.mxu0 0.0
        %1663 = vmatpush1.msra.mxu0 0.0
        %1664 = vmatprep.subr.mxu0 0.0
        %1665 = vmatpush1.msra.mxu0 0.0
        %1666 = vmatprep.subr.mxu0 0.0
        %1667 = vmatpush1.msra.mxu0 0.0
        %1668 = vmatprep.subr.mxu0 0.0
        %1669 = vmatpush1.msra.mxu0 0.0
        %1670 = vmatprep.subr.mxu0 0.0
        %1671 = vmatpush1.msra.mxu0 0.0
        %1672 = vmatprep.subr.mxu0 0.0
        %1673 = vmatpush1.msra.mxu0 0.0
        %1674 = vmatprep.subr.mxu0 0.0
        %1675 = vmatpush1.msra.mxu0 0.0
        %1676 = vmatprep.subr.mxu0 0.0
        %1677 = vmatpush1.msra.mxu0 0.0
        %1678 = vmatprep.subr.mxu0 0.0
        %1679 = vmatpush1.msra.mxu0 0.0
        %1680 = vmatprep.subr.mxu0 0.0
        %1681 = vmatpush1.msra.mxu0 0.0
        %1682 = vmatprep.subr.mxu0 0.0
        %1683 = vmatpush1.msra.mxu0 0.0
        %1684 = vmatprep.subr.mxu0 0.0
        %1685 = vmatpush1.msra.mxu0 0.0
        %1686 = vmatprep.subr.mxu0 0.0
        %1687 = vmatpush1.msra.mxu0 0.0
        %1688 = vmatprep.subr.mxu0 0.0
        %1689 = vmatpush1.msra.mxu0 0.0
        %1690 = vmatprep.subr.mxu0 0.0
        %1691 = vmatpush1.msra.mxu0 0.0
        %1692 = vmatprep.subr.mxu0 0.0
        %1693 = vmatpush1.msra.mxu0 0.0
        %1694 = vmatprep.subr.mxu0 0.0
        %1695 = vmatpush1.msra.mxu0 0.0
        %1696 = vmatprep.mubr.f32.mxu0 0.0
        %1697 = vmatmul.mubr.f32.gmra.mrb[0].mxu0 %v1627
        %v1698 = vpop.f32.mrb[0].mxu0
        %v1699 = vadd.f32 %v1618, %v1698
        %v1700 = vpop.f32.mrb[0].mxu0
        %1701 = vmatprep.mubr.f32.mxu0 0.0
        %1702 = vmatmul.mubr.f32.gmra.mrb[0].mxu0 %v1630
        %v1703 = vpop.f32.mrb[0].mxu0
        %v1704 = vadd.f32 %v1623, %v1703
        %v1705 = vpop.f32.mrb[0].mxu0
        %1706 = vdwg.mxu0
        %s1707 = scalar_lea.vmem %s5, 32
        %v1708 = vld [vmem:[%s1707] sm:$0xff]
        %v1709 = vld [vmem:[%s1707 + $0x8] sm:$0xff]
        %v1711 = vsel %vm1544, %v1708, 0
        %v1714 = vsel %vm1544, %v1709, 0
        %1716 = vmatprep.subr.mxu0 0.0
        %1717 = vmatpush1.msra.mxu0 %v1461
        %1718 = vmatprep.subr.mxu0 0.0
        %1719 = vmatpush1.msra.mxu0 0.0
        %1720 = vmatprep.subr.mxu0 0.0
        %1721 = vmatpush1.msra.mxu0 0.0
        %1722 = vmatprep.subr.mxu0 0.0
        %1723 = vmatpush1.msra.mxu0 0.0
        %1724 = vmatprep.subr.mxu0 0.0
        %1725 = vmatpush1.msra.mxu0 0.0
        %1726 = vmatprep.subr.mxu0 0.0
        %1727 = vmatpush1.msra.mxu0 0.0
        %1728 = vmatprep.subr.mxu0 0.0
        %1729 = vmatpush1.msra.mxu0 0.0
        %1730 = vmatprep.subr.mxu0 0.0
        %1731 = vmatpush1.msra.mxu0 0.0
        %1732 = vmatprep.subr.mxu0 0.0
        %1733 = vmatpush1.msra.mxu0 0.0
        %1734 = vmatprep.subr.mxu0 0.0
        %1735 = vmatpush1.msra.mxu0 0.0
        %1736 = vmatprep.subr.mxu0 0.0
        %1737 = vmatpush1.msra.mxu0 0.0
        %1738 = vmatprep.subr.mxu0 0.0
        %1739 = vmatpush1.msra.mxu0 0.0
        %1740 = vmatprep.subr.mxu0 0.0
        %1741 = vmatpush1.msra.mxu0 0.0
        %1742 = vmatprep.subr.mxu0 0.0
        %1743 = vmatpush1.msra.mxu0 0.0
        %1744 = vmatprep.subr.mxu0 0.0
        %1745 = vmatpush1.msra.mxu0 0.0
        %1746 = vmatprep.subr.mxu0 0.0
        %1747 = vmatpush1.msra.mxu0 0.0
        %1748 = vmatprep.subr.mxu0 0.0
        %1749 = vmatpush1.msra.mxu0 0.0
        %1750 = vmatprep.subr.mxu0 0.0
        %1751 = vmatpush1.msra.mxu0 0.0
        %1752 = vmatprep.subr.mxu0 0.0
        %1753 = vmatpush1.msra.mxu0 0.0
        %1754 = vmatprep.subr.mxu0 0.0
        %1755 = vmatpush1.msra.mxu0 0.0
        %1756 = vmatprep.subr.mxu0 0.0
        %1757 = vmatpush1.msra.mxu0 0.0
        %1758 = vmatprep.subr.mxu0 0.0
        %1759 = vmatpush1.msra.mxu0 0.0
        %1760 = vmatprep.subr.mxu0 0.0
        %1761 = vmatpush1.msra.mxu0 0.0
        %1762 = vmatprep.subr.mxu0 0.0
        %1763 = vmatpush1.msra.mxu0 0.0
        %1764 = vmatprep.subr.mxu0 0.0
        %1765 = vmatpush1.msra.mxu0 0.0
        %1766 = vmatprep.subr.mxu0 0.0
        %1767 = vmatpush1.msra.mxu0 0.0
        %1768 = vmatprep.subr.mxu0 0.0
        %1769 = vmatpush1.msra.mxu0 0.0
        %1770 = vmatprep.subr.mxu0 0.0
        %1771 = vmatpush1.msra.mxu0 0.0
        %1772 = vmatprep.subr.mxu0 0.0
        %1773 = vmatpush1.msra.mxu0 0.0
        %1774 = vmatprep.subr.mxu0 0.0
        %1775 = vmatpush1.msra.mxu0 0.0
        %1776 = vmatprep.subr.mxu0 0.0
        %1777 = vmatpush1.msra.mxu0 0.0
        %1778 = vmatprep.subr.mxu0 0.0
        %1779 = vmatpush1.msra.mxu0 0.0
        %1780 = vmatprep.mubr.f32.mxu0 0.0
        %1781 = vmatmul.mubr.f32.gmra.mrb[0].mxu0 %v1711
        %v1782 = vpop.f32.mrb[0].mxu0
        %v1783 = vadd.f32 0.0, %v1782
        %v1784 = vpop.f32.mrb[0].mxu0
        %1785 = vmatprep.mubr.f32.mxu0 0.0
        %1786 = vmatmul.mubr.f32.gmra.mrb[0].mxu0 %v1714
        %v1787 = vpop.f32.mrb[0].mxu0
        %v1788 = vadd.f32 0.0, %v1787
        %v1789 = vpop.f32.mrb[0].mxu0
        %1790 = vdwg.mxu0
        %v1791 = vadd.f32 %v1699, %v1783
        %v1792 = vadd.f32 %v1704, %v1788
        %v1793 = vld [vmem:[%s6] sm:$0xff]
        %v1794 = vld [vmem:[%s6 + $0x8] sm:$0xff]
        %1796 = vset.pattern.permute.xlu0 0
        %1797 = vperm.xlu0 %1796, %v1793
        %v1798 = vpop.permute.xlu0 %1797
        %1801 = vset.pattern.permute.xlu0 0
        %1802 = vperm.xlu0 %1801, %v1794
        %v1803 = vpop.permute.xlu0 %1802
        %v1805 = vadd.f32 %v1791, %v1798
        %v1806 = vadd.f32 %v1792, %v1803
        %v1807 = vadd.f32 %v1374, %v1805
        %v1808 = vadd.f32 %v1531, %v1806
        %v1809 = vld [vmem:[%s11] sm:$0xff]
        %v1810 = vld [vmem:[%s11 + $0x8] sm:$0xff]
        %v1811 = vld [vmem:[%s11 + $0x10] sm:$0xff]
        %v1812 = vld [vmem:[%s11 + $0x18] sm:$0xff]
        %v1813 = vld [vmem:[%s11 + $0x20] sm:$0xff]
        %v1814 = vld [vmem:[%s11 + $0x28] sm:$0xff]
        %v1815 = vld [vmem:[%s11 + $0x30] sm:$0xff]
        %v1816 = vld [vmem:[%s11 + $0x38] sm:$0xff]
        %vm1817 = vcmask 523264
        %v1819 = vsel %vm1817, %v1807, 0
        %v1822 = vsel %vm1817, %v1808, 0
        %1824 = vmatprep.subr.mxu0 0.0
        %1825 = vmatpush1.msra.mxu0 %v1809
        %1826 = vmatprep.subr.mxu0 0.0
        %1827 = vmatpush1.msra.mxu0 %v1810
        %1828 = vmatprep.subr.mxu0 0.0
        %1829 = vmatpush1.msra.mxu0 %v1811
        %1830 = vmatprep.subr.mxu0 0.0
        %1831 = vmatpush1.msra.mxu0 %v1812
        %1832 = vmatprep.subr.mxu0 0.0
        %1833 = vmatpush1.msra.mxu0 %v1813
        %1834 = vmatprep.subr.mxu0 0.0
        %1835 = vmatpush1.msra.mxu0 %v1814
        %1836 = vmatprep.subr.mxu0 0.0
        %1837 = vmatpush1.msra.mxu0 %v1815
        %1838 = vmatprep.subr.mxu0 0.0
        %1839 = vmatpush1.msra.mxu0 %v1816
        %1840 = vmatprep.subr.mxu0 0.0
        %1841 = vmatpush1.msra.mxu0 0.0
        %1842 = vmatprep.subr.mxu0 0.0
        %1843 = vmatpush1.msra.mxu0 0.0
        %1844 = vmatprep.subr.mxu0 0.0
        %1845 = vmatpush1.msra.mxu0 0.0
        %1846 = vmatprep.subr.mxu0 0.0
        %1847 = vmatpush1.msra.mxu0 0.0
        %1848 = vmatprep.subr.mxu0 0.0
        %1849 = vmatpush1.msra.mxu0 0.0
        %1850 = vmatprep.subr.mxu0 0.0
        %1851 = vmatpush1.msra.mxu0 0.0
        %1852 = vmatprep.subr.mxu0 0.0
        %1853 = vmatpush1.msra.mxu0 0.0
        %1854 = vmatprep.subr.mxu0 0.0
        %1855 = vmatpush1.msra.mxu0 0.0
        %1856 = vmatprep.subr.mxu0 0.0
        %1857 = vmatpush1.msra.mxu0 0.0
        %1858 = vmatprep.subr.mxu0 0.0
        %1859 = vmatpush1.msra.mxu0 0.0
        %1860 = vmatprep.subr.mxu0 0.0
        %1861 = vmatpush1.msra.mxu0 0.0
        %1862 = vmatprep.subr.mxu0 0.0
        %1863 = vmatpush1.msra.mxu0 0.0
        %1864 = vmatprep.subr.mxu0 0.0
        %1865 = vmatpush1.msra.mxu0 0.0
        %1866 = vmatprep.subr.mxu0 0.0
        %1867 = vmatpush1.msra.mxu0 0.0
        %1868 = vmatprep.subr.mxu0 0.0
        %1869 = vmatpush1.msra.mxu0 0.0
        %1870 = vmatprep.subr.mxu0 0.0
        %1871 = vmatpush1.msra.mxu0 0.0
        %1872 = vmatprep.subr.mxu0 0.0
        %1873 = vmatpush1.msra.mxu0 0.0
        %1874 = vmatprep.subr.mxu0 0.0
        %1875 = vmatpush1.msra.mxu0 0.0
        %1876 = vmatprep.subr.mxu0 0.0
        %1877 = vmatpush1.msra.mxu0 0.0
        %1878 = vmatprep.subr.mxu0 0.0
        %1879 = vmatpush1.msra.mxu0 0.0
        %1880 = vmatprep.subr.mxu0 0.0
        %1881 = vmatpush1.msra.mxu0 0.0
        %1882 = vmatprep.subr.mxu0 0.0
        %1883 = vmatpush1.msra.mxu0 0.0
        %1884 = vmatprep.subr.mxu0 0.0
        %1885 = vmatpush1.msra.mxu0 0.0
        %1886 = vmatprep.subr.mxu0 0.0
        %1887 = vmatpush1.msra.mxu0 0.0
        %1888 = vmatprep.mubr.f32.mxu0 0.0
        %1889 = vmatmul.mubr.f32.gmra.mrb[0].mxu0 %v1819
        %v1890 = vpop.f32.mrb[0].mxu0
        %v1891 = vadd.f32 0.0, %v1890
        %v1892 = vpop.f32.mrb[0].mxu0
        %1893 = vmatprep.mubr.f32.mxu0 0.0
        %1894 = vmatmul.mubr.f32.gmra.mrb[0].mxu0 %v1822
        %v1895 = vpop.f32.mrb[0].mxu0
        %v1896 = vadd.f32 0.0, %v1895
        %v1897 = vpop.f32.mrb[0].mxu0
        %1898 = vdwg.mxu0
        %v1900 = vsel %vm1817, %v1304, 0
        %v1902 = vsel %vm1817, %v1461, 0
        %1904 = vmatprep.subr.mxu0 0.0
        %1905 = vmatpush1.msra.mxu0 %v1809
        %1906 = vmatprep.subr.mxu0 0.0
        %1907 = vmatpush1.msra.mxu0 %v1810
        %1908 = vmatprep.subr.mxu0 0.0
        %1909 = vmatpush1.msra.mxu0 %v1811
        %1910 = vmatprep.subr.mxu0 0.0
        %1911 = vmatpush1.msra.mxu0 %v1812
        %1912 = vmatprep.subr.mxu0 0.0
        %1913 = vmatpush1.msra.mxu0 %v1813
        %1914 = vmatprep.subr.mxu0 0.0
        %1915 = vmatpush1.msra.mxu0 %v1814
        %1916 = vmatprep.subr.mxu0 0.0
        %1917 = vmatpush1.msra.mxu0 %v1815
        %1918 = vmatprep.subr.mxu0 0.0
        %1919 = vmatpush1.msra.mxu0 %v1816
        %1920 = vmatprep.subr.mxu0 0.0
        %1921 = vmatpush1.msra.mxu0 0.0
        %1922 = vmatprep.subr.mxu0 0.0
        %1923 = vmatpush1.msra.mxu0 0.0
        %1924 = vmatprep.subr.mxu0 0.0
        %1925 = vmatpush1.msra.mxu0 0.0
        %1926 = vmatprep.subr.mxu0 0.0
        %1927 = vmatpush1.msra.mxu0 0.0
        %1928 = vmatprep.subr.mxu0 0.0
        %1929 = vmatpush1.msra.mxu0 0.0
        %1930 = vmatprep.subr.mxu0 0.0
        %1931 = vmatpush1.msra.mxu0 0.0
        %1932 = vmatprep.subr.mxu0 0.0
        %1933 = vmatpush1.msra.mxu0 0.0
        %1934 = vmatprep.subr.mxu0 0.0
        %1935 = vmatpush1.msra.mxu0 0.0
        %1936 = vmatprep.subr.mxu0 0.0
        %1937 = vmatpush1.msra.mxu0 0.0
        %1938 = vmatprep.subr.mxu0 0.0
        %1939 = vmatpush1.msra.mxu0 0.0
        %1940 = vmatprep.subr.mxu0 0.0
        %1941 = vmatpush1.msra.mxu0 0.0
        %1942 = vmatprep.subr.mxu0 0.0
        %1943 = vmatpush1.msra.mxu0 0.0
        %1944 = vmatprep.subr.mxu0 0.0
        %1945 = vmatpush1.msra.mxu0 0.0
        %1946 = vmatprep.subr.mxu0 0.0
        %1947 = vmatpush1.msra.mxu0 0.0
        %1948 = vmatprep.subr.mxu0 0.0
        %1949 = vmatpush1.msra.mxu0 0.0
        %1950 = vmatprep.subr.mxu0 0.0
        %1951 = vmatpush1.msra.mxu0 0.0
        %1952 = vmatprep.subr.mxu0 0.0
        %1953 = vmatpush1.msra.mxu0 0.0
        %1954 = vmatprep.subr.mxu0 0.0
        %1955 = vmatpush1.msra.mxu0 0.0
        %1956 = vmatprep.subr.mxu0 0.0
        %1957 = vmatpush1.msra.mxu0 0.0
        %1958 = vmatprep.subr.mxu0 0.0
        %1959 = vmatpush1.msra.mxu0 0.0
        %1960 = vmatprep.subr.mxu0 0.0
        %1961 = vmatpush1.msra.mxu0 0.0
        %1962 = vmatprep.subr.mxu0 0.0
        %1963 = vmatpush1.msra.mxu0 0.0
        %1964 = vmatprep.subr.mxu0 0.0
        %1965 = vmatpush1.msra.mxu0 0.0
        %1966 = vmatprep.subr.mxu0 0.0
        %1967 = vmatpush1.msra.mxu0 0.0
        %1968 = vmatprep.mubr.f32.mxu0 0.0
        %1969 = vmatmul.mubr.f32.gmra.mrb[0].mxu0 %v1900
        %v1970 = vpop.f32.mrb[0].mxu0
        %v1971 = vadd.f32 0.0, %v1970
        %v1972 = vpop.f32.mrb[0].mxu0
        %1973 = vmatprep.mubr.f32.mxu0 0.0
        %1974 = vmatmul.mubr.f32.gmra.mrb[0].mxu0 %v1902
        %v1975 = vpop.f32.mrb[0].mxu0
        %v1976 = vadd.f32 0.0, %v1975
        %v1977 = vpop.f32.mrb[0].mxu0
        %1978 = vdwg.mxu0
        %s1979 = scalar_lea.vmem %s11, 64
        %v1980 = vld [vmem:[%s1979] sm:$0xff]
        %v1981 = vld [vmem:[%s1979 + $0x8] sm:$0xff]
        %v1982 = vld [vmem:[%s1979 + $0x10] sm:$0xff]
        %v1983 = vld [vmem:[%s1979 + $0x18] sm:$0xff]
        %v1984 = vld [vmem:[%s1979 + $0x20] sm:$0xff]
        %v1985 = vld [vmem:[%s1979 + $0x28] sm:$0xff]
        %v1986 = vld [vmem:[%s1979 + $0x30] sm:$0xff]
        %v1987 = vld [vmem:[%s1979 + $0x38] sm:$0xff]
        %1988 = vmatprep.subr.mxu0 0.0
        %1989 = vmatpush1.msra.mxu0 %v1980
        %1990 = vmatprep.subr.mxu0 0.0
        %1991 = vmatpush1.msra.mxu0 %v1981
        %1992 = vmatprep.subr.mxu0 0.0
        %1993 = vmatpush1.msra.mxu0 %v1982
        %1994 = vmatprep.subr.mxu0 0.0
        %1995 = vmatpush1.msra.mxu0 %v1983
        %1996 = vmatprep.subr.mxu0 0.0
        %1997 = vmatpush1.msra.mxu0 %v1984
        %1998 = vmatprep.subr.mxu0 0.0
        %1999 = vmatpush1.msra.mxu0 %v1985
        %2000 = vmatprep.subr.mxu0 0.0
        %2001 = vmatpush1.msra.mxu0 %v1986
        %2002 = vmatprep.subr.mxu0 0.0
        %2003 = vmatpush1.msra.mxu0 %v1987
        %2004 = vmatprep.subr.mxu0 0.0
        %2005 = vmatpush1.msra.mxu0 0.0
        %2006 = vmatprep.subr.mxu0 0.0
        %2007 = vmatpush1.msra.mxu0 0.0
        %2008 = vmatprep.subr.mxu0 0.0
        %2009 = vmatpush1.msra.mxu0 0.0
        %2010 = vmatprep.subr.mxu0 0.0
        %2011 = vmatpush1.msra.mxu0 0.0
        %2012 = vmatprep.subr.mxu0 0.0
        %2013 = vmatpush1.msra.mxu0 0.0
        %2014 = vmatprep.subr.mxu0 0.0
        %2015 = vmatpush1.msra.mxu0 0.0
        %2016 = vmatprep.subr.mxu0 0.0
        %2017 = vmatpush1.msra.mxu0 0.0
        %2018 = vmatprep.subr.mxu0 0.0
        %2019 = vmatpush1.msra.mxu0 0.0
        %2020 = vmatprep.subr.mxu0 0.0
        %2021 = vmatpush1.msra.mxu0 0.0
        %2022 = vmatprep.subr.mxu0 0.0
        %2023 = vmatpush1.msra.mxu0 0.0
        %2024 = vmatprep.subr.mxu0 0.0
        %2025 = vmatpush1.msra.mxu0 0.0
        %2026 = vmatprep.subr.mxu0 0.0
        %2027 = vmatpush1.msra.mxu0 0.0
        %2028 = vmatprep.subr.mxu0 0.0
        %2029 = vmatpush1.msra.mxu0 0.0
        %2030 = vmatprep.subr.mxu0 0.0
        %2031 = vmatpush1.msra.mxu0 0.0
        %2032 = vmatprep.subr.mxu0 0.0
        %2033 = vmatpush1.msra.mxu0 0.0
        %2034 = vmatprep.subr.mxu0 0.0
        %2035 = vmatpush1.msra.mxu0 0.0
        %2036 = vmatprep.subr.mxu0 0.0
        %2037 = vmatpush1.msra.mxu0 0.0
        %2038 = vmatprep.subr.mxu0 0.0
        %2039 = vmatpush1.msra.mxu0 0.0
        %2040 = vmatprep.subr.mxu0 0.0
        %2041 = vmatpush1.msra.mxu0 0.0
        %2042 = vmatprep.subr.mxu0 0.0
        %2043 = vmatpush1.msra.mxu0 0.0
        %2044 = vmatprep.subr.mxu0 0.0
        %2045 = vmatpush1.msra.mxu0 0.0
        %2046 = vmatprep.subr.mxu0 0.0
        %2047 = vmatpush1.msra.mxu0 0.0
        %2048 = vmatprep.subr.mxu0 0.0
        %2049 = vmatpush1.msra.mxu0 0.0
        %2050 = vmatprep.subr.mxu0 0.0
        %2051 = vmatpush1.msra.mxu0 0.0
        %2052 = vmatprep.mubr.f32.mxu0 0.0
        %2053 = vmatmul.mubr.f32.gmra.mrb[0].mxu0 %v1819
        %v2054 = vpop.f32.mrb[0].mxu0
        %v2055 = vadd.f32 0.0, %v2054
        %v2056 = vpop.f32.mrb[0].mxu0
        %2057 = vmatprep.mubr.f32.mxu0 0.0
        %2058 = vmatmul.mubr.f32.gmra.mrb[0].mxu0 %v1822
        %v2059 = vpop.f32.mrb[0].mxu0
        %v2060 = vadd.f32 0.0, %v2059
        %v2061 = vpop.f32.mrb[0].mxu0
        %2062 = vdwg.mxu0
        %2063 = vmatprep.subr.mxu0 0.0
        %2064 = vmatpush1.msra.mxu0 %v1980
        %2065 = vmatprep.subr.mxu0 0.0
        %2066 = vmatpush1.msra.mxu0 %v1981
        %2067 = vmatprep.subr.mxu0 0.0
        %2068 = vmatpush1.msra.mxu0 %v1982
        %2069 = vmatprep.subr.mxu0 0.0
        %2070 = vmatpush1.msra.mxu0 %v1983
        %2071 = vmatprep.subr.mxu0 0.0
        %2072 = vmatpush1.msra.mxu0 %v1984
        %2073 = vmatprep.subr.mxu0 0.0
        %2074 = vmatpush1.msra.mxu0 %v1985
        %2075 = vmatprep.subr.mxu0 0.0
        %2076 = vmatpush1.msra.mxu0 %v1986
        %2077 = vmatprep.subr.mxu0 0.0
        %2078 = vmatpush1.msra.mxu0 %v1987
        %2079 = vmatprep.subr.mxu0 0.0
        %2080 = vmatpush1.msra.mxu0 0.0
        %2081 = vmatprep.subr.mxu0 0.0
        %2082 = vmatpush1.msra.mxu0 0.0
        %2083 = vmatprep.subr.mxu0 0.0
        %2084 = vmatpush1.msra.mxu0 0.0
        %2085 = vmatprep.subr.mxu0 0.0
        %2086 = vmatpush1.msra.mxu0 0.0
        %2087 = vmatprep.subr.mxu0 0.0
        %2088 = vmatpush1.msra.mxu0 0.0
        %2089 = vmatprep.subr.mxu0 0.0
        %2090 = vmatpush1.msra.mxu0 0.0
        %2091 = vmatprep.subr.mxu0 0.0
        %2092 = vmatpush1.msra.mxu0 0.0
        %2093 = vmatprep.subr.mxu0 0.0
        %2094 = vmatpush1.msra.mxu0 0.0
        %2095 = vmatprep.subr.mxu0 0.0
        %2096 = vmatpush1.msra.mxu0 0.0
        %2097 = vmatprep.subr.mxu0 0.0
        %2098 = vmatpush1.msra.mxu0 0.0
        %2099 = vmatprep.subr.mxu0 0.0
        %2100 = vmatpush1.msra.mxu0 0.0
        %2101 = vmatprep.subr.mxu0 0.0
        %2102 = vmatpush1.msra.mxu0 0.0
        %2103 = vmatprep.subr.mxu0 0.0
        %2104 = vmatpush1.msra.mxu0 0.0
        %2105 = vmatprep.subr.mxu0 0.0
        %2106 = vmatpush1.msra.mxu0 0.0
        %2107 = vmatprep.subr.mxu0 0.0
        %2108 = vmatpush1.msra.mxu0 0.0
        %2109 = vmatprep.subr.mxu0 0.0
        %2110 = vmatpush1.msra.mxu0 0.0
        %2111 = vmatprep.subr.mxu0 0.0
        %2112 = vmatpush1.msra.mxu0 0.0
        %2113 = vmatprep.subr.mxu0 0.0
        %2114 = vmatpush1.msra.mxu0 0.0
        %2115 = vmatprep.subr.mxu0 0.0
        %2116 = vmatpush1.msra.mxu0 0.0
        %2117 = vmatprep.subr.mxu0 0.0
        %2118 = vmatpush1.msra.mxu0 0.0
        %2119 = vmatprep.subr.mxu0 0.0
        %2120 = vmatpush1.msra.mxu0 0.0
        %2121 = vmatprep.subr.mxu0 0.0
        %2122 = vmatpush1.msra.mxu0 0.0
        %2123 = vmatprep.subr.mxu0 0.0
        %2124 = vmatpush1.msra.mxu0 0.0
        %2125 = vmatprep.subr.mxu0 0.0
        %2126 = vmatpush1.msra.mxu0 0.0
        %2127 = vmatprep.mubr.f32.mxu0 0.0
        %2128 = vmatmul.mubr.f32.gmra.mrb[0].mxu0 %v1900
        %v2129 = vpop.f32.mrb[0].mxu0
        %v2130 = vadd.f32 0.0, %v2129
        %v2131 = vpop.f32.mrb[0].mxu0
        %2132 = vmatprep.mubr.f32.mxu0 0.0
        %2133 = vmatmul.mubr.f32.gmra.mrb[0].mxu0 %v1902
        %v2134 = vpop.f32.mrb[0].mxu0
        %v2135 = vadd.f32 0.0, %v2134
        %v2136 = vpop.f32.mrb[0].mxu0
        %2137 = vdwg.mxu0
        %2140 = vrot.lane.b32.xlu0 %v2055, 1
        %v2141 = vpop.permute.xlu0 %2140
        %2142 = vrot.lane.b32.xlu0 %v2060, 1
        %v2143 = vpop.permute.xlu0 %2142
        %v2146 = vsel %vm969, 0.0, %v2141
        %v2147 = vsel %vm969, 0.0, %v2143
        %v2148 = vld [vmem:[%s9] sm:$0xff]
        %v2149 = vld [vmem:[%s9 + $0x8] sm:$0xff]
        %v2150 = vld [vmem:[%s9 + $0x10] sm:$0xff]
        %v2151 = vld [vmem:[%s9 + $0x18] sm:$0xff]
        %s2152 = scalar_lea.vmem %s9, 32
        %v2153 = vld [vmem:[%s2152] sm:$0xff]
        %v2154 = vld [vmem:[%s2152 + $0x8] sm:$0xff]
        %v2155 = vld [vmem:[%s2152 + $0x10] sm:$0xff]
        %v2156 = vld [vmem:[%s2152 + $0x18] sm:$0xff]
        %vm2157 = vcmask 130048
        %v2159 = vsel %vm2157, %v2153, 0
        %v2162 = vsel %vm2157, %v2154, 0
        %v2165 = vsel %vm2157, %v2155, 0
        %v2168 = vsel %vm2157, %v2156, 0
        %2170 = vmatprep.subr.mxu0 0.0
        %2171 = vmatpush1.msra.mxu0 %v1891
        %2172 = vmatprep.subr.mxu0 0.0
        %2173 = vmatpush1.msra.mxu0 %v1896
        %2174 = vmatprep.subr.mxu0 0.0
        %2175 = vmatpush1.msra.mxu0 0.0
        %2176 = vmatprep.subr.mxu0 0.0
        %2177 = vmatpush1.msra.mxu0 0.0
        %2178 = vmatprep.subr.mxu0 0.0
        %2179 = vmatpush1.msra.mxu0 0.0
        %2180 = vmatprep.subr.mxu0 0.0
        %2181 = vmatpush1.msra.mxu0 0.0
        %2182 = vmatprep.subr.mxu0 0.0
        %2183 = vmatpush1.msra.mxu0 0.0
        %2184 = vmatprep.subr.mxu0 0.0
        %2185 = vmatpush1.msra.mxu0 0.0
        %2186 = vmatprep.subr.mxu0 0.0
        %2187 = vmatpush1.msra.mxu0 0.0
        %2188 = vmatprep.subr.mxu0 0.0
        %2189 = vmatpush1.msra.mxu0 0.0
        %2190 = vmatprep.subr.mxu0 0.0
        %2191 = vmatpush1.msra.mxu0 0.0
        %2192 = vmatprep.subr.mxu0 0.0
        %2193 = vmatpush1.msra.mxu0 0.0
        %2194 = vmatprep.subr.mxu0 0.0
        %2195 = vmatpush1.msra.mxu0 0.0
        %2196 = vmatprep.subr.mxu0 0.0
        %2197 = vmatpush1.msra.mxu0 0.0
        %2198 = vmatprep.subr.mxu0 0.0
        %2199 = vmatpush1.msra.mxu0 0.0
        %2200 = vmatprep.subr.mxu0 0.0
        %2201 = vmatpush1.msra.mxu0 0.0
        %2202 = vmatprep.subr.mxu0 0.0
        %2203 = vmatpush1.msra.mxu0 0.0
        %2204 = vmatprep.subr.mxu0 0.0
        %2205 = vmatpush1.msra.mxu0 0.0
        %2206 = vmatprep.subr.mxu0 0.0
        %2207 = vmatpush1.msra.mxu0 0.0
        %2208 = vmatprep.subr.mxu0 0.0
        %2209 = vmatpush1.msra.mxu0 0.0
        %2210 = vmatprep.subr.mxu0 0.0
        %2211 = vmatpush1.msra.mxu0 0.0
        %2212 = vmatprep.subr.mxu0 0.0
        %2213 = vmatpush1.msra.mxu0 0.0
        %2214 = vmatprep.subr.mxu0 0.0
        %2215 = vmatpush1.msra.mxu0 0.0
        %2216 = vmatprep.subr.mxu0 0.0
        %2217 = vmatpush1.msra.mxu0 0.0
        %2218 = vmatprep.subr.mxu0 0.0
        %2219 = vmatpush1.msra.mxu0 0.0
        %2220 = vmatprep.subr.mxu0 0.0
        %2221 = vmatpush1.msra.mxu0 0.0
        %2222 = vmatprep.subr.mxu0 0.0
        %2223 = vmatpush1.msra.mxu0 0.0
        %2224 = vmatprep.subr.mxu0 0.0
        %2225 = vmatpush1.msra.mxu0 0.0
        %2226 = vmatprep.subr.mxu0 0.0
        %2227 = vmatpush1.msra.mxu0 0.0
        %2228 = vmatprep.subr.mxu0 0.0
        %2229 = vmatpush1.msra.mxu0 0.0
        %2230 = vmatprep.subr.mxu0 0.0
        %2231 = vmatpush1.msra.mxu0 0.0
        %2232 = vmatprep.subr.mxu0 0.0
        %2233 = vmatpush1.msra.mxu0 0.0
        %2234 = vmatprep.mubr.f32.mxu0 0.0
        %2235 = vmatmul.mubr.f32.gmra.mrb[0].mxu0 %v2159
        %v2236 = vpop.f32.mrb[0].mxu0
        %v2237 = vadd.f32 0.0, %v2236
        %v2238 = vpop.f32.mrb[0].mxu0
        %2239 = vmatprep.mubr.f32.mxu0 0.0
        %2240 = vmatmul.mubr.f32.gmra.mrb[0].mxu0 %v2162
        %v2241 = vpop.f32.mrb[0].mxu0
        %v2242 = vadd.f32 0.0, %v2241
        %v2243 = vpop.f32.mrb[0].mxu0
        %2244 = vmatprep.mubr.f32.mxu0 0.0
        %2245 = vmatmul.mubr.f32.gmra.mrb[0].mxu0 %v2165
        %v2246 = vpop.f32.mrb[0].mxu0
        %v2247 = vadd.f32 0.0, %v2246
        %v2248 = vpop.f32.mrb[0].mxu0
        %2249 = vmatprep.mubr.f32.mxu0 0.0
        %2250 = vmatmul.mubr.f32.gmra.mrb[0].mxu0 %v2168
        %v2251 = vpop.f32.mrb[0].mxu0
        %v2252 = vadd.f32 0.0, %v2251
        %v2253 = vpop.f32.mrb[0].mxu0
        %2254 = vdwg.mxu0
        %v2256 = vsel %vm2157, %v2148, 0
        %v2259 = vsel %vm2157, %v2149, 0
        %v2262 = vsel %vm2157, %v2150, 0
        %v2265 = vsel %vm2157, %v2151, 0
        %2267 = vmatprep.subr.mxu0 0.0
        %2268 = vmatpush1.msra.mxu0 %v2146
        %2269 = vmatprep.subr.mxu0 0.0
        %2270 = vmatpush1.msra.mxu0 %v2147
        %2271 = vmatprep.subr.mxu0 0.0
        %2272 = vmatpush1.msra.mxu0 0.0
        %2273 = vmatprep.subr.mxu0 0.0
        %2274 = vmatpush1.msra.mxu0 0.0
        %2275 = vmatprep.subr.mxu0 0.0
        %2276 = vmatpush1.msra.mxu0 0.0
        %2277 = vmatprep.subr.mxu0 0.0
        %2278 = vmatpush1.msra.mxu0 0.0
        %2279 = vmatprep.subr.mxu0 0.0
        %2280 = vmatpush1.msra.mxu0 0.0
        %2281 = vmatprep.subr.mxu0 0.0
        %2282 = vmatpush1.msra.mxu0 0.0
        %2283 = vmatprep.subr.mxu0 0.0
        %2284 = vmatpush1.msra.mxu0 0.0
        %2285 = vmatprep.subr.mxu0 0.0
        %2286 = vmatpush1.msra.mxu0 0.0
        %2287 = vmatprep.subr.mxu0 0.0
        %2288 = vmatpush1.msra.mxu0 0.0
        %2289 = vmatprep.subr.mxu0 0.0
        %2290 = vmatpush1.msra.mxu0 0.0
        %2291 = vmatprep.subr.mxu0 0.0
        %2292 = vmatpush1.msra.mxu0 0.0
        %2293 = vmatprep.subr.mxu0 0.0
        %2294 = vmatpush1.msra.mxu0 0.0
        %2295 = vmatprep.subr.mxu0 0.0
        %2296 = vmatpush1.msra.mxu0 0.0
        %2297 = vmatprep.subr.mxu0 0.0
        %2298 = vmatpush1.msra.mxu0 0.0
        %2299 = vmatprep.subr.mxu0 0.0
        %2300 = vmatpush1.msra.mxu0 0.0
        %2301 = vmatprep.subr.mxu0 0.0
        %2302 = vmatpush1.msra.mxu0 0.0
        %2303 = vmatprep.subr.mxu0 0.0
        %2304 = vmatpush1.msra.mxu0 0.0
        %2305 = vmatprep.subr.mxu0 0.0
        %2306 = vmatpush1.msra.mxu0 0.0
        %2307 = vmatprep.subr.mxu0 0.0
        %2308 = vmatpush1.msra.mxu0 0.0
        %2309 = vmatprep.subr.mxu0 0.0
        %2310 = vmatpush1.msra.mxu0 0.0
        %2311 = vmatprep.subr.mxu0 0.0
        %2312 = vmatpush1.msra.mxu0 0.0
        %2313 = vmatprep.subr.mxu0 0.0
        %2314 = vmatpush1.msra.mxu0 0.0
        %2315 = vmatprep.subr.mxu0 0.0
        %2316 = vmatpush1.msra.mxu0 0.0
        %2317 = vmatprep.subr.mxu0 0.0
        %2318 = vmatpush1.msra.mxu0 0.0
        %2319 = vmatprep.subr.mxu0 0.0
        %2320 = vmatpush1.msra.mxu0 0.0
        %2321 = vmatprep.subr.mxu0 0.0
        %2322 = vmatpush1.msra.mxu0 0.0
        %2323 = vmatprep.subr.mxu0 0.0
        %2324 = vmatpush1.msra.mxu0 0.0
        %2325 = vmatprep.subr.mxu0 0.0
        %2326 = vmatpush1.msra.mxu0 0.0
        %2327 = vmatprep.subr.mxu0 0.0
        %2328 = vmatpush1.msra.mxu0 0.0
        %2329 = vmatprep.subr.mxu0 0.0
        %2330 = vmatpush1.msra.mxu0 0.0
        %2331 = vmatprep.mubr.f32.mxu0 0.0
        %2332 = vmatmul.mubr.f32.gmra.mrb[0].mxu0 %v2256
        %v2333 = vpop.f32.mrb[0].mxu0
        %v2334 = vadd.f32 %v2237, %v2333
        %v2335 = vpop.f32.mrb[0].mxu0
        %2336 = vmatprep.mubr.f32.mxu0 0.0
        %2337 = vmatmul.mubr.f32.gmra.mrb[0].mxu0 %v2259
        %v2338 = vpop.f32.mrb[0].mxu0
        %v2339 = vadd.f32 %v2242, %v2338
        %v2340 = vpop.f32.mrb[0].mxu0
        %2341 = vmatprep.mubr.f32.mxu0 0.0
        %2342 = vmatmul.mubr.f32.gmra.mrb[0].mxu0 %v2262
        %v2343 = vpop.f32.mrb[0].mxu0
        %v2344 = vadd.f32 %v2247, %v2343
        %v2345 = vpop.f32.mrb[0].mxu0
        %2346 = vmatprep.mubr.f32.mxu0 0.0
        %2347 = vmatmul.mubr.f32.gmra.mrb[0].mxu0 %v2265
        %v2348 = vpop.f32.mrb[0].mxu0
        %v2349 = vadd.f32 %v2252, %v2348
        %v2350 = vpop.f32.mrb[0].mxu0
        %2351 = vdwg.mxu0
        %s2352 = scalar_lea.vmem %s9, 64
        %v2353 = vld [vmem:[%s2352] sm:$0xff]
        %v2354 = vld [vmem:[%s2352 + $0x8] sm:$0xff]
        %v2355 = vld [vmem:[%s2352 + $0x10] sm:$0xff]
        %v2356 = vld [vmem:[%s2352 + $0x18] sm:$0xff]
        %v2358 = vsel %vm2157, %v2353, 0
        %v2361 = vsel %vm2157, %v2354, 0
        %v2364 = vsel %vm2157, %v2355, 0
        %v2367 = vsel %vm2157, %v2356, 0
        %2369 = vmatprep.subr.mxu0 0.0
        %2370 = vmatpush1.msra.mxu0 %v2055
        %2371 = vmatprep.subr.mxu0 0.0
        %2372 = vmatpush1.msra.mxu0 %v2060
        %2373 = vmatprep.subr.mxu0 0.0
        %2374 = vmatpush1.msra.mxu0 0.0
        %2375 = vmatprep.subr.mxu0 0.0
        %2376 = vmatpush1.msra.mxu0 0.0
        %2377 = vmatprep.subr.mxu0 0.0
        %2378 = vmatpush1.msra.mxu0 0.0
        %2379 = vmatprep.subr.mxu0 0.0
        %2380 = vmatpush1.msra.mxu0 0.0
        %2381 = vmatprep.subr.mxu0 0.0
        %2382 = vmatpush1.msra.mxu0 0.0
        %2383 = vmatprep.subr.mxu0 0.0
        %2384 = vmatpush1.msra.mxu0 0.0
        %2385 = vmatprep.subr.mxu0 0.0
        %2386 = vmatpush1.msra.mxu0 0.0
        %2387 = vmatprep.subr.mxu0 0.0
        %2388 = vmatpush1.msra.mxu0 0.0
        %2389 = vmatprep.subr.mxu0 0.0
        %2390 = vmatpush1.msra.mxu0 0.0
        %2391 = vmatprep.subr.mxu0 0.0
        %2392 = vmatpush1.msra.mxu0 0.0
        %2393 = vmatprep.subr.mxu0 0.0
        %2394 = vmatpush1.msra.mxu0 0.0
        %2395 = vmatprep.subr.mxu0 0.0
        %2396 = vmatpush1.msra.mxu0 0.0
        %2397 = vmatprep.subr.mxu0 0.0
        %2398 = vmatpush1.msra.mxu0 0.0
        %2399 = vmatprep.subr.mxu0 0.0
        %2400 = vmatpush1.msra.mxu0 0.0
        %2401 = vmatprep.subr.mxu0 0.0
        %2402 = vmatpush1.msra.mxu0 0.0
        %2403 = vmatprep.subr.mxu0 0.0
        %2404 = vmatpush1.msra.mxu0 0.0
        %2405 = vmatprep.subr.mxu0 0.0
        %2406 = vmatpush1.msra.mxu0 0.0
        %2407 = vmatprep.subr.mxu0 0.0
        %2408 = vmatpush1.msra.mxu0 0.0
        %2409 = vmatprep.subr.mxu0 0.0
        %2410 = vmatpush1.msra.mxu0 0.0
        %2411 = vmatprep.subr.mxu0 0.0
        %2412 = vmatpush1.msra.mxu0 0.0
        %2413 = vmatprep.subr.mxu0 0.0
        %2414 = vmatpush1.msra.mxu0 0.0
        %2415 = vmatprep.subr.mxu0 0.0
        %2416 = vmatpush1.msra.mxu0 0.0
        %2417 = vmatprep.subr.mxu0 0.0
        %2418 = vmatpush1.msra.mxu0 0.0
        %2419 = vmatprep.subr.mxu0 0.0
        %2420 = vmatpush1.msra.mxu0 0.0
        %2421 = vmatprep.subr.mxu0 0.0
        %2422 = vmatpush1.msra.mxu0 0.0
        %2423 = vmatprep.subr.mxu0 0.0
        %2424 = vmatpush1.msra.mxu0 0.0
        %2425 = vmatprep.subr.mxu0 0.0
        %2426 = vmatpush1.msra.mxu0 0.0
        %2427 = vmatprep.subr.mxu0 0.0
        %2428 = vmatpush1.msra.mxu0 0.0
        %2429 = vmatprep.subr.mxu0 0.0
        %2430 = vmatpush1.msra.mxu0 0.0
        %2431 = vmatprep.subr.mxu0 0.0
        %2432 = vmatpush1.msra.mxu0 0.0
        %2433 = vmatprep.mubr.f32.mxu0 0.0
        %2434 = vmatmul.mubr.f32.gmra.mrb[0].mxu0 %v2358
        %v2435 = vpop.f32.mrb[0].mxu0
        %v2436 = vadd.f32 0.0, %v2435
        %v2437 = vpop.f32.mrb[0].mxu0
        %2438 = vmatprep.mubr.f32.mxu0 0.0
        %2439 = vmatmul.mubr.f32.gmra.mrb[0].mxu0 %v2361
        %v2440 = vpop.f32.mrb[0].mxu0
        %v2441 = vadd.f32 0.0, %v2440
        %v2442 = vpop.f32.mrb[0].mxu0
        %2443 = vmatprep.mubr.f32.mxu0 0.0
        %2444 = vmatmul.mubr.f32.gmra.mrb[0].mxu0 %v2364
        %v2445 = vpop.f32.mrb[0].mxu0
        %v2446 = vadd.f32 0.0, %v2445
        %v2447 = vpop.f32.mrb[0].mxu0
        %2448 = vmatprep.mubr.f32.mxu0 0.0
        %2449 = vmatmul.mubr.f32.gmra.mrb[0].mxu0 %v2367
        %v2450 = vpop.f32.mrb[0].mxu0
        %v2451 = vadd.f32 0.0, %v2450
        %v2452 = vpop.f32.mrb[0].mxu0
        %2453 = vdwg.mxu0
        %v2454 = vadd.f32 %v2334, %v2436
        %v2455 = vadd.f32 %v2339, %v2441
        %v2456 = vadd.f32 %v2344, %v2446
        %v2457 = vadd.f32 %v2349, %v2451
        %v2458 = vld [vmem:[%s10] sm:$0xff]
        %v2459 = vld [vmem:[%s10 + $0x8] sm:$0xff]
        %v2460 = vld [vmem:[%s10 + $0x10] sm:$0xff]
        %v2461 = vld [vmem:[%s10 + $0x18] sm:$0xff]
        %2463 = vset.pattern.permute.xlu0 0
        %2464 = vperm.xlu0 %2463, %v2458
        %v2465 = vpop.permute.xlu0 %2464
        %2468 = vset.pattern.permute.xlu0 0
        %2469 = vperm.xlu0 %2468, %v2459
        %v2470 = vpop.permute.xlu0 %2469
        %2473 = vset.pattern.permute.xlu0 0
        %2474 = vperm.xlu0 %2473, %v2460
        %v2475 = vpop.permute.xlu0 %2474
        %2478 = vset.pattern.permute.xlu0 0
        %2479 = vperm.xlu0 %2478, %v2461
        %v2480 = vpop.permute.xlu0 %2479
        %v2482 = vadd.f32 %v2454, %v2465
        %v2483 = vadd.f32 %v2455, %v2470
        %v2484 = vadd.f32 %v2456, %v2475
        %v2485 = vadd.f32 %v2457, %v2480
        %v2486 = vadd.f32 %v1971, %v2482
        %v2487 = vadd.f32 %v1976, %v2483
        %v2488 = vadd.f32 %v2130, %v2484
        %v2489 = vadd.f32 %v2135, %v2485
        %2496 = vrot.lane.b32.xlu0 %v1891, 1
        %v2497 = vpop.permute.xlu0 %2496
        %2498 = vrot.lane.b32.xlu0 %v1896, 1
        %v2499 = vpop.permute.xlu0 %2498
        %2500 = vrot.lane.b32.xlu0 %v2486, 1
        %v2501 = vpop.permute.xlu0 %2500
        %2502 = vrot.lane.b32.xlu0 %v2487, 1
        %v2503 = vpop.permute.xlu0 %2502
        %2504 = vrot.lane.b32.xlu0 %v2488, 1
        %v2505 = vpop.permute.xlu0 %2504
        %2506 = vrot.lane.b32.xlu0 %v2489, 1
        %v2507 = vpop.permute.xlu0 %2506
        %v2514 = vsel %vm969, 0.0, %v2497
        %v2515 = vsel %vm969, 0.0, %v2499
        %v2516 = vsel %vm969, 0.0, %v2501
        %v2517 = vsel %vm969, 0.0, %v2503
        %v2518 = vsel %vm969, 0.0, %v2505
        %v2519 = vsel %vm969, 0.0, %v2507
        %v2520 = vld [vmem:[%s13] sm:$0xff]
        %v2521 = vld [vmem:[%s13 + $0x8] sm:$0xff]
        %v2522 = vld [vmem:[%s13 + $0x10] sm:$0xff]
        %v2523 = vld [vmem:[%s13 + $0x18] sm:$0xff]
        %v2524 = vld [vmem:[%s13 + $0x20] sm:$0xff]
        %v2525 = vld [vmem:[%s13 + $0x28] sm:$0xff]
        %v2526 = vld [vmem:[%s13 + $0x30] sm:$0xff]
        %v2527 = vld [vmem:[%s13 + $0x38] sm:$0xff]
        %s2528 = scalar_lea.vmem %s13, 64
        %v2529 = vld [vmem:[%s2528] sm:$0xff]
        %v2530 = vld [vmem:[%s2528 + $0x8] sm:$0xff]
        %v2531 = vld [vmem:[%s2528 + $0x10] sm:$0xff]
        %v2532 = vld [vmem:[%s2528 + $0x18] sm:$0xff]
        %v2533 = vld [vmem:[%s2528 + $0x20] sm:$0xff]
        %v2534 = vld [vmem:[%s2528 + $0x28] sm:$0xff]
        %v2535 = vld [vmem:[%s2528 + $0x30] sm:$0xff]
        %v2536 = vld [vmem:[%s2528 + $0x38] sm:$0xff]
        %v2538 = vsel %vm1817, %v2529, 0
        %v2541 = vsel %vm1817, %v2530, 0
        %v2544 = vsel %vm1817, %v2531, 0
        %v2547 = vsel %vm1817, %v2532, 0
        %v2550 = vsel %vm1817, %v2533, 0
        %v2553 = vsel %vm1817, %v2534, 0
        %v2556 = vsel %vm1817, %v2535, 0
        %v2559 = vsel %vm1817, %v2536, 0
        %2561 = vmatprep.subr.mxu0 0.0
        %2562 = vmatpush1.msra.mxu0 %v1891
        %2563 = vmatprep.subr.mxu0 0.0
        %2564 = vmatpush1.msra.mxu0 %v1896
        %2565 = vmatprep.subr.mxu0 0.0
        %2566 = vmatpush1.msra.mxu0 %v2055
        %2567 = vmatprep.subr.mxu0 0.0
        %2568 = vmatpush1.msra.mxu0 %v2060
        %2569 = vmatprep.subr.mxu0 0.0
        %2570 = vmatpush1.msra.mxu0 %v2486
        %2571 = vmatprep.subr.mxu0 0.0
        %2572 = vmatpush1.msra.mxu0 %v2487
        %2573 = vmatprep.subr.mxu0 0.0
        %2574 = vmatpush1.msra.mxu0 %v2488
        %2575 = vmatprep.subr.mxu0 0.0
        %2576 = vmatpush1.msra.mxu0 %v2489
        %2577 = vmatprep.subr.mxu0 0.0
        %2578 = vmatpush1.msra.mxu0 0.0
        %2579 = vmatprep.subr.mxu0 0.0
        %2580 = vmatpush1.msra.mxu0 0.0
        %2581 = vmatprep.subr.mxu0 0.0
        %2582 = vmatpush1.msra.mxu0 0.0
        %2583 = vmatprep.subr.mxu0 0.0
        %2584 = vmatpush1.msra.mxu0 0.0
        %2585 = vmatprep.subr.mxu0 0.0
        %2586 = vmatpush1.msra.mxu0 0.0
        %2587 = vmatprep.subr.mxu0 0.0
        %2588 = vmatpush1.msra.mxu0 0.0
        %2589 = vmatprep.subr.mxu0 0.0
        %2590 = vmatpush1.msra.mxu0 0.0
        %2591 = vmatprep.subr.mxu0 0.0
        %2592 = vmatpush1.msra.mxu0 0.0
        %2593 = vmatprep.subr.mxu0 0.0
        %2594 = vmatpush1.msra.mxu0 0.0
        %2595 = vmatprep.subr.mxu0 0.0
        %2596 = vmatpush1.msra.mxu0 0.0
        %2597 = vmatprep.subr.mxu0 0.0
        %2598 = vmatpush1.msra.mxu0 0.0
        %2599 = vmatprep.subr.mxu0 0.0
        %2600 = vmatpush1.msra.mxu0 0.0
        %2601 = vmatprep.subr.mxu0 0.0
        %2602 = vmatpush1.msra.mxu0 0.0
        %2603 = vmatprep.subr.mxu0 0.0
        %2604 = vmatpush1.msra.mxu0 0.0
        %2605 = vmatprep.subr.mxu0 0.0
        %2606 = vmatpush1.msra.mxu0 0.0
        %2607 = vmatprep.subr.mxu0 0.0
        %2608 = vmatpush1.msra.mxu0 0.0
        %2609 = vmatprep.subr.mxu0 0.0
        %2610 = vmatpush1.msra.mxu0 0.0
        %2611 = vmatprep.subr.mxu0 0.0
        %2612 = vmatpush1.msra.mxu0 0.0
        %2613 = vmatprep.subr.mxu0 0.0
        %2614 = vmatpush1.msra.mxu0 0.0
        %2615 = vmatprep.subr.mxu0 0.0
        %2616 = vmatpush1.msra.mxu0 0.0
        %2617 = vmatprep.subr.mxu0 0.0
        %2618 = vmatpush1.msra.mxu0 0.0
        %2619 = vmatprep.subr.mxu0 0.0
        %2620 = vmatpush1.msra.mxu0 0.0
        %2621 = vmatprep.subr.mxu0 0.0
        %2622 = vmatpush1.msra.mxu0 0.0
        %2623 = vmatprep.subr.mxu0 0.0
        %2624 = vmatpush1.msra.mxu0 0.0
        %2625 = vmatprep.mubr.f32.mxu0 0.0
        %2626 = vmatmul.mubr.f32.gmra.mrb[0].mxu0 %v2538
        %v2627 = vpop.f32.mrb[0].mxu0
        %v2628 = vadd.f32 0.0, %v2627
        %v2629 = vpop.f32.mrb[0].mxu0
        %2630 = vmatprep.mubr.f32.mxu0 0.0
        %2631 = vmatmul.mubr.f32.gmra.mrb[0].mxu0 %v2541
        %v2632 = vpop.f32.mrb[0].mxu0
        %v2633 = vadd.f32 0.0, %v2632
        %v2634 = vpop.f32.mrb[0].mxu0
        %2635 = vmatprep.mubr.f32.mxu0 0.0
        %2636 = vmatmul.mubr.f32.gmra.mrb[0].mxu0 %v2544
        %v2637 = vpop.f32.mrb[0].mxu0
        %v2638 = vadd.f32 0.0, %v2637
        %v2639 = vpop.f32.mrb[0].mxu0
        %2640 = vmatprep.mubr.f32.mxu0 0.0
        %2641 = vmatmul.mubr.f32.gmra.mrb[0].mxu0 %v2547
        %v2642 = vpop.f32.mrb[0].mxu0
        %v2643 = vadd.f32 0.0, %v2642
        %v2644 = vpop.f32.mrb[0].mxu0
        %2645 = vmatprep.mubr.f32.mxu0 0.0
        %2646 = vmatmul.mubr.f32.gmra.mrb[0].mxu0 %v2550
        %v2647 = vpop.f32.mrb[0].mxu0
        %v2648 = vadd.f32 0.0, %v2647
        %v2649 = vpop.f32.mrb[0].mxu0
        %2650 = vmatprep.mubr.f32.mxu0 0.0
        %2651 = vmatmul.mubr.f32.gmra.mrb[0].mxu0 %v2553
        %v2652 = vpop.f32.mrb[0].mxu0
        %v2653 = vadd.f32 0.0, %v2652
        %v2654 = vpop.f32.mrb[0].mxu0
        %2655 = vmatprep.mubr.f32.mxu0 0.0
        %2656 = vmatmul.mubr.f32.gmra.mrb[0].mxu0 %v2556
        %v2657 = vpop.f32.mrb[0].mxu0
        %v2658 = vadd.f32 0.0, %v2657
        %v2659 = vpop.f32.mrb[0].mxu0
        %2660 = vmatprep.mubr.f32.mxu0 0.0
        %2661 = vmatmul.mubr.f32.gmra.mrb[0].mxu0 %v2559
        %v2662 = vpop.f32.mrb[0].mxu0
        %v2663 = vadd.f32 0.0, %v2662
        %v2664 = vpop.f32.mrb[0].mxu0
        %2665 = vdwg.mxu0
        %v2667 = vsel %vm1817, %v2520, 0
        %v2670 = vsel %vm1817, %v2521, 0
        %v2673 = vsel %vm1817, %v2522, 0
        %v2676 = vsel %vm1817, %v2523, 0
        %v2679 = vsel %vm1817, %v2524, 0
        %v2682 = vsel %vm1817, %v2525, 0
        %v2685 = vsel %vm1817, %v2526, 0
        %v2688 = vsel %vm1817, %v2527, 0
        %2690 = vmatprep.subr.mxu0 0.0
        %2691 = vmatpush1.msra.mxu0 %v2514
        %2692 = vmatprep.subr.mxu0 0.0
        %2693 = vmatpush1.msra.mxu0 %v2515
        %2694 = vmatprep.subr.mxu0 0.0
        %2695 = vmatpush1.msra.mxu0 %v2146
        %2696 = vmatprep.subr.mxu0 0.0
        %2697 = vmatpush1.msra.mxu0 %v2147
        %2698 = vmatprep.subr.mxu0 0.0
        %2699 = vmatpush1.msra.mxu0 %v2516
        %2700 = vmatprep.subr.mxu0 0.0
        %2701 = vmatpush1.msra.mxu0 %v2517
        %2702 = vmatprep.subr.mxu0 0.0
        %2703 = vmatpush1.msra.mxu0 %v2518
        %2704 = vmatprep.subr.mxu0 0.0
        %2705 = vmatpush1.msra.mxu0 %v2519
        %2706 = vmatprep.subr.mxu0 0.0
        %2707 = vmatpush1.msra.mxu0 0.0
        %2708 = vmatprep.subr.mxu0 0.0
        %2709 = vmatpush1.msra.mxu0 0.0
        %2710 = vmatprep.subr.mxu0 0.0
        %2711 = vmatpush1.msra.mxu0 0.0
        %2712 = vmatprep.subr.mxu0 0.0
        %2713 = vmatpush1.msra.mxu0 0.0
        %2714 = vmatprep.subr.mxu0 0.0
        %2715 = vmatpush1.msra.mxu0 0.0
        %2716 = vmatprep.subr.mxu0 0.0
        %2717 = vmatpush1.msra.mxu0 0.0
        %2718 = vmatprep.subr.mxu0 0.0
        %2719 = vmatpush1.msra.mxu0 0.0
        %2720 = vmatprep.subr.mxu0 0.0
        %2721 = vmatpush1.msra.mxu0 0.0
        %2722 = vmatprep.subr.mxu0 0.0
        %2723 = vmatpush1.msra.mxu0 0.0
        %2724 = vmatprep.subr.mxu0 0.0
        %2725 = vmatpush1.msra.mxu0 0.0
        %2726 = vmatprep.subr.mxu0 0.0
        %2727 = vmatpush1.msra.mxu0 0.0
        %2728 = vmatprep.subr.mxu0 0.0
        %2729 = vmatpush1.msra.mxu0 0.0
        %2730 = vmatprep.subr.mxu0 0.0
        %2731 = vmatpush1.msra.mxu0 0.0
        %2732 = vmatprep.subr.mxu0 0.0
        %2733 = vmatpush1.msra.mxu0 0.0
        %2734 = vmatprep.subr.mxu0 0.0
        %2735 = vmatpush1.msra.mxu0 0.0
        %2736 = vmatprep.subr.mxu0 0.0
        %2737 = vmatpush1.msra.mxu0 0.0
        %2738 = vmatprep.subr.mxu0 0.0
        %2739 = vmatpush1.msra.mxu0 0.0
        %2740 = vmatprep.subr.mxu0 0.0
        %2741 = vmatpush1.msra.mxu0 0.0
        %2742 = vmatprep.subr.mxu0 0.0
        %2743 = vmatpush1.msra.mxu0 0.0
        %2744 = vmatprep.subr.mxu0 0.0
        %2745 = vmatpush1.msra.mxu0 0.0
        %2746 = vmatprep.subr.mxu0 0.0
        %2747 = vmatpush1.msra.mxu0 0.0
        %2748 = vmatprep.subr.mxu0 0.0
        %2749 = vmatpush1.msra.mxu0 0.0
        %2750 = vmatprep.subr.mxu0 0.0
        %2751 = vmatpush1.msra.mxu0 0.0
        %2752 = vmatprep.subr.mxu0 0.0
        %2753 = vmatpush1.msra.mxu0 0.0
        %2754 = vmatprep.mubr.f32.mxu0 0.0
        %2755 = vmatmul.mubr.f32.gmra.mrb[0].mxu0 %v2667
        %v2756 = vpop.f32.mrb[0].mxu0
        %v2757 = vadd.f32 %v2628, %v2756
        %v2758 = vpop.f32.mrb[0].mxu0
        %2759 = vmatprep.mubr.f32.mxu0 0.0
        %2760 = vmatmul.mubr.f32.gmra.mrb[0].mxu0 %v2670
        %v2761 = vpop.f32.mrb[0].mxu0
        %v2762 = vadd.f32 %v2633, %v2761
        %v2763 = vpop.f32.mrb[0].mxu0
        %2764 = vmatprep.mubr.f32.mxu0 0.0
        %2765 = vmatmul.mubr.f32.gmra.mrb[0].mxu0 %v2673
        %v2766 = vpop.f32.mrb[0].mxu0
        %v2767 = vadd.f32 %v2638, %v2766
        %v2768 = vpop.f32.mrb[0].mxu0
        %2769 = vmatprep.mubr.f32.mxu0 0.0
        %2770 = vmatmul.mubr.f32.gmra.mrb[0].mxu0 %v2676
        %v2771 = vpop.f32.mrb[0].mxu0
        %v2772 = vadd.f32 %v2643, %v2771
        %v2773 = vpop.f32.mrb[0].mxu0
        %2774 = vmatprep.mubr.f32.mxu0 0.0
        %2775 = vmatmul.mubr.f32.gmra.mrb[0].mxu0 %v2679
        %v2776 = vpop.f32.mrb[0].mxu0
        %v2777 = vadd.f32 %v2648, %v2776
        %v2778 = vpop.f32.mrb[0].mxu0
        %2779 = vmatprep.mubr.f32.mxu0 0.0
        %2780 = vmatmul.mubr.f32.gmra.mrb[0].mxu0 %v2682
        %v2781 = vpop.f32.mrb[0].mxu0
        %v2782 = vadd.f32 %v2653, %v2781
        %v2783 = vpop.f32.mrb[0].mxu0
        %2784 = vmatprep.mubr.f32.mxu0 0.0
        %2785 = vmatmul.mubr.f32.gmra.mrb[0].mxu0 %v2685
        %v2786 = vpop.f32.mrb[0].mxu0
        %v2787 = vadd.f32 %v2658, %v2786
        %v2788 = vpop.f32.mrb[0].mxu0
        %2789 = vmatprep.mubr.f32.mxu0 0.0
        %2790 = vmatmul.mubr.f32.gmra.mrb[0].mxu0 %v2688
        %v2791 = vpop.f32.mrb[0].mxu0
        %v2792 = vadd.f32 %v2663, %v2791
        %v2793 = vpop.f32.mrb[0].mxu0
        %2794 = vdwg.mxu0
        %2795 = vrot.lane.b32.xlu0 %v1891, 127
        %v2796 = vpop.permute.xlu0 %2795
        %2797 = vrot.lane.b32.xlu0 %v1896, 127
        %v2798 = vpop.permute.xlu0 %2797
        %2799 = vrot.lane.b32.xlu0 %v2055, 127
        %v2800 = vpop.permute.xlu0 %2799
        %2801 = vrot.lane.b32.xlu0 %v2060, 127
        %v2802 = vpop.permute.xlu0 %2801
        %2803 = vrot.lane.b32.xlu0 %v2486, 127
        %v2804 = vpop.permute.xlu0 %2803
        %2805 = vrot.lane.b32.xlu0 %v2487, 127
        %v2806 = vpop.permute.xlu0 %2805
        %2807 = vrot.lane.b32.xlu0 %v2488, 127
        %v2808 = vpop.permute.xlu0 %2807
        %2809 = vrot.lane.b32.xlu0 %v2489, 127
        %v2810 = vpop.permute.xlu0 %2809
        %vm2819 = vcmask 252928
        %v2820 = vsel %vm2819, %v2796, 0.0
        %v2821 = vsel %vm2819, %v2798, 0.0
        %v2822 = vsel %vm2819, %v2800, 0.0
        %v2823 = vsel %vm2819, %v2802, 0.0
        %v2824 = vsel %vm2819, %v2804, 0.0
        %v2825 = vsel %vm2819, %v2806, 0.0
        %v2826 = vsel %vm2819, %v2808, 0.0
        %v2827 = vsel %vm2819, %v2810, 0.0
        %s2828 = scalar_lea.vmem %s13, 128
        %v2829 = vld [vmem:[%s2828] sm:$0xff]
        %v2830 = vld [vmem:[%s2828 + $0x8] sm:$0xff]
        %v2831 = vld [vmem:[%s2828 + $0x10] sm:$0xff]
        %v2832 = vld [vmem:[%s2828 + $0x18] sm:$0xff]
        %v2833 = vld [vmem:[%s2828 + $0x20] sm:$0xff]
        %v2834 = vld [vmem:[%s2828 + $0x28] sm:$0xff]
        %v2835 = vld [vmem:[%s2828 + $0x30] sm:$0xff]
        %v2836 = vld [vmem:[%s2828 + $0x38] sm:$0xff]
        %v2838 = vsel %vm1817, %v2829, 0
        %v2841 = vsel %vm1817, %v2830, 0
        %v2844 = vsel %vm1817, %v2831, 0
        %v2847 = vsel %vm1817, %v2832, 0
        %v2850 = vsel %vm1817, %v2833, 0
        %v2853 = vsel %vm1817, %v2834, 0
        %v2856 = vsel %vm1817, %v2835, 0
        %v2859 = vsel %vm1817, %v2836, 0
        %2861 = vmatprep.subr.mxu0 0.0
        %2862 = vmatpush1.msra.mxu0 %v2820
        %2863 = vmatprep.subr.mxu0 0.0
        %2864 = vmatpush1.msra.mxu0 %v2821
        %2865 = vmatprep.subr.mxu0 0.0
        %2866 = vmatpush1.msra.mxu0 %v2822
        %2867 = vmatprep.subr.mxu0 0.0
        %2868 = vmatpush1.msra.mxu0 %v2823
        %2869 = vmatprep.subr.mxu0 0.0
        %2870 = vmatpush1.msra.mxu0 %v2824
        %2871 = vmatprep.subr.mxu0 0.0
        %2872 = vmatpush1.msra.mxu0 %v2825
        %2873 = vmatprep.subr.mxu0 0.0
        %2874 = vmatpush1.msra.mxu0 %v2826
        %2875 = vmatprep.subr.mxu0 0.0
        %2876 = vmatpush1.msra.mxu0 %v2827
        %2877 = vmatprep.subr.mxu0 0.0
        %2878 = vmatpush1.msra.mxu0 0.0
        %2879 = vmatprep.subr.mxu0 0.0
        %2880 = vmatpush1.msra.mxu0 0.0
        %2881 = vmatprep.subr.mxu0 0.0
        %2882 = vmatpush1.msra.mxu0 0.0
        %2883 = vmatprep.subr.mxu0 0.0
        %2884 = vmatpush1.msra.mxu0 0.0
        %2885 = vmatprep.subr.mxu0 0.0
        %2886 = vmatpush1.msra.mxu0 0.0
        %2887 = vmatprep.subr.mxu0 0.0
        %2888 = vmatpush1.msra.mxu0 0.0
        %2889 = vmatprep.subr.mxu0 0.0
        %2890 = vmatpush1.msra.mxu0 0.0
        %2891 = vmatprep.subr.mxu0 0.0
        %2892 = vmatpush1.msra.mxu0 0.0
        %2893 = vmatprep.subr.mxu0 0.0
        %2894 = vmatpush1.msra.mxu0 0.0
        %2895 = vmatprep.subr.mxu0 0.0
        %2896 = vmatpush1.msra.mxu0 0.0
        %2897 = vmatprep.subr.mxu0 0.0
        %2898 = vmatpush1.msra.mxu0 0.0
        %2899 = vmatprep.subr.mxu0 0.0
        %2900 = vmatpush1.msra.mxu0 0.0
        %2901 = vmatprep.subr.mxu0 0.0
        %2902 = vmatpush1.msra.mxu0 0.0
        %2903 = vmatprep.subr.mxu0 0.0
        %2904 = vmatpush1.msra.mxu0 0.0
        %2905 = vmatprep.subr.mxu0 0.0
        %2906 = vmatpush1.msra.mxu0 0.0
        %2907 = vmatprep.subr.mxu0 0.0
        %2908 = vmatpush1.msra.mxu0 0.0
        %2909 = vmatprep.subr.mxu0 0.0
        %2910 = vmatpush1.msra.mxu0 0.0
        %2911 = vmatprep.subr.mxu0 0.0
        %2912 = vmatpush1.msra.mxu0 0.0
        %2913 = vmatprep.subr.mxu0 0.0
        %2914 = vmatpush1.msra.mxu0 0.0
        %2915 = vmatprep.subr.mxu0 0.0
        %2916 = vmatpush1.msra.mxu0 0.0
        %2917 = vmatprep.subr.mxu0 0.0
        %2918 = vmatpush1.msra.mxu0 0.0
        %2919 = vmatprep.subr.mxu0 0.0
        %2920 = vmatpush1.msra.mxu0 0.0
        %2921 = vmatprep.subr.mxu0 0.0
        %2922 = vmatpush1.msra.mxu0 0.0
        %2923 = vmatprep.subr.mxu0 0.0
        %2924 = vmatpush1.msra.mxu0 0.0
        %2925 = vmatprep.mubr.f32.mxu0 0.0
        %2926 = vmatmul.mubr.f32.gmra.mrb[0].mxu0 %v2838
        %v2927 = vpop.f32.mrb[0].mxu0
        %v2928 = vadd.f32 0.0, %v2927
        %v2929 = vpop.f32.mrb[0].mxu0
        %2930 = vmatprep.mubr.f32.mxu0 0.0
        %2931 = vmatmul.mubr.f32.gmra.mrb[0].mxu0 %v2841
        %v2932 = vpop.f32.mrb[0].mxu0
        %v2933 = vadd.f32 0.0, %v2932
        %v2934 = vpop.f32.mrb[0].mxu0
        %2935 = vmatprep.mubr.f32.mxu0 0.0
        %2936 = vmatmul.mubr.f32.gmra.mrb[0].mxu0 %v2844
        %v2937 = vpop.f32.mrb[0].mxu0
        %v2938 = vadd.f32 0.0, %v2937
        %v2939 = vpop.f32.mrb[0].mxu0
        %2940 = vmatprep.mubr.f32.mxu0 0.0
        %2941 = vmatmul.mubr.f32.gmra.mrb[0].mxu0 %v2847
        %v2942 = vpop.f32.mrb[0].mxu0
        %v2943 = vadd.f32 0.0, %v2942
        %v2944 = vpop.f32.mrb[0].mxu0
        %2945 = vmatprep.mubr.f32.mxu0 0.0
        %2946 = vmatmul.mubr.f32.gmra.mrb[0].mxu0 %v2850
        %v2947 = vpop.f32.mrb[0].mxu0
        %v2948 = vadd.f32 0.0, %v2947
        %v2949 = vpop.f32.mrb[0].mxu0
        %2950 = vmatprep.mubr.f32.mxu0 0.0
        %2951 = vmatmul.mubr.f32.gmra.mrb[0].mxu0 %v2853
        %v2952 = vpop.f32.mrb[0].mxu0
        %v2953 = vadd.f32 0.0, %v2952
        %v2954 = vpop.f32.mrb[0].mxu0
        %2955 = vmatprep.mubr.f32.mxu0 0.0
        %2956 = vmatmul.mubr.f32.gmra.mrb[0].mxu0 %v2856
        %v2957 = vpop.f32.mrb[0].mxu0
        %v2958 = vadd.f32 0.0, %v2957
        %v2959 = vpop.f32.mrb[0].mxu0
        %2960 = vmatprep.mubr.f32.mxu0 0.0
        %2961 = vmatmul.mubr.f32.gmra.mrb[0].mxu0 %v2859
        %v2962 = vpop.f32.mrb[0].mxu0
        %v2963 = vadd.f32 0.0, %v2962
        %v2964 = vpop.f32.mrb[0].mxu0
        %2965 = vdwg.mxu0
        %v2966 = vadd.f32 %v2757, %v2928
        %v2967 = vadd.f32 %v2762, %v2933
        %v2968 = vadd.f32 %v2767, %v2938
        %v2969 = vadd.f32 %v2772, %v2943
        %v2970 = vadd.f32 %v2777, %v2948
        %v2971 = vadd.f32 %v2782, %v2953
        %v2972 = vadd.f32 %v2787, %v2958
        %v2973 = vadd.f32 %v2792, %v2963
        %v2974 = vld [vmem:[%s14] sm:$0xff]
        %v2975 = vld [vmem:[%s14 + $0x8] sm:$0xff]
        %v2976 = vld [vmem:[%s14 + $0x10] sm:$0xff]
        %v2977 = vld [vmem:[%s14 + $0x18] sm:$0xff]
        %v2978 = vld [vmem:[%s14 + $0x20] sm:$0xff]
        %v2979 = vld [vmem:[%s14 + $0x28] sm:$0xff]
        %v2980 = vld [vmem:[%s14 + $0x30] sm:$0xff]
        %v2981 = vld [vmem:[%s14 + $0x38] sm:$0xff]
        %2983 = vset.pattern.permute.xlu0 0
        %2984 = vperm.xlu0 %2983, %v2974
        %v2985 = vpop.permute.xlu0 %2984
        %2988 = vset.pattern.permute.xlu0 0
        %2989 = vperm.xlu0 %2988, %v2975
        %v2990 = vpop.permute.xlu0 %2989
        %2993 = vset.pattern.permute.xlu0 0
        %2994 = vperm.xlu0 %2993, %v2976
        %v2995 = vpop.permute.xlu0 %2994
        %2998 = vset.pattern.permute.xlu0 0
        %2999 = vperm.xlu0 %2998, %v2977
        %v3000 = vpop.permute.xlu0 %2999
        %3003 = vset.pattern.permute.xlu0 0
        %3004 = vperm.xlu0 %3003, %v2978
        %v3005 = vpop.permute.xlu0 %3004
        %3008 = vset.pattern.permute.xlu0 0
        %3009 = vperm.xlu0 %3008, %v2979
        %v3010 = vpop.permute.xlu0 %3009
        %3013 = vset.pattern.permute.xlu0 0
        %3014 = vperm.xlu0 %3013, %v2980
        %v3015 = vpop.permute.xlu0 %3014
        %3018 = vset.pattern.permute.xlu0 0
        %3019 = vperm.xlu0 %3018, %v2981
        %v3020 = vpop.permute.xlu0 %3019
        %v3022 = vadd.f32 %v2966, %v2985
        %v3023 = vadd.f32 %v2967, %v2990
        %v3024 = vadd.f32 %v2968, %v2995
        %v3025 = vadd.f32 %v2969, %v3000
        %v3026 = vadd.f32 %v2970, %v3005
        %v3027 = vadd.f32 %v2971, %v3010
        %v3028 = vadd.f32 %v2972, %v3015
        %v3029 = vadd.f32 %v2973, %v3020
        %v3030 = vxor.u32 %v3022, 2147483648
        %v3031 = vxor.u32 %v3023, 2147483648
        %v3032 = vxor.u32 %v3024, 2147483648
        %v3033 = vxor.u32 %v3025, 2147483648
        %v3034 = vxor.u32 %v3026, 2147483648
        %v3035 = vxor.u32 %v3027, 2147483648
        %v3036 = vxor.u32 %v3028, 2147483648
        %v3037 = vxor.u32 %v3029, 2147483648
        %v3038 = vmul.f32 %v3030, 1.442695
        %v3039 = vpow.pop %v3038
        %v3040 = vmul.f32 %v3031, 1.442695
        %v3041 = vpow.pop %v3040
        %v3042 = vmul.f32 %v3032, 1.442695
        %v3043 = vpow.pop %v3042
        %v3044 = vmul.f32 %v3033, 1.442695
        %v3045 = vpow.pop %v3044
        %v3046 = vmul.f32 %v3034, 1.442695
        %v3047 = vpow.pop %v3046
        %v3048 = vmul.f32 %v3035, 1.442695
        %v3049 = vpow.pop %v3048
        %v3050 = vmul.f32 %v3036, 1.442695
        %v3051 = vpow.pop %v3050
        %v3052 = vmul.f32 %v3037, 1.442695
        %v3053 = vpow.pop %v3052
        %v3054 = vadd.f32 %v3039, 1.0
        %v3055 = vadd.f32 %v3041, 1.0
        %v3056 = vadd.f32 %v3043, 1.0
        %v3057 = vadd.f32 %v3045, 1.0
        %v3058 = vadd.f32 %v3047, 1.0
        %v3059 = vadd.f32 %v3049, 1.0
        %v3060 = vadd.f32 %v3051, 1.0
        %v3061 = vadd.f32 %v3053, 1.0
        %v3062 = vrcp.pop %v3054
        %v3063 = vmul.f32 1.0, %v3062
        %v3064 = vrcp.pop %v3055
        %v3065 = vmul.f32 1.0, %v3064
        %v3066 = vrcp.pop %v3056
        %v3067 = vmul.f32 1.0, %v3066
        %v3068 = vrcp.pop %v3057
        %v3069 = vmul.f32 1.0, %v3068
        %v3070 = vrcp.pop %v3058
        %v3071 = vmul.f32 1.0, %v3070
        %v3072 = vrcp.pop %v3059
        %v3073 = vmul.f32 1.0, %v3072
        %v3074 = vrcp.pop %v3060
        %v3075 = vmul.f32 1.0, %v3074
        %v3076 = vrcp.pop %v3061
        %v3077 = vmul.f32 1.0, %v3076
        %v3078 = vmul.f32 %v3063, %v1891
        %v3079 = vmul.f32 %v3065, %v1896
        %v3080 = vmul.f32 %v3067, %v2055
        %v3081 = vmul.f32 %v3069, %v2060
        %v3082 = vmul.f32 %v3071, %v2486
        %v3083 = vmul.f32 %v3073, %v2487
        %v3084 = vmul.f32 %v3075, %v2488
        %v3085 = vmul.f32 %v3077, %v2489
        %vm3086 = vcmask 261120
        %v3087 = vsel %vm3086, %v1891, 0.0
        %v3088 = vsel %vm3086, %v1896, 0.0
        %v3089 = vsel %vm3086, %v2055, 0.0
        %v3090 = vsel %vm3086, %v2060, 0.0
        %v3091 = vsel %vm3086, %v2486, 0.0
        %v3092 = vsel %vm3086, %v2487, 0.0
        %v3093 = vsel %vm3086, %v2488, 0.0
        %v3094 = vsel %vm3086, %v2489, 0.0
        %3095 = vst [vmem:[%s604] sm:$0xff] %v3087
        %3096 = vst [vmem:[%s604 + $0x8] sm:$0xff] %v3088
        %3097 = vst [vmem:[%s604 + $0x10] sm:$0xff] %v3089
        %3098 = vst [vmem:[%s604 + $0x18] sm:$0xff] %v3090
        %3099 = vst [vmem:[%s604 + $0x20] sm:$0xff] %v3091
        %3100 = vst [vmem:[%s604 + $0x28] sm:$0xff] %v3092
        %3101 = vst [vmem:[%s604 + $0x30] sm:$0xff] %v3093
        %3102 = vst [vmem:[%s604 + $0x38] sm:$0xff] %v3094
        %v3103 = vsel %vm3086, %v3063, 0.0
        %v3104 = vsel %vm3086, %v3065, 0.0
        %v3105 = vsel %vm3086, %v3067, 0.0
        %v3106 = vsel %vm3086, %v3069, 0.0
        %v3107 = vsel %vm3086, %v3071, 0.0
        %v3108 = vsel %vm3086, %v3073, 0.0
        %v3109 = vsel %vm3086, %v3075, 0.0
        %v3110 = vsel %vm3086, %v3077, 0.0
        %3111 = vst [vmem:[%s611] sm:$0xff] %v3103
        %3112 = vst [vmem:[%s611 + $0x8] sm:$0xff] %v3104
        %3113 = vst [vmem:[%s611 + $0x10] sm:$0xff] %v3105
        %3114 = vst [vmem:[%s611 + $0x18] sm:$0xff] %v3106
        %3115 = vst [vmem:[%s611 + $0x20] sm:$0xff] %v3107
        %3116 = vst [vmem:[%s611 + $0x28] sm:$0xff] %v3108
        %3117 = vst [vmem:[%s611 + $0x30] sm:$0xff] %v3109
        %3118 = vst [vmem:[%s611 + $0x38] sm:$0xff] %v3110
        %3121 = vrot.lane.b32.xlu0 %v3080, 1
        %v3122 = vpop.permute.xlu0 %3121
        %3123 = vrot.lane.b32.xlu0 %v3081, 1
        %v3124 = vpop.permute.xlu0 %3123
        %v3127 = vsel %vm969, 0.0, %v3122
        %v3128 = vsel %vm969, 0.0, %v3124
        %v3129 = vld [vmem:[%s9] sm:$0xff]
        %v3130 = vld [vmem:[%s9 + $0x8] sm:$0xff]
        %v3131 = vld [vmem:[%s9 + $0x10] sm:$0xff]
        %v3132 = vld [vmem:[%s9 + $0x18] sm:$0xff]
        %v3133 = vld [vmem:[%s2152] sm:$0xff]
        %v3134 = vld [vmem:[%s2152 + $0x8] sm:$0xff]
        %v3135 = vld [vmem:[%s2152 + $0x10] sm:$0xff]
        %v3136 = vld [vmem:[%s2152 + $0x18] sm:$0xff]
        %v3138 = vsel %vm2157, %v3133, 0
        %v3141 = vsel %vm2157, %v3134, 0
        %v3144 = vsel %vm2157, %v3135, 0
        %v3147 = vsel %vm2157, %v3136, 0
        %3149 = vmatprep.subr.mxu0 0.0
        %3150 = vmatpush1.msra.mxu0 %v3078
        %3151 = vmatprep.subr.mxu0 0.0
        %3152 = vmatpush1.msra.mxu0 %v3079
        %3153 = vmatprep.subr.mxu0 0.0
        %3154 = vmatpush1.msra.mxu0 0.0
        %3155 = vmatprep.subr.mxu0 0.0
        %3156 = vmatpush1.msra.mxu0 0.0
        %3157 = vmatprep.subr.mxu0 0.0
        %3158 = vmatpush1.msra.mxu0 0.0
        %3159 = vmatprep.subr.mxu0 0.0
        %3160 = vmatpush1.msra.mxu0 0.0
        %3161 = vmatprep.subr.mxu0 0.0
        %3162 = vmatpush1.msra.mxu0 0.0
        %3163 = vmatprep.subr.mxu0 0.0
        %3164 = vmatpush1.msra.mxu0 0.0
        %3165 = vmatprep.subr.mxu0 0.0
        %3166 = vmatpush1.msra.mxu0 0.0
        %3167 = vmatprep.subr.mxu0 0.0
        %3168 = vmatpush1.msra.mxu0 0.0
        %3169 = vmatprep.subr.mxu0 0.0
        %3170 = vmatpush1.msra.mxu0 0.0
        %3171 = vmatprep.subr.mxu0 0.0
        %3172 = vmatpush1.msra.mxu0 0.0
        %3173 = vmatprep.subr.mxu0 0.0
        %3174 = vmatpush1.msra.mxu0 0.0
        %3175 = vmatprep.subr.mxu0 0.0
        %3176 = vmatpush1.msra.mxu0 0.0
        %3177 = vmatprep.subr.mxu0 0.0
        %3178 = vmatpush1.msra.mxu0 0.0
        %3179 = vmatprep.subr.mxu0 0.0
        %3180 = vmatpush1.msra.mxu0 0.0
        %3181 = vmatprep.subr.mxu0 0.0
        %3182 = vmatpush1.msra.mxu0 0.0
        %3183 = vmatprep.subr.mxu0 0.0
        %3184 = vmatpush1.msra.mxu0 0.0
        %3185 = vmatprep.subr.mxu0 0.0
        %3186 = vmatpush1.msra.mxu0 0.0
        %3187 = vmatprep.subr.mxu0 0.0
        %3188 = vmatpush1.msra.mxu0 0.0
        %3189 = vmatprep.subr.mxu0 0.0
        %3190 = vmatpush1.msra.mxu0 0.0
        %3191 = vmatprep.subr.mxu0 0.0
        %3192 = vmatpush1.msra.mxu0 0.0
        %3193 = vmatprep.subr.mxu0 0.0
        %3194 = vmatpush1.msra.mxu0 0.0
        %3195 = vmatprep.subr.mxu0 0.0
        %3196 = vmatpush1.msra.mxu0 0.0
        %3197 = vmatprep.subr.mxu0 0.0
        %3198 = vmatpush1.msra.mxu0 0.0
        %3199 = vmatprep.subr.mxu0 0.0
        %3200 = vmatpush1.msra.mxu0 0.0
        %3201 = vmatprep.subr.mxu0 0.0
        %3202 = vmatpush1.msra.mxu0 0.0
        %3203 = vmatprep.subr.mxu0 0.0
        %3204 = vmatpush1.msra.mxu0 0.0
        %3205 = vmatprep.subr.mxu0 0.0
        %3206 = vmatpush1.msra.mxu0 0.0
        %3207 = vmatprep.subr.mxu0 0.0
        %3208 = vmatpush1.msra.mxu0 0.0
        %3209 = vmatprep.subr.mxu0 0.0
        %3210 = vmatpush1.msra.mxu0 0.0
        %3211 = vmatprep.subr.mxu0 0.0
        %3212 = vmatpush1.msra.mxu0 0.0
        %3213 = vmatprep.mubr.f32.mxu0 0.0
        %3214 = vmatmul.mubr.f32.gmra.mrb[0].mxu0 %v3138
        %v3215 = vpop.f32.mrb[0].mxu0
        %v3216 = vadd.f32 0.0, %v3215
        %v3217 = vpop.f32.mrb[0].mxu0
        %3218 = vmatprep.mubr.f32.mxu0 0.0
        %3219 = vmatmul.mubr.f32.gmra.mrb[0].mxu0 %v3141
        %v3220 = vpop.f32.mrb[0].mxu0
        %v3221 = vadd.f32 0.0, %v3220
        %v3222 = vpop.f32.mrb[0].mxu0
        %3223 = vmatprep.mubr.f32.mxu0 0.0
        %3224 = vmatmul.mubr.f32.gmra.mrb[0].mxu0 %v3144
        %v3225 = vpop.f32.mrb[0].mxu0
        %v3226 = vadd.f32 0.0, %v3225
        %v3227 = vpop.f32.mrb[0].mxu0
        %3228 = vmatprep.mubr.f32.mxu0 0.0
        %3229 = vmatmul.mubr.f32.gmra.mrb[0].mxu0 %v3147
        %v3230 = vpop.f32.mrb[0].mxu0
        %v3231 = vadd.f32 0.0, %v3230
        %v3232 = vpop.f32.mrb[0].mxu0
        %3233 = vdwg.mxu0
        %v3235 = vsel %vm2157, %v3129, 0
        %v3238 = vsel %vm2157, %v3130, 0
        %v3241 = vsel %vm2157, %v3131, 0
        %v3244 = vsel %vm2157, %v3132, 0
        %3246 = vmatprep.subr.mxu0 0.0
        %3247 = vmatpush1.msra.mxu0 %v3127
        %3248 = vmatprep.subr.mxu0 0.0
        %3249 = vmatpush1.msra.mxu0 %v3128
        %3250 = vmatprep.subr.mxu0 0.0
        %3251 = vmatpush1.msra.mxu0 0.0
        %3252 = vmatprep.subr.mxu0 0.0
        %3253 = vmatpush1.msra.mxu0 0.0
        %3254 = vmatprep.subr.mxu0 0.0
        %3255 = vmatpush1.msra.mxu0 0.0
        %3256 = vmatprep.subr.mxu0 0.0
        %3257 = vmatpush1.msra.mxu0 0.0
        %3258 = vmatprep.subr.mxu0 0.0
        %3259 = vmatpush1.msra.mxu0 0.0
        %3260 = vmatprep.subr.mxu0 0.0
        %3261 = vmatpush1.msra.mxu0 0.0
        %3262 = vmatprep.subr.mxu0 0.0
        %3263 = vmatpush1.msra.mxu0 0.0
        %3264 = vmatprep.subr.mxu0 0.0
        %3265 = vmatpush1.msra.mxu0 0.0
        %3266 = vmatprep.subr.mxu0 0.0
        %3267 = vmatpush1.msra.mxu0 0.0
        %3268 = vmatprep.subr.mxu0 0.0
        %3269 = vmatpush1.msra.mxu0 0.0
        %3270 = vmatprep.subr.mxu0 0.0
        %3271 = vmatpush1.msra.mxu0 0.0
        %3272 = vmatprep.subr.mxu0 0.0
        %3273 = vmatpush1.msra.mxu0 0.0
        %3274 = vmatprep.subr.mxu0 0.0
        %3275 = vmatpush1.msra.mxu0 0.0
        %3276 = vmatprep.subr.mxu0 0.0
        %3277 = vmatpush1.msra.mxu0 0.0
        %3278 = vmatprep.subr.mxu0 0.0
        %3279 = vmatpush1.msra.mxu0 0.0
        %3280 = vmatprep.subr.mxu0 0.0
        %3281 = vmatpush1.msra.mxu0 0.0
        %3282 = vmatprep.subr.mxu0 0.0
        %3283 = vmatpush1.msra.mxu0 0.0
        %3284 = vmatprep.subr.mxu0 0.0
        %3285 = vmatpush1.msra.mxu0 0.0
        %3286 = vmatprep.subr.mxu0 0.0
        %3287 = vmatpush1.msra.mxu0 0.0
        %3288 = vmatprep.subr.mxu0 0.0
        %3289 = vmatpush1.msra.mxu0 0.0
        %3290 = vmatprep.subr.mxu0 0.0
        %3291 = vmatpush1.msra.mxu0 0.0
        %3292 = vmatprep.subr.mxu0 0.0
        %3293 = vmatpush1.msra.mxu0 0.0
        %3294 = vmatprep.subr.mxu0 0.0
        %3295 = vmatpush1.msra.mxu0 0.0
        %3296 = vmatprep.subr.mxu0 0.0
        %3297 = vmatpush1.msra.mxu0 0.0
        %3298 = vmatprep.subr.mxu0 0.0
        %3299 = vmatpush1.msra.mxu0 0.0
        %3300 = vmatprep.subr.mxu0 0.0
        %3301 = vmatpush1.msra.mxu0 0.0
        %3302 = vmatprep.subr.mxu0 0.0
        %3303 = vmatpush1.msra.mxu0 0.0
        %3304 = vmatprep.subr.mxu0 0.0
        %3305 = vmatpush1.msra.mxu0 0.0
        %3306 = vmatprep.subr.mxu0 0.0
        %3307 = vmatpush1.msra.mxu0 0.0
        %3308 = vmatprep.subr.mxu0 0.0
        %3309 = vmatpush1.msra.mxu0 0.0
        %3310 = vmatprep.mubr.f32.mxu0 0.0
        %3311 = vmatmul.mubr.f32.gmra.mrb[0].mxu0 %v3235
        %v3312 = vpop.f32.mrb[0].mxu0
        %v3313 = vadd.f32 %v3216, %v3312
        %v3314 = vpop.f32.mrb[0].mxu0
        %3315 = vmatprep.mubr.f32.mxu0 0.0
        %3316 = vmatmul.mubr.f32.gmra.mrb[0].mxu0 %v3238
        %v3317 = vpop.f32.mrb[0].mxu0
        %v3318 = vadd.f32 %v3221, %v3317
        %v3319 = vpop.f32.mrb[0].mxu0
        %3320 = vmatprep.mubr.f32.mxu0 0.0
        %3321 = vmatmul.mubr.f32.gmra.mrb[0].mxu0 %v3241
        %v3322 = vpop.f32.mrb[0].mxu0
        %v3323 = vadd.f32 %v3226, %v3322
        %v3324 = vpop.f32.mrb[0].mxu0
        %3325 = vmatprep.mubr.f32.mxu0 0.0
        %3326 = vmatmul.mubr.f32.gmra.mrb[0].mxu0 %v3244
        %v3327 = vpop.f32.mrb[0].mxu0
        %v3328 = vadd.f32 %v3231, %v3327
        %v3329 = vpop.f32.mrb[0].mxu0
        %3330 = vdwg.mxu0
        %v3331 = vld [vmem:[%s2352] sm:$0xff]
        %v3332 = vld [vmem:[%s2352 + $0x8] sm:$0xff]
        %v3333 = vld [vmem:[%s2352 + $0x10] sm:$0xff]
        %v3334 = vld [vmem:[%s2352 + $0x18] sm:$0xff]
        %v3336 = vsel %vm2157, %v3331, 0
        %v3339 = vsel %vm2157, %v3332, 0
        %v3342 = vsel %vm2157, %v3333, 0
        %v3345 = vsel %vm2157, %v3334, 0
        %3347 = vmatprep.subr.mxu0 0.0
        %3348 = vmatpush1.msra.mxu0 %v3080
        %3349 = vmatprep.subr.mxu0 0.0
        %3350 = vmatpush1.msra.mxu0 %v3081
        %3351 = vmatprep.subr.mxu0 0.0
        %3352 = vmatpush1.msra.mxu0 0.0
        %3353 = vmatprep.subr.mxu0 0.0
        %3354 = vmatpush1.msra.mxu0 0.0
        %3355 = vmatprep.subr.mxu0 0.0
        %3356 = vmatpush1.msra.mxu0 0.0
        %3357 = vmatprep.subr.mxu0 0.0
        %3358 = vmatpush1.msra.mxu0 0.0
        %3359 = vmatprep.subr.mxu0 0.0
        %3360 = vmatpush1.msra.mxu0 0.0
        %3361 = vmatprep.subr.mxu0 0.0
        %3362 = vmatpush1.msra.mxu0 0.0
        %3363 = vmatprep.subr.mxu0 0.0
        %3364 = vmatpush1.msra.mxu0 0.0
        %3365 = vmatprep.subr.mxu0 0.0
        %3366 = vmatpush1.msra.mxu0 0.0
        %3367 = vmatprep.subr.mxu0 0.0
        %3368 = vmatpush1.msra.mxu0 0.0
        %3369 = vmatprep.subr.mxu0 0.0
        %3370 = vmatpush1.msra.mxu0 0.0
        %3371 = vmatprep.subr.mxu0 0.0
        %3372 = vmatpush1.msra.mxu0 0.0
        %3373 = vmatprep.subr.mxu0 0.0
        %3374 = vmatpush1.msra.mxu0 0.0
        %3375 = vmatprep.subr.mxu0 0.0
        %3376 = vmatpush1.msra.mxu0 0.0
        %3377 = vmatprep.subr.mxu0 0.0
        %3378 = vmatpush1.msra.mxu0 0.0
        %3379 = vmatprep.subr.mxu0 0.0
        %3380 = vmatpush1.msra.mxu0 0.0
        %3381 = vmatprep.subr.mxu0 0.0
        %3382 = vmatpush1.msra.mxu0 0.0
        %3383 = vmatprep.subr.mxu0 0.0
        %3384 = vmatpush1.msra.mxu0 0.0
        %3385 = vmatprep.subr.mxu0 0.0
        %3386 = vmatpush1.msra.mxu0 0.0
        %3387 = vmatprep.subr.mxu0 0.0
        %3388 = vmatpush1.msra.mxu0 0.0
        %3389 = vmatprep.subr.mxu0 0.0
        %3390 = vmatpush1.msra.mxu0 0.0
        %3391 = vmatprep.subr.mxu0 0.0
        %3392 = vmatpush1.msra.mxu0 0.0
        %3393 = vmatprep.subr.mxu0 0.0
        %3394 = vmatpush1.msra.mxu0 0.0
        %3395 = vmatprep.subr.mxu0 0.0
        %3396 = vmatpush1.msra.mxu0 0.0
        %3397 = vmatprep.subr.mxu0 0.0
        %3398 = vmatpush1.msra.mxu0 0.0
        %3399 = vmatprep.subr.mxu0 0.0
        %3400 = vmatpush1.msra.mxu0 0.0
        %3401 = vmatprep.subr.mxu0 0.0
        %3402 = vmatpush1.msra.mxu0 0.0
        %3403 = vmatprep.subr.mxu0 0.0
        %3404 = vmatpush1.msra.mxu0 0.0
        %3405 = vmatprep.subr.mxu0 0.0
        %3406 = vmatpush1.msra.mxu0 0.0
        %3407 = vmatprep.subr.mxu0 0.0
        %3408 = vmatpush1.msra.mxu0 0.0
        %3409 = vmatprep.subr.mxu0 0.0
        %3410 = vmatpush1.msra.mxu0 0.0
        %3411 = vmatprep.mubr.f32.mxu0 0.0
        %3412 = vmatmul.mubr.f32.gmra.mrb[0].mxu0 %v3336
        %v3413 = vpop.f32.mrb[0].mxu0
        %v3414 = vadd.f32 0.0, %v3413
        %v3415 = vpop.f32.mrb[0].mxu0
        %3416 = vmatprep.mubr.f32.mxu0 0.0
        %3417 = vmatmul.mubr.f32.gmra.mrb[0].mxu0 %v3339
        %v3418 = vpop.f32.mrb[0].mxu0
        %v3419 = vadd.f32 0.0, %v3418
        %v3420 = vpop.f32.mrb[0].mxu0
        %3421 = vmatprep.mubr.f32.mxu0 0.0
        %3422 = vmatmul.mubr.f32.gmra.mrb[0].mxu0 %v3342
        %v3423 = vpop.f32.mrb[0].mxu0
        %v3424 = vadd.f32 0.0, %v3423
        %v3425 = vpop.f32.mrb[0].mxu0
        %3426 = vmatprep.mubr.f32.mxu0 0.0
        %3427 = vmatmul.mubr.f32.gmra.mrb[0].mxu0 %v3345
        %v3428 = vpop.f32.mrb[0].mxu0
        %v3429 = vadd.f32 0.0, %v3428
        %v3430 = vpop.f32.mrb[0].mxu0
        %3431 = vdwg.mxu0
        %v3432 = vadd.f32 %v3313, %v3414
        %v3433 = vadd.f32 %v3318, %v3419
        %v3434 = vadd.f32 %v3323, %v3424
        %v3435 = vadd.f32 %v3328, %v3429
        %v3436 = vld [vmem:[%s10] sm:$0xff]
        %v3437 = vld [vmem:[%s10 + $0x8] sm:$0xff]
        %v3438 = vld [vmem:[%s10 + $0x10] sm:$0xff]
        %v3439 = vld [vmem:[%s10 + $0x18] sm:$0xff]
        %3441 = vset.pattern.permute.xlu0 0
        %3442 = vperm.xlu0 %3441, %v3436
        %v3443 = vpop.permute.xlu0 %3442
        %3446 = vset.pattern.permute.xlu0 0
        %3447 = vperm.xlu0 %3446, %v3437
        %v3448 = vpop.permute.xlu0 %3447
        %3451 = vset.pattern.permute.xlu0 0
        %3452 = vperm.xlu0 %3451, %v3438
        %v3453 = vpop.permute.xlu0 %3452
        %3456 = vset.pattern.permute.xlu0 0
        %3457 = vperm.xlu0 %3456, %v3439
        %v3458 = vpop.permute.xlu0 %3457
        %v3460 = vadd.f32 %v3432, %v3443
        %v3461 = vadd.f32 %v3433, %v3448
        %v3462 = vadd.f32 %v3434, %v3453
        %v3463 = vadd.f32 %v3435, %v3458
        %v3464 = vsub.f32 %v3082, %v3460
        %v3465 = vsub.f32 %v3083, %v3461
        %v3466 = vsub.f32 %v3084, %v3462
        %v3467 = vsub.f32 %v3085, %v3463
        %v3468 = vld [vmem:[#allocation7] sm:$0xff]
        %v3469 = vld [vmem:[#allocation7 + $0x8] sm:$0xff]
        %v3470 = vld [vmem:[#allocation7 + $0x10] sm:$0xff]
        %v3471 = vld [vmem:[#allocation7 + $0x18] sm:$0xff]
        %s3472 = scalar_lea.vmem [#allocation7], 32
        %v3473 = vld [vmem:[%s3472] sm:$0xff]
        %v3474 = vld [vmem:[%s3472 + $0x8] sm:$0xff]
        %v3475 = vld [vmem:[%s3472 + $0x10] sm:$0xff]
        %v3476 = vld [vmem:[%s3472 + $0x18] sm:$0xff]
        %v3477 = vsel %vm3086, %v3080, 0
        %v3479 = vsel %vm3086, %v3081, 0
        %3481 = vmatprep.subr.mxu0 0.0
        %3482 = vmatpush1.msra.mxu0 %v3473
        %3483 = vmatprep.subr.mxu0 0.0
        %3484 = vmatpush1.msra.mxu0 %v3474
        %3485 = vmatprep.subr.mxu0 0.0
        %3486 = vmatpush1.msra.mxu0 %v3475
        %3487 = vmatprep.subr.mxu0 0.0
        %3488 = vmatpush1.msra.mxu0 %v3476
        %3489 = vmatprep.subr.mxu0 0.0
        %3490 = vmatpush1.msra.mxu0 0.0
        %3491 = vmatprep.subr.mxu0 0.0
        %3492 = vmatpush1.msra.mxu0 0.0
        %3493 = vmatprep.subr.mxu0 0.0
        %3494 = vmatpush1.msra.mxu0 0.0
        %3495 = vmatprep.subr.mxu0 0.0
        %3496 = vmatpush1.msra.mxu0 0.0
        %3497 = vmatprep.subr.mxu0 0.0
        %3498 = vmatpush1.msra.mxu0 0.0
        %3499 = vmatprep.subr.mxu0 0.0
        %3500 = vmatpush1.msra.mxu0 0.0
        %3501 = vmatprep.subr.mxu0 0.0
        %3502 = vmatpush1.msra.mxu0 0.0
        %3503 = vmatprep.subr.mxu0 0.0
        %3504 = vmatpush1.msra.mxu0 0.0
        %3505 = vmatprep.subr.mxu0 0.0
        %3506 = vmatpush1.msra.mxu0 0.0
        %3507 = vmatprep.subr.mxu0 0.0
        %3508 = vmatpush1.msra.mxu0 0.0
        %3509 = vmatprep.subr.mxu0 0.0
        %3510 = vmatpush1.msra.mxu0 0.0
        %3511 = vmatprep.subr.mxu0 0.0
        %3512 = vmatpush1.msra.mxu0 0.0
        %3513 = vmatprep.subr.mxu0 0.0
        %3514 = vmatpush1.msra.mxu0 0.0
        %3515 = vmatprep.subr.mxu0 0.0
        %3516 = vmatpush1.msra.mxu0 0.0
        %3517 = vmatprep.subr.mxu0 0.0
        %3518 = vmatpush1.msra.mxu0 0.0
        %3519 = vmatprep.subr.mxu0 0.0
        %3520 = vmatpush1.msra.mxu0 0.0
        %3521 = vmatprep.subr.mxu0 0.0
        %3522 = vmatpush1.msra.mxu0 0.0
        %3523 = vmatprep.subr.mxu0 0.0
        %3524 = vmatpush1.msra.mxu0 0.0
        %3525 = vmatprep.subr.mxu0 0.0
        %3526 = vmatpush1.msra.mxu0 0.0
        %3527 = vmatprep.subr.mxu0 0.0
        %3528 = vmatpush1.msra.mxu0 0.0
        %3529 = vmatprep.subr.mxu0 0.0
        %3530 = vmatpush1.msra.mxu0 0.0
        %3531 = vmatprep.subr.mxu0 0.0
        %3532 = vmatpush1.msra.mxu0 0.0
        %3533 = vmatprep.subr.mxu0 0.0
        %3534 = vmatpush1.msra.mxu0 0.0
        %3535 = vmatprep.subr.mxu0 0.0
        %3536 = vmatpush1.msra.mxu0 0.0
        %3537 = vmatprep.subr.mxu0 0.0
        %3538 = vmatpush1.msra.mxu0 0.0
        %3539 = vmatprep.subr.mxu0 0.0
        %3540 = vmatpush1.msra.mxu0 0.0
        %3541 = vmatprep.subr.mxu0 0.0
        %3542 = vmatpush1.msra.mxu0 0.0
        %3543 = vmatprep.subr.mxu0 0.0
        %3544 = vmatpush1.msra.mxu0 0.0
        %3545 = vmatprep.mubr.f32.mxu0 0.0
        %3546 = vmatmul.mubr.f32.gmra.mrb[0].mxu0 %v3477
        %v3547 = vpop.f32.mrb[0].mxu0
        %v3548 = vadd.f32 0.0, %v3547
        %v3549 = vpop.f32.mrb[0].mxu0
        %3550 = vmatprep.mubr.f32.mxu0 0.0
        %3551 = vmatmul.mubr.f32.gmra.mrb[0].mxu0 %v3479
        %v3552 = vpop.f32.mrb[0].mxu0
        %v3553 = vadd.f32 0.0, %v3552
        %v3554 = vpop.f32.mrb[0].mxu0
        %3555 = vdwg.mxu0
        %v3557 = vsel %vm3086, %v3466, 0
        %v3560 = vsel %vm3086, %v3467, 0
        %3562 = vmatprep.subr.mxu0 0.0
        %3563 = vmatpush1.msra.mxu0 %v3473
        %3564 = vmatprep.subr.mxu0 0.0
        %3565 = vmatpush1.msra.mxu0 %v3474
        %3566 = vmatprep.subr.mxu0 0.0
        %3567 = vmatpush1.msra.mxu0 %v3475
        %3568 = vmatprep.subr.mxu0 0.0
        %3569 = vmatpush1.msra.mxu0 %v3476
        %3570 = vmatprep.subr.mxu0 0.0
        %3571 = vmatpush1.msra.mxu0 0.0
        %3572 = vmatprep.subr.mxu0 0.0
        %3573 = vmatpush1.msra.mxu0 0.0
        %3574 = vmatprep.subr.mxu0 0.0
        %3575 = vmatpush1.msra.mxu0 0.0
        %3576 = vmatprep.subr.mxu0 0.0
        %3577 = vmatpush1.msra.mxu0 0.0
        %3578 = vmatprep.subr.mxu0 0.0
        %3579 = vmatpush1.msra.mxu0 0.0
        %3580 = vmatprep.subr.mxu0 0.0
        %3581 = vmatpush1.msra.mxu0 0.0
        %3582 = vmatprep.subr.mxu0 0.0
        %3583 = vmatpush1.msra.mxu0 0.0
        %3584 = vmatprep.subr.mxu0 0.0
        %3585 = vmatpush1.msra.mxu0 0.0
        %3586 = vmatprep.subr.mxu0 0.0
        %3587 = vmatpush1.msra.mxu0 0.0
        %3588 = vmatprep.subr.mxu0 0.0
        %3589 = vmatpush1.msra.mxu0 0.0
        %3590 = vmatprep.subr.mxu0 0.0
        %3591 = vmatpush1.msra.mxu0 0.0
        %3592 = vmatprep.subr.mxu0 0.0
        %3593 = vmatpush1.msra.mxu0 0.0
        %3594 = vmatprep.subr.mxu0 0.0
        %3595 = vmatpush1.msra.mxu0 0.0
        %3596 = vmatprep.subr.mxu0 0.0
        %3597 = vmatpush1.msra.mxu0 0.0
        %3598 = vmatprep.subr.mxu0 0.0
        %3599 = vmatpush1.msra.mxu0 0.0
        %3600 = vmatprep.subr.mxu0 0.0
        %3601 = vmatpush1.msra.mxu0 0.0
        %3602 = vmatprep.subr.mxu0 0.0
        %3603 = vmatpush1.msra.mxu0 0.0
        %3604 = vmatprep.subr.mxu0 0.0
        %3605 = vmatpush1.msra.mxu0 0.0
        %3606 = vmatprep.subr.mxu0 0.0
        %3607 = vmatpush1.msra.mxu0 0.0
        %3608 = vmatprep.subr.mxu0 0.0
        %3609 = vmatpush1.msra.mxu0 0.0
        %3610 = vmatprep.subr.mxu0 0.0
        %3611 = vmatpush1.msra.mxu0 0.0
        %3612 = vmatprep.subr.mxu0 0.0
        %3613 = vmatpush1.msra.mxu0 0.0
        %3614 = vmatprep.subr.mxu0 0.0
        %3615 = vmatpush1.msra.mxu0 0.0
        %3616 = vmatprep.subr.mxu0 0.0
        %3617 = vmatpush1.msra.mxu0 0.0
        %3618 = vmatprep.subr.mxu0 0.0
        %3619 = vmatpush1.msra.mxu0 0.0
        %3620 = vmatprep.subr.mxu0 0.0
        %3621 = vmatpush1.msra.mxu0 0.0
        %3622 = vmatprep.subr.mxu0 0.0
        %3623 = vmatpush1.msra.mxu0 0.0
        %3624 = vmatprep.subr.mxu0 0.0
        %3625 = vmatpush1.msra.mxu0 0.0
        %3626 = vmatprep.mubr.f32.mxu0 0.0
        %3627 = vmatmul.mubr.f32.gmra.mrb[0].mxu0 %v3557
        %v3628 = vpop.f32.mrb[0].mxu0
        %v3629 = vadd.f32 0.0, %v3628
        %v3630 = vpop.f32.mrb[0].mxu0
        %3631 = vmatprep.mubr.f32.mxu0 0.0
        %3632 = vmatmul.mubr.f32.gmra.mrb[0].mxu0 %v3560
        %v3633 = vpop.f32.mrb[0].mxu0
        %v3634 = vadd.f32 0.0, %v3633
        %v3635 = vpop.f32.mrb[0].mxu0
        %3636 = vdwg.mxu0
        %v3638 = vsel %vm3086, %v3078, 0
        %v3641 = vsel %vm3086, %v3079, 0
        %3643 = vmatprep.subr.mxu0 0.0
        %3644 = vmatpush1.msra.mxu0 %v3468
        %3645 = vmatprep.subr.mxu0 0.0
        %3646 = vmatpush1.msra.mxu0 %v3469
        %3647 = vmatprep.subr.mxu0 0.0
        %3648 = vmatpush1.msra.mxu0 %v3470
        %3649 = vmatprep.subr.mxu0 0.0
        %3650 = vmatpush1.msra.mxu0 %v3471
        %3651 = vmatprep.subr.mxu0 0.0
        %3652 = vmatpush1.msra.mxu0 0.0
        %3653 = vmatprep.subr.mxu0 0.0
        %3654 = vmatpush1.msra.mxu0 0.0
        %3655 = vmatprep.subr.mxu0 0.0
        %3656 = vmatpush1.msra.mxu0 0.0
        %3657 = vmatprep.subr.mxu0 0.0
        %3658 = vmatpush1.msra.mxu0 0.0
        %3659 = vmatprep.subr.mxu0 0.0
        %3660 = vmatpush1.msra.mxu0 0.0
        %3661 = vmatprep.subr.mxu0 0.0
        %3662 = vmatpush1.msra.mxu0 0.0
        %3663 = vmatprep.subr.mxu0 0.0
        %3664 = vmatpush1.msra.mxu0 0.0
        %3665 = vmatprep.subr.mxu0 0.0
        %3666 = vmatpush1.msra.mxu0 0.0
        %3667 = vmatprep.subr.mxu0 0.0
        %3668 = vmatpush1.msra.mxu0 0.0
        %3669 = vmatprep.subr.mxu0 0.0
        %3670 = vmatpush1.msra.mxu0 0.0
        %3671 = vmatprep.subr.mxu0 0.0
        %3672 = vmatpush1.msra.mxu0 0.0
        %3673 = vmatprep.subr.mxu0 0.0
        %3674 = vmatpush1.msra.mxu0 0.0
        %3675 = vmatprep.subr.mxu0 0.0
        %3676 = vmatpush1.msra.mxu0 0.0
        %3677 = vmatprep.subr.mxu0 0.0
        %3678 = vmatpush1.msra.mxu0 0.0
        %3679 = vmatprep.subr.mxu0 0.0
        %3680 = vmatpush1.msra.mxu0 0.0
        %3681 = vmatprep.subr.mxu0 0.0
        %3682 = vmatpush1.msra.mxu0 0.0
        %3683 = vmatprep.subr.mxu0 0.0
        %3684 = vmatpush1.msra.mxu0 0.0
        %3685 = vmatprep.subr.mxu0 0.0
        %3686 = vmatpush1.msra.mxu0 0.0
        %3687 = vmatprep.subr.mxu0 0.0
        %3688 = vmatpush1.msra.mxu0 0.0
        %3689 = vmatprep.subr.mxu0 0.0
        %3690 = vmatpush1.msra.mxu0 0.0
        %3691 = vmatprep.subr.mxu0 0.0
        %3692 = vmatpush1.msra.mxu0 0.0
        %3693 = vmatprep.subr.mxu0 0.0
        %3694 = vmatpush1.msra.mxu0 0.0
        %3695 = vmatprep.subr.mxu0 0.0
        %3696 = vmatpush1.msra.mxu0 0.0
        %3697 = vmatprep.subr.mxu0 0.0
        %3698 = vmatpush1.msra.mxu0 0.0
        %3699 = vmatprep.subr.mxu0 0.0
        %3700 = vmatpush1.msra.mxu0 0.0
        %3701 = vmatprep.subr.mxu0 0.0
        %3702 = vmatpush1.msra.mxu0 0.0
        %3703 = vmatprep.subr.mxu0 0.0
        %3704 = vmatpush1.msra.mxu0 0.0
        %3705 = vmatprep.subr.mxu0 0.0
        %3706 = vmatpush1.msra.mxu0 0.0
        %3707 = vmatprep.mubr.f32.mxu0 0.0
        %3708 = vmatmul.mubr.f32.gmra.mrb[0].mxu0 %v3638
        %v3709 = vpop.f32.mrb[0].mxu0
        %v3710 = vadd.f32 %v3548, %v3709
        %v3711 = vpop.f32.mrb[0].mxu0
        %3712 = vmatprep.mubr.f32.mxu0 0.0
        %3713 = vmatmul.mubr.f32.gmra.mrb[0].mxu0 %v3641
        %v3714 = vpop.f32.mrb[0].mxu0
        %v3715 = vadd.f32 %v3553, %v3714
        %v3716 = vpop.f32.mrb[0].mxu0
        %3717 = vdwg.mxu0
        %v3719 = vsel %vm3086, %v3464, 0
        %v3722 = vsel %vm3086, %v3465, 0
        %3724 = vmatprep.subr.mxu0 0.0
        %3725 = vmatpush1.msra.mxu0 %v3468
        %3726 = vmatprep.subr.mxu0 0.0
        %3727 = vmatpush1.msra.mxu0 %v3469
        %3728 = vmatprep.subr.mxu0 0.0
        %3729 = vmatpush1.msra.mxu0 %v3470
        %3730 = vmatprep.subr.mxu0 0.0
        %3731 = vmatpush1.msra.mxu0 %v3471
        %3732 = vmatprep.subr.mxu0 0.0
        %3733 = vmatpush1.msra.mxu0 0.0
        %3734 = vmatprep.subr.mxu0 0.0
        %3735 = vmatpush1.msra.mxu0 0.0
        %3736 = vmatprep.subr.mxu0 0.0
        %3737 = vmatpush1.msra.mxu0 0.0
        %3738 = vmatprep.subr.mxu0 0.0
        %3739 = vmatpush1.msra.mxu0 0.0
        %3740 = vmatprep.subr.mxu0 0.0
        %3741 = vmatpush1.msra.mxu0 0.0
        %3742 = vmatprep.subr.mxu0 0.0
        %3743 = vmatpush1.msra.mxu0 0.0
        %3744 = vmatprep.subr.mxu0 0.0
        %3745 = vmatpush1.msra.mxu0 0.0
        %3746 = vmatprep.subr.mxu0 0.0
        %3747 = vmatpush1.msra.mxu0 0.0
        %3748 = vmatprep.subr.mxu0 0.0
        %3749 = vmatpush1.msra.mxu0 0.0
        %3750 = vmatprep.subr.mxu0 0.0
        %3751 = vmatpush1.msra.mxu0 0.0
        %3752 = vmatprep.subr.mxu0 0.0
        %3753 = vmatpush1.msra.mxu0 0.0
        %3754 = vmatprep.subr.mxu0 0.0
        %3755 = vmatpush1.msra.mxu0 0.0
        %3756 = vmatprep.subr.mxu0 0.0
        %3757 = vmatpush1.msra.mxu0 0.0
        %3758 = vmatprep.subr.mxu0 0.0
        %3759 = vmatpush1.msra.mxu0 0.0
        %3760 = vmatprep.subr.mxu0 0.0
        %3761 = vmatpush1.msra.mxu0 0.0
        %3762 = vmatprep.subr.mxu0 0.0
        %3763 = vmatpush1.msra.mxu0 0.0
        %3764 = vmatprep.subr.mxu0 0.0
        %3765 = vmatpush1.msra.mxu0 0.0
        %3766 = vmatprep.subr.mxu0 0.0
        %3767 = vmatpush1.msra.mxu0 0.0
        %3768 = vmatprep.subr.mxu0 0.0
        %3769 = vmatpush1.msra.mxu0 0.0
        %3770 = vmatprep.subr.mxu0 0.0
        %3771 = vmatpush1.msra.mxu0 0.0
        %3772 = vmatprep.subr.mxu0 0.0
        %3773 = vmatpush1.msra.mxu0 0.0
        %3774 = vmatprep.subr.mxu0 0.0
        %3775 = vmatpush1.msra.mxu0 0.0
        %3776 = vmatprep.subr.mxu0 0.0
        %3777 = vmatpush1.msra.mxu0 0.0
        %3778 = vmatprep.subr.mxu0 0.0
        %3779 = vmatpush1.msra.mxu0 0.0
        %3780 = vmatprep.subr.mxu0 0.0
        %3781 = vmatpush1.msra.mxu0 0.0
        %3782 = vmatprep.subr.mxu0 0.0
        %3783 = vmatpush1.msra.mxu0 0.0
        %3784 = vmatprep.subr.mxu0 0.0
        %3785 = vmatpush1.msra.mxu0 0.0
        %3786 = vmatprep.subr.mxu0 0.0
        %3787 = vmatpush1.msra.mxu0 0.0
        %3788 = vmatprep.mubr.f32.mxu0 0.0
        %3789 = vmatmul.mubr.f32.gmra.mrb[0].mxu0 %v3719
        %v3790 = vpop.f32.mrb[0].mxu0
        %v3791 = vadd.f32 %v3629, %v3790
        %v3792 = vpop.f32.mrb[0].mxu0
        %3793 = vmatprep.mubr.f32.mxu0 0.0
        %3794 = vmatmul.mubr.f32.gmra.mrb[0].mxu0 %v3722
        %v3795 = vpop.f32.mrb[0].mxu0
        %v3796 = vadd.f32 %v3634, %v3795
        %v3797 = vpop.f32.mrb[0].mxu0
        %3798 = vdwg.mxu0
        %3800 = vrot.lane.b32.xlu0 %v3796, 1
        %v3801 = vpop.permute.xlu0 %3800
        %v3803 = vsel %vm969, 0.0, %v3801
        %v3804 = vld [vmem:[%s5] sm:$0xff]
        %v3805 = vld [vmem:[%s5 + $0x8] sm:$0xff]
        %v3806 = vld [vmem:[%s1541] sm:$0xff]
        %v3807 = vld [vmem:[%s1541 + $0x8] sm:$0xff]
        %v3809 = vsel %vm1544, %v3806, 0
        %v3812 = vsel %vm1544, %v3807, 0
        %3814 = vmatprep.subr.mxu0 0.0
        %3815 = vmatpush1.msra.mxu0 %v3791
        %3816 = vmatprep.subr.mxu0 0.0
        %3817 = vmatpush1.msra.mxu0 0.0
        %3818 = vmatprep.subr.mxu0 0.0
        %3819 = vmatpush1.msra.mxu0 0.0
        %3820 = vmatprep.subr.mxu0 0.0
        %3821 = vmatpush1.msra.mxu0 0.0
        %3822 = vmatprep.subr.mxu0 0.0
        %3823 = vmatpush1.msra.mxu0 0.0
        %3824 = vmatprep.subr.mxu0 0.0
        %3825 = vmatpush1.msra.mxu0 0.0
        %3826 = vmatprep.subr.mxu0 0.0
        %3827 = vmatpush1.msra.mxu0 0.0
        %3828 = vmatprep.subr.mxu0 0.0
        %3829 = vmatpush1.msra.mxu0 0.0
        %3830 = vmatprep.subr.mxu0 0.0
        %3831 = vmatpush1.msra.mxu0 0.0
        %3832 = vmatprep.subr.mxu0 0.0
        %3833 = vmatpush1.msra.mxu0 0.0
        %3834 = vmatprep.subr.mxu0 0.0
        %3835 = vmatpush1.msra.mxu0 0.0
        %3836 = vmatprep.subr.mxu0 0.0
        %3837 = vmatpush1.msra.mxu0 0.0
        %3838 = vmatprep.subr.mxu0 0.0
        %3839 = vmatpush1.msra.mxu0 0.0
        %3840 = vmatprep.subr.mxu0 0.0
        %3841 = vmatpush1.msra.mxu0 0.0
        %3842 = vmatprep.subr.mxu0 0.0
        %3843 = vmatpush1.msra.mxu0 0.0
        %3844 = vmatprep.subr.mxu0 0.0
        %3845 = vmatpush1.msra.mxu0 0.0
        %3846 = vmatprep.subr.mxu0 0.0
        %3847 = vmatpush1.msra.mxu0 0.0
        %3848 = vmatprep.subr.mxu0 0.0
        %3849 = vmatpush1.msra.mxu0 0.0
        %3850 = vmatprep.subr.mxu0 0.0
        %3851 = vmatpush1.msra.mxu0 0.0
        %3852 = vmatprep.subr.mxu0 0.0
        %3853 = vmatpush1.msra.mxu0 0.0
        %3854 = vmatprep.subr.mxu0 0.0
        %3855 = vmatpush1.msra.mxu0 0.0
        %3856 = vmatprep.subr.mxu0 0.0
        %3857 = vmatpush1.msra.mxu0 0.0
        %3858 = vmatprep.subr.mxu0 0.0
        %3859 = vmatpush1.msra.mxu0 0.0
        %3860 = vmatprep.subr.mxu0 0.0
        %3861 = vmatpush1.msra.mxu0 0.0
        %3862 = vmatprep.subr.mxu0 0.0
        %3863 = vmatpush1.msra.mxu0 0.0
        %3864 = vmatprep.subr.mxu0 0.0
        %3865 = vmatpush1.msra.mxu0 0.0
        %3866 = vmatprep.subr.mxu0 0.0
        %3867 = vmatpush1.msra.mxu0 0.0
        %3868 = vmatprep.subr.mxu0 0.0
        %3869 = vmatpush1.msra.mxu0 0.0
        %3870 = vmatprep.subr.mxu0 0.0
        %3871 = vmatpush1.msra.mxu0 0.0
        %3872 = vmatprep.subr.mxu0 0.0
        %3873 = vmatpush1.msra.mxu0 0.0
        %3874 = vmatprep.subr.mxu0 0.0
        %3875 = vmatpush1.msra.mxu0 0.0
        %3876 = vmatprep.subr.mxu0 0.0
        %3877 = vmatpush1.msra.mxu0 0.0
        %3878 = vmatprep.mubr.f32.mxu0 0.0
        %3879 = vmatmul.mubr.f32.gmra.mrb[0].mxu0 %v3809
        %v3880 = vpop.f32.mrb[0].mxu0
        %v3881 = vadd.f32 0.0, %v3880
        %v3882 = vpop.f32.mrb[0].mxu0
        %3883 = vmatprep.mubr.f32.mxu0 0.0
        %3884 = vmatmul.mubr.f32.gmra.mrb[0].mxu0 %v3812
        %v3885 = vpop.f32.mrb[0].mxu0
        %v3886 = vadd.f32 0.0, %v3885
        %v3887 = vpop.f32.mrb[0].mxu0
        %3888 = vdwg.mxu0
        %v3890 = vsel %vm1544, %v3804, 0
        %v3893 = vsel %vm1544, %v3805, 0
        %3895 = vmatprep.subr.mxu0 0.0
        %3896 = vmatpush1.msra.mxu0 %v3803
        %3897 = vmatprep.subr.mxu0 0.0
        %3898 = vmatpush1.msra.mxu0 0.0
        %3899 = vmatprep.subr.mxu0 0.0
        %3900 = vmatpush1.msra.mxu0 0.0
        %3901 = vmatprep.subr.mxu0 0.0
        %3902 = vmatpush1.msra.mxu0 0.0
        %3903 = vmatprep.subr.mxu0 0.0
        %3904 = vmatpush1.msra.mxu0 0.0
        %3905 = vmatprep.subr.mxu0 0.0
        %3906 = vmatpush1.msra.mxu0 0.0
        %3907 = vmatprep.subr.mxu0 0.0
        %3908 = vmatpush1.msra.mxu0 0.0
        %3909 = vmatprep.subr.mxu0 0.0
        %3910 = vmatpush1.msra.mxu0 0.0
        %3911 = vmatprep.subr.mxu0 0.0
        %3912 = vmatpush1.msra.mxu0 0.0
        %3913 = vmatprep.subr.mxu0 0.0
        %3914 = vmatpush1.msra.mxu0 0.0
        %3915 = vmatprep.subr.mxu0 0.0
        %3916 = vmatpush1.msra.mxu0 0.0
        %3917 = vmatprep.subr.mxu0 0.0
        %3918 = vmatpush1.msra.mxu0 0.0
        %3919 = vmatprep.subr.mxu0 0.0
        %3920 = vmatpush1.msra.mxu0 0.0
        %3921 = vmatprep.subr.mxu0 0.0
        %3922 = vmatpush1.msra.mxu0 0.0
        %3923 = vmatprep.subr.mxu0 0.0
        %3924 = vmatpush1.msra.mxu0 0.0
        %3925 = vmatprep.subr.mxu0 0.0
        %3926 = vmatpush1.msra.mxu0 0.0
        %3927 = vmatprep.subr.mxu0 0.0
        %3928 = vmatpush1.msra.mxu0 0.0
        %3929 = vmatprep.subr.mxu0 0.0
        %3930 = vmatpush1.msra.mxu0 0.0
        %3931 = vmatprep.subr.mxu0 0.0
        %3932 = vmatpush1.msra.mxu0 0.0
        %3933 = vmatprep.subr.mxu0 0.0
        %3934 = vmatpush1.msra.mxu0 0.0
        %3935 = vmatprep.subr.mxu0 0.0
        %3936 = vmatpush1.msra.mxu0 0.0
        %3937 = vmatprep.subr.mxu0 0.0
        %3938 = vmatpush1.msra.mxu0 0.0
        %3939 = vmatprep.subr.mxu0 0.0
        %3940 = vmatpush1.msra.mxu0 0.0
        %3941 = vmatprep.subr.mxu0 0.0
        %3942 = vmatpush1.msra.mxu0 0.0
        %3943 = vmatprep.subr.mxu0 0.0
        %3944 = vmatpush1.msra.mxu0 0.0
        %3945 = vmatprep.subr.mxu0 0.0
        %3946 = vmatpush1.msra.mxu0 0.0
        %3947 = vmatprep.subr.mxu0 0.0
        %3948 = vmatpush1.msra.mxu0 0.0
        %3949 = vmatprep.subr.mxu0 0.0
        %3950 = vmatpush1.msra.mxu0 0.0
        %3951 = vmatprep.subr.mxu0 0.0
        %3952 = vmatpush1.msra.mxu0 0.0
        %3953 = vmatprep.subr.mxu0 0.0
        %3954 = vmatpush1.msra.mxu0 0.0
        %3955 = vmatprep.subr.mxu0 0.0
        %3956 = vmatpush1.msra.mxu0 0.0
        %3957 = vmatprep.subr.mxu0 0.0
        %3958 = vmatpush1.msra.mxu0 0.0
        %3959 = vmatprep.mubr.f32.mxu0 0.0
        %3960 = vmatmul.mubr.f32.gmra.mrb[0].mxu0 %v3890
        %v3961 = vpop.f32.mrb[0].mxu0
        %v3962 = vadd.f32 %v3881, %v3961
        %v3963 = vpop.f32.mrb[0].mxu0
        %3964 = vmatprep.mubr.f32.mxu0 0.0
        %3965 = vmatmul.mubr.f32.gmra.mrb[0].mxu0 %v3893
        %v3966 = vpop.f32.mrb[0].mxu0
        %v3967 = vadd.f32 %v3886, %v3966
        %v3968 = vpop.f32.mrb[0].mxu0
        %3969 = vdwg.mxu0
        %v3970 = vld [vmem:[%s1707] sm:$0xff]
        %v3971 = vld [vmem:[%s1707 + $0x8] sm:$0xff]
        %v3973 = vsel %vm1544, %v3970, 0
        %v3976 = vsel %vm1544, %v3971, 0
        %3978 = vmatprep.subr.mxu0 0.0
        %3979 = vmatpush1.msra.mxu0 %v3796
        %3980 = vmatprep.subr.mxu0 0.0
        %3981 = vmatpush1.msra.mxu0 0.0
        %3982 = vmatprep.subr.mxu0 0.0
        %3983 = vmatpush1.msra.mxu0 0.0
        %3984 = vmatprep.subr.mxu0 0.0
        %3985 = vmatpush1.msra.mxu0 0.0
        %3986 = vmatprep.subr.mxu0 0.0
        %3987 = vmatpush1.msra.mxu0 0.0
        %3988 = vmatprep.subr.mxu0 0.0
        %3989 = vmatpush1.msra.mxu0 0.0
        %3990 = vmatprep.subr.mxu0 0.0
        %3991 = vmatpush1.msra.mxu0 0.0
        %3992 = vmatprep.subr.mxu0 0.0
        %3993 = vmatpush1.msra.mxu0 0.0
        %3994 = vmatprep.subr.mxu0 0.0
        %3995 = vmatpush1.msra.mxu0 0.0
        %3996 = vmatprep.subr.mxu0 0.0
        %3997 = vmatpush1.msra.mxu0 0.0
        %3998 = vmatprep.subr.mxu0 0.0
        %3999 = vmatpush1.msra.mxu0 0.0
        %4000 = vmatprep.subr.mxu0 0.0
        %4001 = vmatpush1.msra.mxu0 0.0
        %4002 = vmatprep.subr.mxu0 0.0
        %4003 = vmatpush1.msra.mxu0 0.0
        %4004 = vmatprep.subr.mxu0 0.0
        %4005 = vmatpush1.msra.mxu0 0.0
        %4006 = vmatprep.subr.mxu0 0.0
        %4007 = vmatpush1.msra.mxu0 0.0
        %4008 = vmatprep.subr.mxu0 0.0
        %4009 = vmatpush1.msra.mxu0 0.0
        %4010 = vmatprep.subr.mxu0 0.0
        %4011 = vmatpush1.msra.mxu0 0.0
        %4012 = vmatprep.subr.mxu0 0.0
        %4013 = vmatpush1.msra.mxu0 0.0
        %4014 = vmatprep.subr.mxu0 0.0
        %4015 = vmatpush1.msra.mxu0 0.0
        %4016 = vmatprep.subr.mxu0 0.0
        %4017 = vmatpush1.msra.mxu0 0.0
        %4018 = vmatprep.subr.mxu0 0.0
        %4019 = vmatpush1.msra.mxu0 0.0
        %4020 = vmatprep.subr.mxu0 0.0
        %4021 = vmatpush1.msra.mxu0 0.0
        %4022 = vmatprep.subr.mxu0 0.0
        %4023 = vmatpush1.msra.mxu0 0.0
        %4024 = vmatprep.subr.mxu0 0.0
        %4025 = vmatpush1.msra.mxu0 0.0
        %4026 = vmatprep.subr.mxu0 0.0
        %4027 = vmatpush1.msra.mxu0 0.0
        %4028 = vmatprep.subr.mxu0 0.0
        %4029 = vmatpush1.msra.mxu0 0.0
        %4030 = vmatprep.subr.mxu0 0.0
        %4031 = vmatpush1.msra.mxu0 0.0
        %4032 = vmatprep.subr.mxu0 0.0
        %4033 = vmatpush1.msra.mxu0 0.0
        %4034 = vmatprep.subr.mxu0 0.0
        %4035 = vmatpush1.msra.mxu0 0.0
        %4036 = vmatprep.subr.mxu0 0.0
        %4037 = vmatpush1.msra.mxu0 0.0
        %4038 = vmatprep.subr.mxu0 0.0
        %4039 = vmatpush1.msra.mxu0 0.0
        %4040 = vmatprep.subr.mxu0 0.0
        %4041 = vmatpush1.msra.mxu0 0.0
        %4042 = vmatprep.mubr.f32.mxu0 0.0
        %4043 = vmatmul.mubr.f32.gmra.mrb[0].mxu0 %v3973
        %v4044 = vpop.f32.mrb[0].mxu0
        %v4045 = vadd.f32 0.0, %v4044
        %v4046 = vpop.f32.mrb[0].mxu0
        %4047 = vmatprep.mubr.f32.mxu0 0.0
        %4048 = vmatmul.mubr.f32.gmra.mrb[0].mxu0 %v3976
        %v4049 = vpop.f32.mrb[0].mxu0
        %v4050 = vadd.f32 0.0, %v4049
        %v4051 = vpop.f32.mrb[0].mxu0
        %4052 = vdwg.mxu0
        %v4053 = vadd.f32 %v3962, %v4045
        %v4054 = vadd.f32 %v3967, %v4050
        %v4055 = vld [vmem:[%s6] sm:$0xff]
        %v4056 = vld [vmem:[%s6 + $0x8] sm:$0xff]
        %4058 = vset.pattern.permute.xlu0 0
        %4059 = vperm.xlu0 %4058, %v4055
        %v4060 = vpop.permute.xlu0 %4059
        %4063 = vset.pattern.permute.xlu0 0
        %4064 = vperm.xlu0 %4063, %v4056
        %v4065 = vpop.permute.xlu0 %4064
        %v4067 = vadd.f32 %v4053, %v4060
        %v4068 = vadd.f32 %v4054, %v4065
        %v4069 = vsub.f32 %v3710, %v4067
        %v4070 = vsub.f32 %v3715, %v4068
        %v4071 = vld [vmem:[%s8] sm:$0xff]
        %v4072 = vld [vmem:[%s8 + $0x8] sm:$0xff]
        %v4073 = vld [vmem:[%s8 + $0x10] sm:$0xff]
        %v4074 = vld [vmem:[%s8 + $0x18] sm:$0xff]
        %v4075 = vld [vmem:[%s8 + $0x20] sm:$0xff]
        %v4076 = vld [vmem:[%s8 + $0x28] sm:$0xff]
        %v4077 = vld [vmem:[%s8 + $0x30] sm:$0xff]
        %v4078 = vld [vmem:[%s8 + $0x38] sm:$0xff]
        %s4079 = scalar_lea.vmem %s8, 64
        %v4080 = vld [vmem:[%s4079] sm:$0xff]
        %v4081 = vld [vmem:[%s4079 + $0x8] sm:$0xff]
        %v4082 = vld [vmem:[%s4079 + $0x10] sm:$0xff]
        %v4083 = vld [vmem:[%s4079 + $0x18] sm:$0xff]
        %v4084 = vld [vmem:[%s4079 + $0x20] sm:$0xff]
        %v4085 = vld [vmem:[%s4079 + $0x28] sm:$0xff]
        %v4086 = vld [vmem:[%s4079 + $0x30] sm:$0xff]
        %v4087 = vld [vmem:[%s4079 + $0x38] sm:$0xff]
        %v4088 = vsel %vm1817, %v3796, 0
        %4090 = vmatprep.subr.mxu0 0.0
        %4091 = vmatpush1.msra.mxu0 %v4080
        %4092 = vmatprep.subr.mxu0 0.0
        %4093 = vmatpush1.msra.mxu0 %v4081
        %4094 = vmatprep.subr.mxu0 0.0
        %4095 = vmatpush1.msra.mxu0 %v4082
        %4096 = vmatprep.subr.mxu0 0.0
        %4097 = vmatpush1.msra.mxu0 %v4083
        %4098 = vmatprep.subr.mxu0 0.0
        %4099 = vmatpush1.msra.mxu0 %v4084
        %4100 = vmatprep.subr.mxu0 0.0
        %4101 = vmatpush1.msra.mxu0 %v4085
        %4102 = vmatprep.subr.mxu0 0.0
        %4103 = vmatpush1.msra.mxu0 %v4086
        %4104 = vmatprep.subr.mxu0 0.0
        %4105 = vmatpush1.msra.mxu0 %v4087
        %4106 = vmatprep.subr.mxu0 0.0
        %4107 = vmatpush1.msra.mxu0 0.0
        %4108 = vmatprep.subr.mxu0 0.0
        %4109 = vmatpush1.msra.mxu0 0.0
        %4110 = vmatprep.subr.mxu0 0.0
        %4111 = vmatpush1.msra.mxu0 0.0
        %4112 = vmatprep.subr.mxu0 0.0
        %4113 = vmatpush1.msra.mxu0 0.0
        %4114 = vmatprep.subr.mxu0 0.0
        %4115 = vmatpush1.msra.mxu0 0.0
        %4116 = vmatprep.subr.mxu0 0.0
        %4117 = vmatpush1.msra.mxu0 0.0
        %4118 = vmatprep.subr.mxu0 0.0
        %4119 = vmatpush1.msra.mxu0 0.0
        %4120 = vmatprep.subr.mxu0 0.0
        %4121 = vmatpush1.msra.mxu0 0.0
        %4122 = vmatprep.subr.mxu0 0.0
        %4123 = vmatpush1.msra.mxu0 0.0
        %4124 = vmatprep.subr.mxu0 0.0
        %4125 = vmatpush1.msra.mxu0 0.0
        %4126 = vmatprep.subr.mxu0 0.0
        %4127 = vmatpush1.msra.mxu0 0.0
        %4128 = vmatprep.subr.mxu0 0.0
        %4129 = vmatpush1.msra.mxu0 0.0
        %4130 = vmatprep.subr.mxu0 0.0
        %4131 = vmatpush1.msra.mxu0 0.0
        %4132 = vmatprep.subr.mxu0 0.0
        %4133 = vmatpush1.msra.mxu0 0.0
        %4134 = vmatprep.subr.mxu0 0.0
        %4135 = vmatpush1.msra.mxu0 0.0
        %4136 = vmatprep.subr.mxu0 0.0
        %4137 = vmatpush1.msra.mxu0 0.0
        %4138 = vmatprep.subr.mxu0 0.0
        %4139 = vmatpush1.msra.mxu0 0.0
        %4140 = vmatprep.subr.mxu0 0.0
        %4141 = vmatpush1.msra.mxu0 0.0
        %4142 = vmatprep.subr.mxu0 0.0
        %4143 = vmatpush1.msra.mxu0 0.0
        %4144 = vmatprep.subr.mxu0 0.0
        %4145 = vmatpush1.msra.mxu0 0.0
        %4146 = vmatprep.subr.mxu0 0.0
        %4147 = vmatpush1.msra.mxu0 0.0
        %4148 = vmatprep.subr.mxu0 0.0
        %4149 = vmatpush1.msra.mxu0 0.0
        %4150 = vmatprep.subr.mxu0 0.0
        %4151 = vmatpush1.msra.mxu0 0.0
        %4152 = vmatprep.subr.mxu0 0.0
        %4153 = vmatpush1.msra.mxu0 0.0
        %4154 = vmatprep.mubr.f32.mxu0 0.0
        %4155 = vmatmul.mubr.f32.gmra.mrb[0].mxu0 %v4088
        %v4156 = vpop.f32.mrb[0].mxu0
        %v4157 = vadd.f32 0.0, %v4156
        %v4158 = vpop.f32.mrb[0].mxu0
        %4159 = vdwg.mxu0
        %v4161 = vsel %vm1817, %v4070, 0
        %4163 = vmatprep.subr.mxu0 0.0
        %4164 = vmatpush1.msra.mxu0 %v4080
        %4165 = vmatprep.subr.mxu0 0.0
        %4166 = vmatpush1.msra.mxu0 %v4081
        %4167 = vmatprep.subr.mxu0 0.0
        %4168 = vmatpush1.msra.mxu0 %v4082
        %4169 = vmatprep.subr.mxu0 0.0
        %4170 = vmatpush1.msra.mxu0 %v4083
        %4171 = vmatprep.subr.mxu0 0.0
        %4172 = vmatpush1.msra.mxu0 %v4084
        %4173 = vmatprep.subr.mxu0 0.0
        %4174 = vmatpush1.msra.mxu0 %v4085
        %4175 = vmatprep.subr.mxu0 0.0
        %4176 = vmatpush1.msra.mxu0 %v4086
        %4177 = vmatprep.subr.mxu0 0.0
        %4178 = vmatpush1.msra.mxu0 %v4087
        %4179 = vmatprep.subr.mxu0 0.0
        %4180 = vmatpush1.msra.mxu0 0.0
        %4181 = vmatprep.subr.mxu0 0.0
        %4182 = vmatpush1.msra.mxu0 0.0
        %4183 = vmatprep.subr.mxu0 0.0
        %4184 = vmatpush1.msra.mxu0 0.0
        %4185 = vmatprep.subr.mxu0 0.0
        %4186 = vmatpush1.msra.mxu0 0.0
        %4187 = vmatprep.subr.mxu0 0.0
        %4188 = vmatpush1.msra.mxu0 0.0
        %4189 = vmatprep.subr.mxu0 0.0
        %4190 = vmatpush1.msra.mxu0 0.0
        %4191 = vmatprep.subr.mxu0 0.0
        %4192 = vmatpush1.msra.mxu0 0.0
        %4193 = vmatprep.subr.mxu0 0.0
        %4194 = vmatpush1.msra.mxu0 0.0
        %4195 = vmatprep.subr.mxu0 0.0
        %4196 = vmatpush1.msra.mxu0 0.0
        %4197 = vmatprep.subr.mxu0 0.0
        %4198 = vmatpush1.msra.mxu0 0.0
        %4199 = vmatprep.subr.mxu0 0.0
        %4200 = vmatpush1.msra.mxu0 0.0
        %4201 = vmatprep.subr.mxu0 0.0
        %4202 = vmatpush1.msra.mxu0 0.0
        %4203 = vmatprep.subr.mxu0 0.0
        %4204 = vmatpush1.msra.mxu0 0.0
        %4205 = vmatprep.subr.mxu0 0.0
        %4206 = vmatpush1.msra.mxu0 0.0
        %4207 = vmatprep.subr.mxu0 0.0
        %4208 = vmatpush1.msra.mxu0 0.0
        %4209 = vmatprep.subr.mxu0 0.0
        %4210 = vmatpush1.msra.mxu0 0.0
        %4211 = vmatprep.subr.mxu0 0.0
        %4212 = vmatpush1.msra.mxu0 0.0
        %4213 = vmatprep.subr.mxu0 0.0
        %4214 = vmatpush1.msra.mxu0 0.0
        %4215 = vmatprep.subr.mxu0 0.0
        %4216 = vmatpush1.msra.mxu0 0.0
        %4217 = vmatprep.subr.mxu0 0.0
        %4218 = vmatpush1.msra.mxu0 0.0
        %4219 = vmatprep.subr.mxu0 0.0
        %4220 = vmatpush1.msra.mxu0 0.0
        %4221 = vmatprep.subr.mxu0 0.0
        %4222 = vmatpush1.msra.mxu0 0.0
        %4223 = vmatprep.subr.mxu0 0.0
        %4224 = vmatpush1.msra.mxu0 0.0
        %4225 = vmatprep.subr.mxu0 0.0
        %4226 = vmatpush1.msra.mxu0 0.0
        %4227 = vmatprep.mubr.f32.mxu0 0.0
        %4228 = vmatmul.mubr.f32.gmra.mrb[0].mxu0 %v4161
        %v4229 = vpop.f32.mrb[0].mxu0
        %v4230 = vadd.f32 0.0, %v4229
        %v4231 = vpop.f32.mrb[0].mxu0
        %4232 = vdwg.mxu0
        %v4234 = vsel %vm1817, %v3791, 0
        %4236 = vmatprep.subr.mxu0 0.0
        %4237 = vmatpush1.msra.mxu0 %v4071
        %4238 = vmatprep.subr.mxu0 0.0
        %4239 = vmatpush1.msra.mxu0 %v4072
        %4240 = vmatprep.subr.mxu0 0.0
        %4241 = vmatpush1.msra.mxu0 %v4073
        %4242 = vmatprep.subr.mxu0 0.0
        %4243 = vmatpush1.msra.mxu0 %v4074
        %4244 = vmatprep.subr.mxu0 0.0
        %4245 = vmatpush1.msra.mxu0 %v4075
        %4246 = vmatprep.subr.mxu0 0.0
        %4247 = vmatpush1.msra.mxu0 %v4076
        %4248 = vmatprep.subr.mxu0 0.0
        %4249 = vmatpush1.msra.mxu0 %v4077
        %4250 = vmatprep.subr.mxu0 0.0
        %4251 = vmatpush1.msra.mxu0 %v4078
        %4252 = vmatprep.subr.mxu0 0.0
        %4253 = vmatpush1.msra.mxu0 0.0
        %4254 = vmatprep.subr.mxu0 0.0
        %4255 = vmatpush1.msra.mxu0 0.0
        %4256 = vmatprep.subr.mxu0 0.0
        %4257 = vmatpush1.msra.mxu0 0.0
        %4258 = vmatprep.subr.mxu0 0.0
        %4259 = vmatpush1.msra.mxu0 0.0
        %4260 = vmatprep.subr.mxu0 0.0
        %4261 = vmatpush1.msra.mxu0 0.0
        %4262 = vmatprep.subr.mxu0 0.0
        %4263 = vmatpush1.msra.mxu0 0.0
        %4264 = vmatprep.subr.mxu0 0.0
        %4265 = vmatpush1.msra.mxu0 0.0
        %4266 = vmatprep.subr.mxu0 0.0
        %4267 = vmatpush1.msra.mxu0 0.0
        %4268 = vmatprep.subr.mxu0 0.0
        %4269 = vmatpush1.msra.mxu0 0.0
        %4270 = vmatprep.subr.mxu0 0.0
        %4271 = vmatpush1.msra.mxu0 0.0
        %4272 = vmatprep.subr.mxu0 0.0
        %4273 = vmatpush1.msra.mxu0 0.0
        %4274 = vmatprep.subr.mxu0 0.0
        %4275 = vmatpush1.msra.mxu0 0.0
        %4276 = vmatprep.subr.mxu0 0.0
        %4277 = vmatpush1.msra.mxu0 0.0
        %4278 = vmatprep.subr.mxu0 0.0
        %4279 = vmatpush1.msra.mxu0 0.0
        %4280 = vmatprep.subr.mxu0 0.0
        %4281 = vmatpush1.msra.mxu0 0.0
        %4282 = vmatprep.subr.mxu0 0.0
        %4283 = vmatpush1.msra.mxu0 0.0
        %4284 = vmatprep.subr.mxu0 0.0
        %4285 = vmatpush1.msra.mxu0 0.0
        %4286 = vmatprep.subr.mxu0 0.0
        %4287 = vmatpush1.msra.mxu0 0.0
        %4288 = vmatprep.subr.mxu0 0.0
        %4289 = vmatpush1.msra.mxu0 0.0
        %4290 = vmatprep.subr.mxu0 0.0
        %4291 = vmatpush1.msra.mxu0 0.0
        %4292 = vmatprep.subr.mxu0 0.0
        %4293 = vmatpush1.msra.mxu0 0.0
        %4294 = vmatprep.subr.mxu0 0.0
        %4295 = vmatpush1.msra.mxu0 0.0
        %4296 = vmatprep.subr.mxu0 0.0
        %4297 = vmatpush1.msra.mxu0 0.0
        %4298 = vmatprep.subr.mxu0 0.0
        %4299 = vmatpush1.msra.mxu0 0.0
        %4300 = vmatprep.mubr.f32.mxu0 0.0
        %4301 = vmatmul.mubr.f32.gmra.mrb[0].mxu0 %v4234
        %v4302 = vpop.f32.mrb[0].mxu0
        %v4303 = vadd.f32 %v4157, %v4302
        %v4304 = vpop.f32.mrb[0].mxu0
        %4305 = vdwg.mxu0
        %v4307 = vsel %vm1817, %v4069, 0
        %4309 = vmatprep.subr.mxu0 0.0
        %4310 = vmatpush1.msra.mxu0 %v4071
        %4311 = vmatprep.subr.mxu0 0.0
        %4312 = vmatpush1.msra.mxu0 %v4072
        %4313 = vmatprep.subr.mxu0 0.0
        %4314 = vmatpush1.msra.mxu0 %v4073
        %4315 = vmatprep.subr.mxu0 0.0
        %4316 = vmatpush1.msra.mxu0 %v4074
        %4317 = vmatprep.subr.mxu0 0.0
        %4318 = vmatpush1.msra.mxu0 %v4075
        %4319 = vmatprep.subr.mxu0 0.0
        %4320 = vmatpush1.msra.mxu0 %v4076
        %4321 = vmatprep.subr.mxu0 0.0
        %4322 = vmatpush1.msra.mxu0 %v4077
        %4323 = vmatprep.subr.mxu0 0.0
        %4324 = vmatpush1.msra.mxu0 %v4078
        %4325 = vmatprep.subr.mxu0 0.0
        %4326 = vmatpush1.msra.mxu0 0.0
        %4327 = vmatprep.subr.mxu0 0.0
        %4328 = vmatpush1.msra.mxu0 0.0
        %4329 = vmatprep.subr.mxu0 0.0
        %4330 = vmatpush1.msra.mxu0 0.0
        %4331 = vmatprep.subr.mxu0 0.0
        %4332 = vmatpush1.msra.mxu0 0.0
        %4333 = vmatprep.subr.mxu0 0.0
        %4334 = vmatpush1.msra.mxu0 0.0
        %4335 = vmatprep.subr.mxu0 0.0
        %4336 = vmatpush1.msra.mxu0 0.0
        %4337 = vmatprep.subr.mxu0 0.0
        %4338 = vmatpush1.msra.mxu0 0.0
        %4339 = vmatprep.subr.mxu0 0.0
        %4340 = vmatpush1.msra.mxu0 0.0
        %4341 = vmatprep.subr.mxu0 0.0
        %4342 = vmatpush1.msra.mxu0 0.0
        %4343 = vmatprep.subr.mxu0 0.0
        %4344 = vmatpush1.msra.mxu0 0.0
        %4345 = vmatprep.subr.mxu0 0.0
        %4346 = vmatpush1.msra.mxu0 0.0
        %4347 = vmatprep.subr.mxu0 0.0
        %4348 = vmatpush1.msra.mxu0 0.0
        %4349 = vmatprep.subr.mxu0 0.0
        %4350 = vmatpush1.msra.mxu0 0.0
        %4351 = vmatprep.subr.mxu0 0.0
        %4352 = vmatpush1.msra.mxu0 0.0
        %4353 = vmatprep.subr.mxu0 0.0
        %4354 = vmatpush1.msra.mxu0 0.0
        %4355 = vmatprep.subr.mxu0 0.0
        %4356 = vmatpush1.msra.mxu0 0.0
        %4357 = vmatprep.subr.mxu0 0.0
        %4358 = vmatpush1.msra.mxu0 0.0
        %4359 = vmatprep.subr.mxu0 0.0
        %4360 = vmatpush1.msra.mxu0 0.0
        %4361 = vmatprep.subr.mxu0 0.0
        %4362 = vmatpush1.msra.mxu0 0.0
        %4363 = vmatprep.subr.mxu0 0.0
        %4364 = vmatpush1.msra.mxu0 0.0
        %4365 = vmatprep.subr.mxu0 0.0
        %4366 = vmatpush1.msra.mxu0 0.0
        %4367 = vmatprep.subr.mxu0 0.0
        %4368 = vmatpush1.msra.mxu0 0.0
        %4369 = vmatprep.subr.mxu0 0.0
        %4370 = vmatpush1.msra.mxu0 0.0
        %4371 = vmatprep.subr.mxu0 0.0
        %4372 = vmatpush1.msra.mxu0 0.0
        %4373 = vmatprep.mubr.f32.mxu0 0.0
        %4374 = vmatmul.mubr.f32.gmra.mrb[0].mxu0 %v4307
        %v4375 = vpop.f32.mrb[0].mxu0
        %v4376 = vadd.f32 %v4230, %v4375
        %v4377 = vpop.f32.mrb[0].mxu0
        %4378 = vdwg.mxu0
        %v4380 = vrot.slane %v4376, 4
        %4381 = vrot.lane.b32.xlu0 %v4380, 1
        %v4382 = vpop.permute.xlu0 %4381
        %v4384 = vsel %vm969, 0.0, %v4382
        %v4385 = vld [vmem:[%s1] sm:$0xff]
        %v4386 = vld [vmem:[%s972] sm:$0xff]
        %v4388 = vsel %vm974, %v4386, 0
        %v4390 = vsel %vm978, %v4376, 0
        %4392 = vmatprep.subr.mxu0 0.0
        %4393 = vmatpush1.msra.mxu0 %v4390
        %4394 = vmatprep.subr.mxu0 0.0
        %4395 = vmatpush1.msra.mxu0 0.0
        %4396 = vmatprep.subr.mxu0 0.0
        %4397 = vmatpush1.msra.mxu0 0.0
        %4398 = vmatprep.subr.mxu0 0.0
        %4399 = vmatpush1.msra.mxu0 0.0
        %4400 = vmatprep.subr.mxu0 0.0
        %4401 = vmatpush1.msra.mxu0 0.0
        %4402 = vmatprep.subr.mxu0 0.0
        %4403 = vmatpush1.msra.mxu0 0.0
        %4404 = vmatprep.subr.mxu0 0.0
        %4405 = vmatpush1.msra.mxu0 0.0
        %4406 = vmatprep.subr.mxu0 0.0
        %4407 = vmatpush1.msra.mxu0 0.0
        %4408 = vmatprep.subr.mxu0 0.0
        %4409 = vmatpush1.msra.mxu0 0.0
        %4410 = vmatprep.subr.mxu0 0.0
        %4411 = vmatpush1.msra.mxu0 0.0
        %4412 = vmatprep.subr.mxu0 0.0
        %4413 = vmatpush1.msra.mxu0 0.0
        %4414 = vmatprep.subr.mxu0 0.0
        %4415 = vmatpush1.msra.mxu0 0.0
        %4416 = vmatprep.subr.mxu0 0.0
        %4417 = vmatpush1.msra.mxu0 0.0
        %4418 = vmatprep.subr.mxu0 0.0
        %4419 = vmatpush1.msra.mxu0 0.0
        %4420 = vmatprep.subr.mxu0 0.0
        %4421 = vmatpush1.msra.mxu0 0.0
        %4422 = vmatprep.subr.mxu0 0.0
        %4423 = vmatpush1.msra.mxu0 0.0
        %4424 = vmatprep.subr.mxu0 0.0
        %4425 = vmatpush1.msra.mxu0 0.0
        %4426 = vmatprep.subr.mxu0 0.0
        %4427 = vmatpush1.msra.mxu0 0.0
        %4428 = vmatprep.subr.mxu0 0.0
        %4429 = vmatpush1.msra.mxu0 0.0
        %4430 = vmatprep.subr.mxu0 0.0
        %4431 = vmatpush1.msra.mxu0 0.0
        %4432 = vmatprep.subr.mxu0 0.0
        %4433 = vmatpush1.msra.mxu0 0.0
        %4434 = vmatprep.subr.mxu0 0.0
        %4435 = vmatpush1.msra.mxu0 0.0
        %4436 = vmatprep.subr.mxu0 0.0
        %4437 = vmatpush1.msra.mxu0 0.0
        %4438 = vmatprep.subr.mxu0 0.0
        %4439 = vmatpush1.msra.mxu0 0.0
        %4440 = vmatprep.subr.mxu0 0.0
        %4441 = vmatpush1.msra.mxu0 0.0
        %4442 = vmatprep.subr.mxu0 0.0
        %4443 = vmatpush1.msra.mxu0 0.0
        %4444 = vmatprep.subr.mxu0 0.0
        %4445 = vmatpush1.msra.mxu0 0.0
        %4446 = vmatprep.subr.mxu0 0.0
        %4447 = vmatpush1.msra.mxu0 0.0
        %4448 = vmatprep.subr.mxu0 0.0
        %4449 = vmatpush1.msra.mxu0 0.0
        %4450 = vmatprep.subr.mxu0 0.0
        %4451 = vmatpush1.msra.mxu0 0.0
        %4452 = vmatprep.subr.mxu0 0.0
        %4453 = vmatpush1.msra.mxu0 0.0
        %4454 = vmatprep.subr.mxu0 0.0
        %4455 = vmatpush1.msra.mxu0 0.0
        %4456 = vmatprep.mubr.f32.mxu0 0.0
        %4457 = vmatmul.mubr.f32.gmra.mrb[0].mxu0 %v4388
        %v4458 = vpop.f32.mrb[0].mxu0
        %v4459 = vadd.f32 0.0, %v4458
        %v4460 = vpop.f32.mrb[0].mxu0
        %4461 = vdwg.mxu0
        %v4463 = vsel %vm974, %v4385, 0
        %v4466 = vsel %vm978, %v4384, 0
        %4468 = vmatprep.subr.mxu0 0.0
        %4469 = vmatpush1.msra.mxu0 %v4466
        %4470 = vmatprep.subr.mxu0 0.0
        %4471 = vmatpush1.msra.mxu0 0.0
        %4472 = vmatprep.subr.mxu0 0.0
        %4473 = vmatpush1.msra.mxu0 0.0
        %4474 = vmatprep.subr.mxu0 0.0
        %4475 = vmatpush1.msra.mxu0 0.0
        %4476 = vmatprep.subr.mxu0 0.0
        %4477 = vmatpush1.msra.mxu0 0.0
        %4478 = vmatprep.subr.mxu0 0.0
        %4479 = vmatpush1.msra.mxu0 0.0
        %4480 = vmatprep.subr.mxu0 0.0
        %4481 = vmatpush1.msra.mxu0 0.0
        %4482 = vmatprep.subr.mxu0 0.0
        %4483 = vmatpush1.msra.mxu0 0.0
        %4484 = vmatprep.subr.mxu0 0.0
        %4485 = vmatpush1.msra.mxu0 0.0
        %4486 = vmatprep.subr.mxu0 0.0
        %4487 = vmatpush1.msra.mxu0 0.0
        %4488 = vmatprep.subr.mxu0 0.0
        %4489 = vmatpush1.msra.mxu0 0.0
        %4490 = vmatprep.subr.mxu0 0.0
        %4491 = vmatpush1.msra.mxu0 0.0
        %4492 = vmatprep.subr.mxu0 0.0
        %4493 = vmatpush1.msra.mxu0 0.0
        %4494 = vmatprep.subr.mxu0 0.0
        %4495 = vmatpush1.msra.mxu0 0.0
        %4496 = vmatprep.subr.mxu0 0.0
        %4497 = vmatpush1.msra.mxu0 0.0
        %4498 = vmatprep.subr.mxu0 0.0
        %4499 = vmatpush1.msra.mxu0 0.0
        %4500 = vmatprep.subr.mxu0 0.0
        %4501 = vmatpush1.msra.mxu0 0.0
        %4502 = vmatprep.subr.mxu0 0.0
        %4503 = vmatpush1.msra.mxu0 0.0
        %4504 = vmatprep.subr.mxu0 0.0
        %4505 = vmatpush1.msra.mxu0 0.0
        %4506 = vmatprep.subr.mxu0 0.0
        %4507 = vmatpush1.msra.mxu0 0.0
        %4508 = vmatprep.subr.mxu0 0.0
        %4509 = vmatpush1.msra.mxu0 0.0
        %4510 = vmatprep.subr.mxu0 0.0
        %4511 = vmatpush1.msra.mxu0 0.0
        %4512 = vmatprep.subr.mxu0 0.0
        %4513 = vmatpush1.msra.mxu0 0.0
        %4514 = vmatprep.subr.mxu0 0.0
        %4515 = vmatpush1.msra.mxu0 0.0
        %4516 = vmatprep.subr.mxu0 0.0
        %4517 = vmatpush1.msra.mxu0 0.0
        %4518 = vmatprep.subr.mxu0 0.0
        %4519 = vmatpush1.msra.mxu0 0.0
        %4520 = vmatprep.subr.mxu0 0.0
        %4521 = vmatpush1.msra.mxu0 0.0
        %4522 = vmatprep.subr.mxu0 0.0
        %4523 = vmatpush1.msra.mxu0 0.0
        %4524 = vmatprep.subr.mxu0 0.0
        %4525 = vmatpush1.msra.mxu0 0.0
        %4526 = vmatprep.subr.mxu0 0.0
        %4527 = vmatpush1.msra.mxu0 0.0
        %4528 = vmatprep.subr.mxu0 0.0
        %4529 = vmatpush1.msra.mxu0 0.0
        %4530 = vmatprep.subr.mxu0 0.0
        %4531 = vmatpush1.msra.mxu0 0.0
        %4532 = vmatprep.mubr.f32.mxu0 0.0
        %4533 = vmatmul.mubr.f32.gmra.mrb[0].mxu0 %v4463
        %v4534 = vpop.f32.mrb[0].mxu0
        %v4535 = vadd.f32 %v4459, %v4534
        %v4536 = vpop.f32.mrb[0].mxu0
        %4537 = vdwg.mxu0
        %v4538 = vld [vmem:[%s1128] sm:$0xff]
        %v4540 = vsel %vm974, %v4538, 0
        %v4542 = vsel %vm978, %v4380, 0
        %4544 = vmatprep.subr.mxu0 0.0
        %4545 = vmatpush1.msra.mxu0 %v4542
        %4546 = vmatprep.subr.mxu0 0.0
        %4547 = vmatpush1.msra.mxu0 0.0
        %4548 = vmatprep.subr.mxu0 0.0
        %4549 = vmatpush1.msra.mxu0 0.0
        %4550 = vmatprep.subr.mxu0 0.0
        %4551 = vmatpush1.msra.mxu0 0.0
        %4552 = vmatprep.subr.mxu0 0.0
        %4553 = vmatpush1.msra.mxu0 0.0
        %4554 = vmatprep.subr.mxu0 0.0
        %4555 = vmatpush1.msra.mxu0 0.0
        %4556 = vmatprep.subr.mxu0 0.0
        %4557 = vmatpush1.msra.mxu0 0.0
        %4558 = vmatprep.subr.mxu0 0.0
        %4559 = vmatpush1.msra.mxu0 0.0
        %4560 = vmatprep.subr.mxu0 0.0
        %4561 = vmatpush1.msra.mxu0 0.0
        %4562 = vmatprep.subr.mxu0 0.0
        %4563 = vmatpush1.msra.mxu0 0.0
        %4564 = vmatprep.subr.mxu0 0.0
        %4565 = vmatpush1.msra.mxu0 0.0
        %4566 = vmatprep.subr.mxu0 0.0
        %4567 = vmatpush1.msra.mxu0 0.0
        %4568 = vmatprep.subr.mxu0 0.0
        %4569 = vmatpush1.msra.mxu0 0.0
        %4570 = vmatprep.subr.mxu0 0.0
        %4571 = vmatpush1.msra.mxu0 0.0
        %4572 = vmatprep.subr.mxu0 0.0
        %4573 = vmatpush1.msra.mxu0 0.0
        %4574 = vmatprep.subr.mxu0 0.0
        %4575 = vmatpush1.msra.mxu0 0.0
        %4576 = vmatprep.subr.mxu0 0.0
        %4577 = vmatpush1.msra.mxu0 0.0
        %4578 = vmatprep.subr.mxu0 0.0
        %4579 = vmatpush1.msra.mxu0 0.0
        %4580 = vmatprep.subr.mxu0 0.0
        %4581 = vmatpush1.msra.mxu0 0.0
        %4582 = vmatprep.subr.mxu0 0.0
        %4583 = vmatpush1.msra.mxu0 0.0
        %4584 = vmatprep.subr.mxu0 0.0
        %4585 = vmatpush1.msra.mxu0 0.0
        %4586 = vmatprep.subr.mxu0 0.0
        %4587 = vmatpush1.msra.mxu0 0.0
        %4588 = vmatprep.subr.mxu0 0.0
        %4589 = vmatpush1.msra.mxu0 0.0
        %4590 = vmatprep.subr.mxu0 0.0
        %4591 = vmatpush1.msra.mxu0 0.0
        %4592 = vmatprep.subr.mxu0 0.0
        %4593 = vmatpush1.msra.mxu0 0.0
        %4594 = vmatprep.subr.mxu0 0.0
        %4595 = vmatpush1.msra.mxu0 0.0
        %4596 = vmatprep.subr.mxu0 0.0
        %4597 = vmatpush1.msra.mxu0 0.0
        %4598 = vmatprep.subr.mxu0 0.0
        %4599 = vmatpush1.msra.mxu0 0.0
        %4600 = vmatprep.subr.mxu0 0.0
        %4601 = vmatpush1.msra.mxu0 0.0
        %4602 = vmatprep.subr.mxu0 0.0
        %4603 = vmatpush1.msra.mxu0 0.0
        %4604 = vmatprep.subr.mxu0 0.0
        %4605 = vmatpush1.msra.mxu0 0.0
        %4606 = vmatprep.subr.mxu0 0.0
        %4607 = vmatpush1.msra.mxu0 0.0
        %4608 = vmatprep.mubr.f32.mxu0 0.0
        %4609 = vmatmul.mubr.f32.gmra.mrb[0].mxu0 %v4540
        %v4610 = vpop.f32.mrb[0].mxu0
        %v4611 = vadd.f32 0.0, %v4610
        %v4612 = vpop.f32.mrb[0].mxu0
        %4613 = vdwg.mxu0
        %v4614 = vadd.f32 %v4535, %v4611
        %v4615 = vld [vmem:[%s2] sm:$0xff]
        %4617 = vset.pattern.permute.xlu0 0
        %4618 = vperm.xlu0 %4617, %v4615
        %v4619 = vpop.permute.xlu0 %4618
        %v4621 = vadd.f32 %v4614, %v4619
        %v4622 = vsub.f32 %v4303, %v4621
        %v4623 = vld [vmem:[#allocation5] sm:$0xff]
        %v4624 = vld [vmem:[#allocation5 + $0x8] sm:$0xff]
        %v4625 = vld [vmem:[#allocation5 + $0x10] sm:$0xff]
        %v4626 = vld [vmem:[#allocation5 + $0x18] sm:$0xff]
        %v4627 = vld [vmem:[#allocation5 + $0x20] sm:$0xff]
        %v4628 = vld [vmem:[#allocation5 + $0x28] sm:$0xff]
        %v4629 = vld [vmem:[#allocation5 + $0x30] sm:$0xff]
        %v4630 = vld [vmem:[#allocation5 + $0x38] sm:$0xff]
        %v4631 = vld [vmem:[#allocation5 + $0x40] sm:$0xff]
        %v4632 = vld [vmem:[#allocation5 + $0x48] sm:$0xff]
        %v4633 = vld [vmem:[#allocation5 + $0x50] sm:$0xff]
        %v4634 = vld [vmem:[#allocation5 + $0x58] sm:$0xff]
        %v4635 = vld [vmem:[#allocation5 + $0x60] sm:$0xff]
        %v4636 = vld [vmem:[#allocation5 + $0x68] sm:$0xff]
        %v4637 = vld [vmem:[#allocation5 + $0x70] sm:$0xff]
        %v4638 = vld [vmem:[#allocation5 + $0x78] sm:$0xff]
        %v4639 = vld [vmem:[#allocation5 + $0x80] sm:$0xff]
        %v4640 = vld [vmem:[#allocation5 + $0x88] sm:$0xff]
        %v4641 = vld [vmem:[#allocation5 + $0x90] sm:$0xff]
        %v4642 = vld [vmem:[#allocation5 + $0x98] sm:$0xff]
        %v4643 = vld [vmem:[#allocation5 + $0xa0] sm:$0xff]
        %v4644 = vld [vmem:[#allocation5 + $0xa8] sm:$0xff]
        %v4645 = vld [vmem:[#allocation5 + $0xb0] sm:$0xff]
        %v4646 = vld [vmem:[#allocation5 + $0xb8] sm:$0xff]
        %v4647 = vld [vmem:[#allocation5 + $0xc0] sm:$0xff]
        %v4648 = vld [vmem:[#allocation5 + $0xc8] sm:$0xff]
        %v4649 = vld [vmem:[#allocation5 + $0xd0] sm:$0xff]
        %v4650 = vld [vmem:[#allocation5 + $0xd8] sm:$0xff]
        %v4651 = vld [vmem:[#allocation5 + $0xe0] sm:$0xff]
        %v4652 = vld [vmem:[#allocation5 + $0xe8] sm:$0xff]
        %v4653 = vld [vmem:[#allocation5 + $0xf0] sm:$0xff]
        %v4654 = vld [vmem:[#allocation5 + $0xf8] sm:$0xff]
        %s4655 = scalar_lea.vmem [#allocation5], 256
        %v4656 = vld [vmem:[%s4655] sm:$0xff]
        %v4657 = vld [vmem:[%s4655 + $0x8] sm:$0xff]
        %v4658 = vld [vmem:[%s4655 + $0x10] sm:$0xff]
        %v4659 = vld [vmem:[%s4655 + $0x18] sm:$0xff]
        %v4660 = vld [vmem:[%s4655 + $0x20] sm:$0xff]
        %v4661 = vld [vmem:[%s4655 + $0x28] sm:$0xff]
        %v4662 = vld [vmem:[%s4655 + $0x30] sm:$0xff]
        %v4663 = vld [vmem:[%s4655 + $0x38] sm:$0xff]
        %v4664 = vld [vmem:[%s4655 + $0x40] sm:$0xff]
        %v4665 = vld [vmem:[%s4655 + $0x48] sm:$0xff]
        %v4666 = vld [vmem:[%s4655 + $0x50] sm:$0xff]
        %v4667 = vld [vmem:[%s4655 + $0x58] sm:$0xff]
        %v4668 = vld [vmem:[%s4655 + $0x60] sm:$0xff]
        %v4669 = vld [vmem:[%s4655 + $0x68] sm:$0xff]
        %v4670 = vld [vmem:[%s4655 + $0x70] sm:$0xff]
        %v4671 = vld [vmem:[%s4655 + $0x78] sm:$0xff]
        %v4672 = vld [vmem:[%s4655 + $0x80] sm:$0xff]
        %v4673 = vld [vmem:[%s4655 + $0x88] sm:$0xff]
        %v4674 = vld [vmem:[%s4655 + $0x90] sm:$0xff]
        %v4675 = vld [vmem:[%s4655 + $0x98] sm:$0xff]
        %v4676 = vld [vmem:[%s4655 + $0xa0] sm:$0xff]
        %v4677 = vld [vmem:[%s4655 + $0xa8] sm:$0xff]
        %v4678 = vld [vmem:[%s4655 + $0xb0] sm:$0xff]
        %v4679 = vld [vmem:[%s4655 + $0xb8] sm:$0xff]
        %v4680 = vld [vmem:[%s4655 + $0xc0] sm:$0xff]
        %v4681 = vld [vmem:[%s4655 + $0xc8] sm:$0xff]
        %v4682 = vld [vmem:[%s4655 + $0xd0] sm:$0xff]
        %v4683 = vld [vmem:[%s4655 + $0xd8] sm:$0xff]
        %v4684 = vld [vmem:[%s4655 + $0xe0] sm:$0xff]
        %v4685 = vld [vmem:[%s4655 + $0xe8] sm:$0xff]
        %v4686 = vld [vmem:[%s4655 + $0xf0] sm:$0xff]
        %v4687 = vld [vmem:[%s4655 + $0xf8] sm:$0xff]
        %4689 = vmatprep.subr.mxu0 %v4657
        %4690 = vmatpush1.msra.mxu0 %v4656
        %4691 = vmatprep.subr.mxu0 %v4659
        %4692 = vmatpush1.msra.mxu0 %v4658
        %4693 = vmatprep.subr.mxu0 %v4661
        %4694 = vmatpush1.msra.mxu0 %v4660
        %4695 = vmatprep.subr.mxu0 %v4663
        %4696 = vmatpush1.msra.mxu0 %v4662
        %4697 = vmatprep.subr.mxu0 %v4665
        %4698 = vmatpush1.msra.mxu0 %v4664
        %4699 = vmatprep.subr.mxu0 %v4667
        %4700 = vmatpush1.msra.mxu0 %v4666
        %4701 = vmatprep.subr.mxu0 %v4669
        %4702 = vmatpush1.msra.mxu0 %v4668
        %4703 = vmatprep.subr.mxu0 %v4671
        %4704 = vmatpush1.msra.mxu0 %v4670
        %4705 = vmatprep.subr.mxu0 %v4673
        %4706 = vmatpush1.msra.mxu0 %v4672
        %4707 = vmatprep.subr.mxu0 %v4675
        %4708 = vmatpush1.msra.mxu0 %v4674
        %4709 = vmatprep.subr.mxu0 %v4677
        %4710 = vmatpush1.msra.mxu0 %v4676
        %4711 = vmatprep.subr.mxu0 %v4679
        %4712 = vmatpush1.msra.mxu0 %v4678
        %4713 = vmatprep.subr.mxu0 %v4681
        %4714 = vmatpush1.msra.mxu0 %v4680
        %4715 = vmatprep.subr.mxu0 %v4683
        %4716 = vmatpush1.msra.mxu0 %v4682
        %4717 = vmatprep.subr.mxu0 %v4685
        %4718 = vmatpush1.msra.mxu0 %v4684
        %4719 = vmatprep.subr.mxu0 %v4687
        %4720 = vmatpush1.msra.mxu0 %v4686
        %4721 = vmatprep.subr.mxu0 0.0
        %4722 = vmatpush1.msra.mxu0 0.0
        %4723 = vmatprep.subr.mxu0 0.0
        %4724 = vmatpush1.msra.mxu0 0.0
        %4725 = vmatprep.subr.mxu0 0.0
        %4726 = vmatpush1.msra.mxu0 0.0
        %4727 = vmatprep.subr.mxu0 0.0
        %4728 = vmatpush1.msra.mxu0 0.0
        %4729 = vmatprep.subr.mxu0 0.0
        %4730 = vmatpush1.msra.mxu0 0.0
        %4731 = vmatprep.subr.mxu0 0.0
        %4732 = vmatpush1.msra.mxu0 0.0
        %4733 = vmatprep.subr.mxu0 0.0
        %4734 = vmatpush1.msra.mxu0 0.0
        %4735 = vmatprep.subr.mxu0 0.0
        %4736 = vmatpush1.msra.mxu0 0.0
        %4737 = vmatprep.subr.mxu0 0.0
        %4738 = vmatpush1.msra.mxu0 0.0
        %4739 = vmatprep.subr.mxu0 0.0
        %4740 = vmatpush1.msra.mxu0 0.0
        %4741 = vmatprep.subr.mxu0 0.0
        %4742 = vmatpush1.msra.mxu0 0.0
        %4743 = vmatprep.subr.mxu0 0.0
        %4744 = vmatpush1.msra.mxu0 0.0
        %4745 = vmatprep.subr.mxu0 0.0
        %4746 = vmatpush1.msra.mxu0 0.0
        %4747 = vmatprep.subr.mxu0 0.0
        %4748 = vmatpush1.msra.mxu0 0.0
        %4749 = vmatprep.subr.mxu0 0.0
        %4750 = vmatpush1.msra.mxu0 0.0
        %4751 = vmatprep.subr.mxu0 0.0
        %4752 = vmatpush1.msra.mxu0 0.0
        %4753 = vmatprep.mubr.f32.mxu0 0.0
        %4754 = vmatmul.mubr.f32.gmra.mrb[0].mxu0 %v4380
        %v4755 = vpop.f32.mrb[0].mxu0
        %v4756 = vadd.f32 0.0, %v4755
        %v4757 = vpop.f32.mrb[0].mxu0
        %v4758 = vadd.f32 0.0, %v4757
        %4759 = vdwg.mxu0
        %v4761 = vrot.slane %v4622, 4
        %4763 = vmatprep.subr.mxu0 %v4657
        %4764 = vmatpush1.msra.mxu0 %v4656
        %4765 = vmatprep.subr.mxu0 %v4659
        %4766 = vmatpush1.msra.mxu0 %v4658
        %4767 = vmatprep.subr.mxu0 %v4661
        %4768 = vmatpush1.msra.mxu0 %v4660
        %4769 = vmatprep.subr.mxu0 %v4663
        %4770 = vmatpush1.msra.mxu0 %v4662
        %4771 = vmatprep.subr.mxu0 %v4665
        %4772 = vmatpush1.msra.mxu0 %v4664
        %4773 = vmatprep.subr.mxu0 %v4667
        %4774 = vmatpush1.msra.mxu0 %v4666
        %4775 = vmatprep.subr.mxu0 %v4669
        %4776 = vmatpush1.msra.mxu0 %v4668
        %4777 = vmatprep.subr.mxu0 %v4671
        %4778 = vmatpush1.msra.mxu0 %v4670
        %4779 = vmatprep.subr.mxu0 %v4673
        %4780 = vmatpush1.msra.mxu0 %v4672
        %4781 = vmatprep.subr.mxu0 %v4675
        %4782 = vmatpush1.msra.mxu0 %v4674
        %4783 = vmatprep.subr.mxu0 %v4677
        %4784 = vmatpush1.msra.mxu0 %v4676
        %4785 = vmatprep.subr.mxu0 %v4679
        %4786 = vmatpush1.msra.mxu0 %v4678
        %4787 = vmatprep.subr.mxu0 %v4681
        %4788 = vmatpush1.msra.mxu0 %v4680
        %4789 = vmatprep.subr.mxu0 %v4683
        %4790 = vmatpush1.msra.mxu0 %v4682
        %4791 = vmatprep.subr.mxu0 %v4685
        %4792 = vmatpush1.msra.mxu0 %v4684
        %4793 = vmatprep.subr.mxu0 %v4687
        %4794 = vmatpush1.msra.mxu0 %v4686
        %4795 = vmatprep.subr.mxu0 0.0
        %4796 = vmatpush1.msra.mxu0 0.0
        %4797 = vmatprep.subr.mxu0 0.0
        %4798 = vmatpush1.msra.mxu0 0.0
        %4799 = vmatprep.subr.mxu0 0.0
        %4800 = vmatpush1.msra.mxu0 0.0
        %4801 = vmatprep.subr.mxu0 0.0
        %4802 = vmatpush1.msra.mxu0 0.0
        %4803 = vmatprep.subr.mxu0 0.0
        %4804 = vmatpush1.msra.mxu0 0.0
        %4805 = vmatprep.subr.mxu0 0.0
        %4806 = vmatpush1.msra.mxu0 0.0
        %4807 = vmatprep.subr.mxu0 0.0
        %4808 = vmatpush1.msra.mxu0 0.0
        %4809 = vmatprep.subr.mxu0 0.0
        %4810 = vmatpush1.msra.mxu0 0.0
        %4811 = vmatprep.subr.mxu0 0.0
        %4812 = vmatpush1.msra.mxu0 0.0
        %4813 = vmatprep.subr.mxu0 0.0
        %4814 = vmatpush1.msra.mxu0 0.0
        %4815 = vmatprep.subr.mxu0 0.0
        %4816 = vmatpush1.msra.mxu0 0.0
        %4817 = vmatprep.subr.mxu0 0.0
        %4818 = vmatpush1.msra.mxu0 0.0
        %4819 = vmatprep.subr.mxu0 0.0
        %4820 = vmatpush1.msra.mxu0 0.0
        %4821 = vmatprep.subr.mxu0 0.0
        %4822 = vmatpush1.msra.mxu0 0.0
        %4823 = vmatprep.subr.mxu0 0.0
        %4824 = vmatpush1.msra.mxu0 0.0
        %4825 = vmatprep.subr.mxu0 0.0
        %4826 = vmatpush1.msra.mxu0 0.0
        %4827 = vmatprep.mubr.f32.mxu0 0.0
        %4828 = vmatmul.mubr.f32.gmra.mrb[0].mxu0 %v4761
        %v4829 = vpop.f32.mrb[0].mxu0
        %v4830 = vadd.f32 0.0, %v4829
        %v4831 = vpop.f32.mrb[0].mxu0
        %v4832 = vadd.f32 0.0, %v4831
        %4833 = vdwg.mxu0
        %4834 = vmatprep.subr.mxu0 %v4624
        %4835 = vmatpush1.msra.mxu0 %v4623
        %4836 = vmatprep.subr.mxu0 %v4626
        %4837 = vmatpush1.msra.mxu0 %v4625
        %4838 = vmatprep.subr.mxu0 %v4628
        %4839 = vmatpush1.msra.mxu0 %v4627
        %4840 = vmatprep.subr.mxu0 %v4630
        %4841 = vmatpush1.msra.mxu0 %v4629
        %4842 = vmatprep.subr.mxu0 %v4632
        %4843 = vmatpush1.msra.mxu0 %v4631
        %4844 = vmatprep.subr.mxu0 %v4634
        %4845 = vmatpush1.msra.mxu0 %v4633
        %4846 = vmatprep.subr.mxu0 %v4636
        %4847 = vmatpush1.msra.mxu0 %v4635
        %4848 = vmatprep.subr.mxu0 %v4638
        %4849 = vmatpush1.msra.mxu0 %v4637
        %4850 = vmatprep.subr.mxu0 %v4640
        %4851 = vmatpush1.msra.mxu0 %v4639
        %4852 = vmatprep.subr.mxu0 %v4642
        %4853 = vmatpush1.msra.mxu0 %v4641
        %4854 = vmatprep.subr.mxu0 %v4644
        %4855 = vmatpush1.msra.mxu0 %v4643
        %4856 = vmatprep.subr.mxu0 %v4646
        %4857 = vmatpush1.msra.mxu0 %v4645
        %4858 = vmatprep.subr.mxu0 %v4648
        %4859 = vmatpush1.msra.mxu0 %v4647
        %4860 = vmatprep.subr.mxu0 %v4650
        %4861 = vmatpush1.msra.mxu0 %v4649
        %4862 = vmatprep.subr.mxu0 %v4652
        %4863 = vmatpush1.msra.mxu0 %v4651
        %4864 = vmatprep.subr.mxu0 %v4654
        %4865 = vmatpush1.msra.mxu0 %v4653
        %4866 = vmatprep.subr.mxu0 0.0
        %4867 = vmatpush1.msra.mxu0 0.0
        %4868 = vmatprep.subr.mxu0 0.0
        %4869 = vmatpush1.msra.mxu0 0.0
        %4870 = vmatprep.subr.mxu0 0.0
        %4871 = vmatpush1.msra.mxu0 0.0
        %4872 = vmatprep.subr.mxu0 0.0
        %4873 = vmatpush1.msra.mxu0 0.0
        %4874 = vmatprep.subr.mxu0 0.0
        %4875 = vmatpush1.msra.mxu0 0.0
        %4876 = vmatprep.subr.mxu0 0.0
        %4877 = vmatpush1.msra.mxu0 0.0
        %4878 = vmatprep.subr.mxu0 0.0
        %4879 = vmatpush1.msra.mxu0 0.0
        %4880 = vmatprep.subr.mxu0 0.0
        %4881 = vmatpush1.msra.mxu0 0.0
        %4882 = vmatprep.subr.mxu0 0.0
        %4883 = vmatpush1.msra.mxu0 0.0
        %4884 = vmatprep.subr.mxu0 0.0
        %4885 = vmatpush1.msra.mxu0 0.0
        %4886 = vmatprep.subr.mxu0 0.0
        %4887 = vmatpush1.msra.mxu0 0.0
        %4888 = vmatprep.subr.mxu0 0.0
        %4889 = vmatpush1.msra.mxu0 0.0
        %4890 = vmatprep.subr.mxu0 0.0
        %4891 = vmatpush1.msra.mxu0 0.0
        %4892 = vmatprep.subr.mxu0 0.0
        %4893 = vmatpush1.msra.mxu0 0.0
        %4894 = vmatprep.subr.mxu0 0.0
        %4895 = vmatpush1.msra.mxu0 0.0
        %4896 = vmatprep.subr.mxu0 0.0
        %4897 = vmatpush1.msra.mxu0 0.0
        %4898 = vmatprep.mubr.f32.mxu0 0.0
        %4899 = vmatmul.mubr.f32.gmra.mrb[0].mxu0 %v4376
        %v4900 = vpop.f32.mrb[0].mxu0
        %v4901 = vadd.f32 %v4756, %v4900
        %v4902 = vpop.f32.mrb[0].mxu0
        %v4903 = vadd.f32 %v4758, %v4902
        %4904 = vdwg.mxu0
        %4905 = vmatprep.subr.mxu0 %v4624
        %4906 = vmatpush1.msra.mxu0 %v4623
        %4907 = vmatprep.subr.mxu0 %v4626
        %4908 = vmatpush1.msra.mxu0 %v4625
        %4909 = vmatprep.subr.mxu0 %v4628
        %4910 = vmatpush1.msra.mxu0 %v4627
        %4911 = vmatprep.subr.mxu0 %v4630
        %4912 = vmatpush1.msra.mxu0 %v4629
        %4913 = vmatprep.subr.mxu0 %v4632
        %4914 = vmatpush1.msra.mxu0 %v4631
        %4915 = vmatprep.subr.mxu0 %v4634
        %4916 = vmatpush1.msra.mxu0 %v4633
        %4917 = vmatprep.subr.mxu0 %v4636
        %4918 = vmatpush1.msra.mxu0 %v4635
        %4919 = vmatprep.subr.mxu0 %v4638
        %4920 = vmatpush1.msra.mxu0 %v4637
        %4921 = vmatprep.subr.mxu0 %v4640
        %4922 = vmatpush1.msra.mxu0 %v4639
        %4923 = vmatprep.subr.mxu0 %v4642
        %4924 = vmatpush1.msra.mxu0 %v4641
        %4925 = vmatprep.subr.mxu0 %v4644
        %4926 = vmatpush1.msra.mxu0 %v4643
        %4927 = vmatprep.subr.mxu0 %v4646
        %4928 = vmatpush1.msra.mxu0 %v4645
        %4929 = vmatprep.subr.mxu0 %v4648
        %4930 = vmatpush1.msra.mxu0 %v4647
        %4931 = vmatprep.subr.mxu0 %v4650
        %4932 = vmatpush1.msra.mxu0 %v4649
        %4933 = vmatprep.subr.mxu0 %v4652
        %4934 = vmatpush1.msra.mxu0 %v4651
        %4935 = vmatprep.subr.mxu0 %v4654
        %4936 = vmatpush1.msra.mxu0 %v4653
        %4937 = vmatprep.subr.mxu0 0.0
        %4938 = vmatpush1.msra.mxu0 0.0
        %4939 = vmatprep.subr.mxu0 0.0
        %4940 = vmatpush1.msra.mxu0 0.0
        %4941 = vmatprep.subr.mxu0 0.0
        %4942 = vmatpush1.msra.mxu0 0.0
        %4943 = vmatprep.subr.mxu0 0.0
        %4944 = vmatpush1.msra.mxu0 0.0
        %4945 = vmatprep.subr.mxu0 0.0
        %4946 = vmatpush1.msra.mxu0 0.0
        %4947 = vmatprep.subr.mxu0 0.0
        %4948 = vmatpush1.msra.mxu0 0.0
        %4949 = vmatprep.subr.mxu0 0.0
        %4950 = vmatpush1.msra.mxu0 0.0
        %4951 = vmatprep.subr.mxu0 0.0
        %4952 = vmatpush1.msra.mxu0 0.0
        %4953 = vmatprep.subr.mxu0 0.0
        %4954 = vmatpush1.msra.mxu0 0.0
        %4955 = vmatprep.subr.mxu0 0.0
        %4956 = vmatpush1.msra.mxu0 0.0
        %4957 = vmatprep.subr.mxu0 0.0
        %4958 = vmatpush1.msra.mxu0 0.0
        %4959 = vmatprep.subr.mxu0 0.0
        %4960 = vmatpush1.msra.mxu0 0.0
        %4961 = vmatprep.subr.mxu0 0.0
        %4962 = vmatpush1.msra.mxu0 0.0
        %4963 = vmatprep.subr.mxu0 0.0
        %4964 = vmatpush1.msra.mxu0 0.0
        %4965 = vmatprep.subr.mxu0 0.0
        %4966 = vmatpush1.msra.mxu0 0.0
        %4967 = vmatprep.subr.mxu0 0.0
        %4968 = vmatpush1.msra.mxu0 0.0
        %4969 = vmatprep.mubr.f32.mxu0 0.0
        %4970 = vmatmul.mubr.f32.gmra.mrb[0].mxu0 %v4622
        %v4971 = vpop.f32.mrb[0].mxu0
        %v4972 = vadd.f32 %v4830, %v4971
        %v4973 = vpop.f32.mrb[0].mxu0
        %v4974 = vadd.f32 %v4832, %v4973
        %4975 = vdwg.mxu0
        %v4978 = vrot.slane %v4901, 7
        %v4979 = vrot.slane %v4903, 7
        %vm4982 = vcmask 1040384
        %v4983 = vsel %vm4982, %v4972, %v4978
        %v4984 = vsel %vm4982, %v4974, %v4979
        %v4987 = vcombine.low %v4983, %v4984
        %v4989 = vunpack.c.l.s4 1983009808
        %v4990 = vunpack.c.0.s8 %v4989
        %v4991 = vlaneseq
        %v4992 = vshrl.u32 %v4991, 7
        %v4993 = vsub.s32 %v4990, %v4992
        %v4994 = vrot.slane %v4987, %v4993
        %4996 = vst [vmem:[%s597] sm:$0xf] %v4994
        %s4997 = sand.u32 %s367, 1
        %s4998 = scalar_lea.sflag [#allocation4], %s4997
        %s4999 = sand.u32 %s367, 1
        %s5000 = smul.addr %s4999, 4
        %s5001 = scalar_lea.vmem [#allocation8], %s5000
        %s5002 = sand.u32 %s39, 1
        %s5003 = scalar_lea.sflag [#allocation10], %s5002
        %s5004 = sand.u32 %s393, 1
        %s5005 = smul.addr %s5004, 64
        %s5006 = scalar_lea.vmem [#allocation9], %s5005
        %s5007 = sand.u32 %s39, 1
        %s5008 = scalar_lea.sflag [#allocation10], %s5007
        %s5009 = sand.u32 %s419, 1
        %s5010 = smul.addr %s5009, 64
        %s5011 = scalar_lea.vmem [#allocation11], %s5010
        // Predicated region
        $region93: #{tpu_custom_call.1} parent=79 // pred_check
          %p5012 = pneg %p377
        $region94: #{tpu_custom_call.1} parent=79 // pred_check_branch
          %5014 = sbr.rel (%p5012) target = $region96
        $region95: #{tpu_custom_call.1} parent=79 // pred_region
          %s5016 = ssub.s32 64, 64
          %5017 = vsyncadd %s4998, %s5016
          %s5018 = smul.addr %s39, 2
          %s5019 = smul.addr %s5018, 32
          %s5020 = scalar_lea.hbm %s15, %s5019
          %s5022 = sshll.u32 %s5001, 4
          %s5023 = int_to_ptr.vmem [resolvable:$true] %s5022
          %5025 = dma.vmem_to_hbm [thread:$0]  %s5023, 64, %s5020, %s4998
        $region96: #{tpu_custom_call.1} parent=79 // pred_fallthru
          _
        // Predicated region
        $region97: #{tpu_custom_call.1} parent=79 // pred_check
          %p5026 = pneg %p403
        $region98: #{tpu_custom_call.1} parent=79 // pred_check_branch
          %5028 = sbr.rel (%p5026) target = $region100
        $region99: #{tpu_custom_call.1} parent=79 // pred_region
          %s5030 = ssub.s32 1024, 1024
          %5031 = vsyncadd %s5003, %s5030
          %s5032 = smul.addr %s39, 8
          %s5033 = smul.addr %s5032, 128
          %s5034 = scalar_lea.hbm %s16, %s5033
          %s5035 = sshll.u32 %s5006, 4
          %s5036 = int_to_ptr.vmem [resolvable:$true] %s5035
          %5041 = dma.vmem_to_hbm [thread:$0]  %s5036, 1024, %s5034, %s5003, 128, 128, 8
        $region100: #{tpu_custom_call.1} parent=79 // pred_fallthru
          _
        // Predicated region
        $region101: #{tpu_custom_call.1} parent=79 // pred_check
          %p5042 = pneg %p429
        $region102: #{tpu_custom_call.1} parent=79 // pred_check_branch
          %5044 = sbr.rel (%p5042) target = $region104
        $region103: #{tpu_custom_call.1} parent=79 // pred_region
          %s5046 = ssub.s32 1024, 1024
          %5047 = vsyncadd %s5008, %s5046
          %s5048 = smul.addr %s39, 8
          %s5049 = smul.addr %s5048, 128
          %s5050 = scalar_lea.hbm %s17, %s5049
          %s5051 = sshll.u32 %s5011, 4
          %s5052 = int_to_ptr.vmem [resolvable:$true] %s5051
          %5057 = dma.vmem_to_hbm [thread:$0]  %s5052, 1024, %s5050, %s5008, 128, 128, 8
        $region104: #{tpu_custom_call.1} parent=79 // pred_fallthru
          _
      $region80: #{tpu_custom_call.1} parent=5 // pred_fallthru
        _
      %p5058 = scmp.le.s32.totalorder 2, %s34
      // Predicated region
      $region105: #{tpu_custom_call.1} parent=5 // pred_check
        %p5059 = pneg %p5058
      $region106: #{tpu_custom_call.1} parent=5 // pred_check_branch
        %5061 = sbr.rel (%p5059) target = $region108
      $region107: #{tpu_custom_call.1} parent=5 // pred_region
        %s5062 = ssub.s32 %s34, 2
        // Predicated region
        $region109: #{tpu_custom_call.1} parent=107 // pred_check
          %p5063 = pneg %p383
        $region110: #{tpu_custom_call.1} parent=107 // pred_check_branch
          %5065 = sbr.rel (%p5063) target = $region112
        $region111: #{tpu_custom_call.1} parent=107 // pred_region
          %s5066 = sand.u32 %s368, 1
          %s5067 = scalar_lea.sflag [#allocation4], %s5066
          %s5068 = sand.u32 %s368, 1
          %s5069 = smul.addr %s5068, 4
          %s5070 = scalar_lea.vmem [#allocation8], %s5069
          %5071 = dma.done %s5067, 64
        $region112: #{tpu_custom_call.1} parent=107 // pred_fallthru
          _
        // Predicated region
        $region113: #{tpu_custom_call.1} parent=107 // pred_check
          %p5072 = pneg %p409
        $region114: #{tpu_custom_call.1} parent=107 // pred_check_branch
          %5074 = sbr.rel (%p5072) target = $region116
        $region115: #{tpu_custom_call.1} parent=107 // pred_region
          %s5075 = sand.u32 %s40, 1
          %s5076 = scalar_lea.sflag [#allocation10], %s5075
          %s5077 = sand.u32 %s394, 1
          %s5078 = smul.addr %s5077, 64
          %s5079 = scalar_lea.vmem [#allocation9], %s5078
          %5080 = dma.done %s5076, 1024
        $region116: #{tpu_custom_call.1} parent=107 // pred_fallthru
          _
        // Predicated region
        $region117: #{tpu_custom_call.1} parent=107 // pred_check
          %p5081 = pneg %p435
        $region118: #{tpu_custom_call.1} parent=107 // pred_check_branch
          %5083 = sbr.rel (%p5081) target = $region120
        $region119: #{tpu_custom_call.1} parent=107 // pred_region
          %s5084 = sand.u32 %s40, 1
          %s5085 = scalar_lea.sflag [#allocation10], %s5084
          %s5086 = sand.u32 %s420, 1
          %s5087 = smul.addr %s5086, 64
          %s5088 = scalar_lea.vmem [#allocation11], %s5087
          %5089 = dma.done %s5085, 1024
        $region120: #{tpu_custom_call.1} parent=107 // pred_fallthru
          _
      $region108: #{tpu_custom_call.1} parent=5 // pred_fallthru
        _
    $region6: #{tpu_custom_call.1} parent=1 // loop_footer
      %s38 = sadd.s32 1, %s34
    $region7: #{tpu_custom_call.1} parent=1 // loop_footer_branch
      %33 = sbr.rel target = $region3
    $region8: #{tpu_custom_call.1} parent=1 // loop_exit
      _
    %5090 = vsyncpa [#allocation3], 1
    %s5091 = scalar_lea.sflag [#allocation3], 1
    %5092 = vsyncpa %s5091, 1
    %5093 = vsyncpa [#allocation6], 1
    %5094 = vsyncpa [#allocation4], 1
    %s5095 = scalar_lea.sflag [#allocation4], 1
    %5096 = vsyncpa %s5095, 1
    %5097 = vsyncpa [#allocation10], 1
    %s5098 = scalar_lea.sflag [#allocation10], 1
    %5099 = vsyncpa %s5098, 1

</llo_original>
